<compile_context>
chip_gen: v7x
topology: tpu7x:2x2x1
jax: 0.10.0
libtpu: 0.0.40
codegen_flags: <defaults>
</compile_context>

<pallas_src>
import functools

import jax
import jax.numpy as jnp
import numpy as np
from jax.experimental import pallas as pl
from jax.experimental.pallas import tpu as pltpu


def _make_fconv_kernel(N, p, Ci, Co, H, W, Kh, Kw, pad):
    """Build the Pallas kernel body for fixed (static) shapes."""
    Hs = H // p                      # stripe height
    Hp, Wp = Hs + 2 * pad, W + 2 * pad
    Ho, Wo = Hp - Kh + 1, Wp - Kw + 1
    B = p * N                        # stripe-packed batch (torch.cat(chunk, dim=0))
    KKC = Kh * Kw * Ci
    # leaky_relu applied twice (BasicConv2d.forward then FConv.forward); fused
    # into a single select.  (0.01*0.01)*y differs from 0.01*(0.01*y) by <=1 ulp.
    slope2 = np.float32(0.01) * np.float32(0.01)

    def kernel(x_ref, w_ref, o_ref, xpad_ref):
        # x_ref   : (N, Ci, H, W)      raw NCHW input (whole array)
        # w_ref   : (Co, Kh*Kw*Ci)     flattened weights, row order (kh, kw, ci)
        # o_ref   : (Co, B*Ho*Wo)      lane-dense output, col = b*Ho*Wo + h*Wo + w
        # xpad_ref: (B, Ci, Hp, Wp)    VMEM scratch holding zero-padded stripes

        # Build zero-padded stripes in VMEM (replaces wrapper-side pad+transpose).
        xpad_ref[...] = jnp.zeros_like(xpad_ref)
        for stripe in range(p):           # static (unrolled) loops, tiny trip counts
            for n in range(N):
                b = stripe * N + n        # torch.chunk(dim=2)+cat(dim=0) ordering
                xpad_ref[b, :, pad:pad + Hs, pad:pad + W] = (
                    x_ref[n, :, stripe * Hs:(stripe + 1) * Hs, :]
                    .astype(xpad_ref.dtype)
                )

        # im2col: rows ordered (kh, kw, ci); columns ordered (b, h, w).
        # Each per-b reshape only merges the two minor dims (Ho*Wo = one 128-lane
        # tile), so the lane concat over b lands on 128-aligned offsets.
        imgs = []
        for b in range(B):
            taps = [
                xpad_ref[b, :, kh:kh + Ho, kw:kw + Wo]       # (Ci, Ho, Wo)
                for kh in range(Kh)
                for kw in range(Kw)
            ]
            col = jnp.concatenate(taps, axis=0)              # (KKC, Ho, Wo)
            imgs.append(col.reshape(KKC, Ho * Wo))           # (KKC, Ho*Wo)
        patch = jnp.concatenate(imgs, axis=1)                # (KKC, B*Ho*Wo)

        # Single MXU matmul: (Co, KKC) x (KKC, B*Ho*Wo) -> (Co, B*Ho*Wo).
        y = jnp.dot(
            w_ref[...].astype(jnp.float32),
            patch.astype(jnp.float32),
            preferred_element_type=jnp.float32,
        )

        # Fused double leaky_relu.
        y = jnp.where(y >= 0, y, slope2 * y)

        # Lane-dense store (last dim = B*Ho*Wo, multiple of 128).
        o_ref[...] = y.astype(o_ref.dtype)

    return kernel, (B, Hp, Wp, Ho, Wo, KKC)


@functools.partial(jax.jit, static_argnums=(2, 3))
def fconv_forward(x, weight, padding, p):
    """x: (N, C, H, W) NCHW; weight: (Co, Ci, Kh, Kw) (PyTorch OIHW, no bias)."""
    N, C, H, W = x.shape
    Co, Ci, Kh, Kw = weight.shape
    assert C == Ci and H % p == 0

    kernel, (B, Hp, Wp, Ho, Wo, KKC) = _make_fconv_kernel(
        N, p, Ci, Co, H, W, Kh, Kw, padding
    )

    # Flatten weights once in the wrapper: (Co, Ci, Kh, Kw) -> (Co, Kh*Kw*Ci),
    # row order (kh, kw, ci) to match the in-kernel im2col row order.
    w_flat = jnp.transpose(weight, (0, 2, 3, 1)).reshape(Co, KKC)

    itemsize = np.dtype(x.dtype).itemsize
    cost = pl.CostEstimate(
        flops=2 * B * Ho * Wo * Kh * Kw * Ci * Co,
        transcendentals=0,
        bytes_accessed=(x.size + w_flat.size + Co * B * Ho * Wo) * itemsize,
    )

    out = pl.pallas_call(
        kernel,
        out_shape=jax.ShapeDtypeStruct((Co, B * Ho * Wo), x.dtype),
        grid=(1,),
        in_specs=[
            pl.BlockSpec((N, C, H, W), lambda i: (0, 0, 0, 0)),
            pl.BlockSpec((Co, KKC), lambda i: (0, 0)),
        ],
        out_specs=pl.BlockSpec((Co, B * Ho * Wo), lambda i: (0, 0)),
        scratch_shapes=[pltpu.VMEM((B, Ci, Hp, Wp), jnp.float32)],
        compiler_params=pltpu.CompilerParams(
            dimension_semantics=("arbitrary",),
        ),
        cost_estimate=cost,
    )(x, w_flat)

    # (Co, B*Ho*Wo) -> NCHW, undoing the stripe->batch packing
    # (torch.chunk(out, p, dim=0) + torch.cat(dim=2)).
    out = (
        out.reshape(Co, p, N, Ho, Wo)
        .transpose(2, 0, 1, 3, 4)
        .reshape(N, Co, p * Ho, Wo)
    )
    return out


def _reference(x, weight, padding, p):
    """Pure-JAX reference mirroring the PyTorch forward exactly."""
    N, C, H, W = x.shape
    Hs = H // p
    xb = x.reshape(N, C, p, Hs, W).transpose(2, 0, 1, 3, 4).reshape(p * N, C, Hs, W)
    y = jax.lax.conv_general_dilated(
        xb, weight, window_strides=(1, 1),
        padding=[(padding, padding), (padding, padding)],
        dimension_numbers=("NCHW", "OIHW", "NCHW"),
    )
    slope = 0.01
    y = jnp.where(y >= 0, y, slope * y)   # leaky_relu in BasicConv2d.forward
    y = jnp.where(y >= 0, y, slope * y)   # leaky_relu in FConv.forward
    _, Co, Ho, Wo = y.shape
    return (
        y.reshape(p, N, Co, Ho, Wo).transpose(1, 2, 0, 3, 4).reshape(N, Co, p * Ho, Wo)
    )


if __name__ == "__main__":
    # Module config: FConv(in_channels=4, out_channels=8, kernel_size=3, padding=1, p=2)
    in_channels, out_channels, kernel_size, padding, p = 4, 8, 3, 1, 2
    N, H, W = 2, 16, 16

    key = jax.random.PRNGKey(0)
    kx, kw = jax.random.split(key)
    x = jax.random.normal(kx, (N, in_channels, H, W), dtype=jnp.float32)
    # Deterministic weight init (Conv2d weight shape: (Co, Ci, Kh, Kw), no bias)
    fan_in = in_channels * kernel_size * kernel_size
    weight = jax.random.normal(
        kw, (out_channels, in_channels, kernel_size, kernel_size), dtype=jnp.float32
    ) * (1.0 / np.sqrt(fan_in))

    out = jax.block_until_ready(fconv_forward(x, weight, padding, p))
    ref = jax.block_until_ready(_reference(x, weight, padding, p))
    np.testing.assert_allclose(np.asarray(out), np.asarray(ref), rtol=1e-5, atol=1e-5)

    print("KERNEL_OK")
</pallas_src>

<mosaic_0001>
module attributes {stable_mosaic.version = 11 : i64} {
  func.func @kernel(%arg0: i32, %arg1: memref<2x4x16x16xf32, #tpu.memory_space<vmem>>, %arg2: memref<8x36xf32, #tpu.memory_space<vmem>>, %arg3: memref<8x512xf32, #tpu.memory_space<vmem>>, %arg4: memref<4x4x10x18xf32, #tpu.memory_space<vmem>>) attributes {dimension_semantics = [#tpu.dimension_semantics<arbitrary>], iteration_bounds = array<i64: 1>, scalar_prefetch = 0 : i64, scratch_operands = 1 : i64, tpu.core_type = #tpu.core_type<tc>, window_params = [{pipeline_mode = #tpu.pipeline_mode<synchronous>, transform_indices = @transform_0, window_bounds = array<i64: 2, 4, 16, 16>}, {pipeline_mode = #tpu.pipeline_mode<synchronous>, transform_indices = @transform_1, window_bounds = array<i64: 8, 36>}, {pipeline_mode = #tpu.pipeline_mode<synchronous>, transform_indices = @transform_2, window_bounds = array<i64: 8, 512>}]} {
    %cst = arith.constant 0.000000e+00 : f32
    %0 = vector.broadcast %cst : f32 to vector<4x4x10x18xf32>
    %c0 = arith.constant 0 : index
    %c0_0 = arith.constant 0 : index
    %c0_1 = arith.constant 0 : index
    %c0_2 = arith.constant 0 : index
    %1 = vector.load %arg4[%c0, %c0_0, %c0_1, %c0_2] : memref<4x4x10x18xf32, #tpu.memory_space<vmem>>, vector<4x4x10x18xf32>
    tpu.vector_store %arg4[%c0, %c0_0, %c0_1, %c0_2], %0 {strides = array<i32>} : memref<4x4x10x18xf32, #tpu.memory_space<vmem>>, vector<4x4x10x18xf32>,
    %c0_3 = arith.constant 0 : index
    %c0_4 = arith.constant 0 : index
    %c0_5 = arith.constant 0 : index
    %c0_6 = arith.constant 0 : index
    %2 = vector.load %arg1[%c0_3, %c0_4, %c0_5, %c0_6] : memref<2x4x16x16xf32, #tpu.memory_space<vmem>>, vector<1x4x8x16xf32>
    %3 = vector.shape_cast %2 : vector<1x4x8x16xf32> to vector<4x8x16xf32>
    %c0_7 = arith.constant 0 : index
    %c0_8 = arith.constant 0 : index
    %c1 = arith.constant 1 : index
    %c1_9 = arith.constant 1 : index
    %4 = vector.load %arg4[%c0_7, %c0_8, %c1, %c1_9] : memref<4x4x10x18xf32, #tpu.memory_space<vmem>>, vector<1x4x8x16xf32>
    %5 = vector.shape_cast %4 : vector<1x4x8x16xf32> to vector<4x8x16xf32>
    %6 = vector.shape_cast %3 : vector<4x8x16xf32> to vector<1x4x8x16xf32>
    tpu.vector_store %arg4[%c0_7, %c0_8, %c1, %c1_9], %6 {strides = array<i32>} : memref<4x4x10x18xf32, #tpu.memory_space<vmem>>, vector<1x4x8x16xf32>,
    %c1_10 = arith.constant 1 : index
    %c0_11 = arith.constant 0 : index
    %c0_12 = arith.constant 0 : index
    %c0_13 = arith.constant 0 : index
    %7 = vector.load %arg1[%c1_10, %c0_11, %c0_12, %c0_13] : memref<2x4x16x16xf32, #tpu.memory_space<vmem>>, vector<1x4x8x16xf32>
    %8 = vector.shape_cast %7 : vector<1x4x8x16xf32> to vector<4x8x16xf32>
    %c1_14 = arith.constant 1 : index
    %c0_15 = arith.constant 0 : index
    %c1_16 = arith.constant 1 : index
    %c1_17 = arith.constant 1 : index
    %9 = vector.load %arg4[%c1_14, %c0_15, %c1_16, %c1_17] : memref<4x4x10x18xf32, #tpu.memory_space<vmem>>, vector<1x4x8x16xf32>
    %10 = vector.shape_cast %9 : vector<1x4x8x16xf32> to vector<4x8x16xf32>
    %11 = vector.shape_cast %8 : vector<4x8x16xf32> to vector<1x4x8x16xf32>
    tpu.vector_store %arg4[%c1_14, %c0_15, %c1_16, %c1_17], %11 {strides = array<i32>} : memref<4x4x10x18xf32, #tpu.memory_space<vmem>>, vector<1x4x8x16xf32>,
    %c0_18 = arith.constant 0 : index
    %c0_19 = arith.constant 0 : index
    %c8 = arith.constant 8 : index
    %c0_20 = arith.constant 0 : index
    %12 = vector.load %arg1[%c0_18, %c0_19, %c8, %c0_20] : memref<2x4x16x16xf32, #tpu.memory_space<vmem>>, vector<1x4x8x16xf32>
    %13 = vector.shape_cast %12 : vector<1x4x8x16xf32> to vector<4x8x16xf32>
    %c2 = arith.constant 2 : index
    %c0_21 = arith.constant 0 : index
    %c1_22 = arith.constant 1 : index
    %c1_23 = arith.constant 1 : index
    %14 = vector.load %arg4[%c2, %c0_21, %c1_22, %c1_23] : memref<4x4x10x18xf32, #tpu.memory_space<vmem>>, vector<1x4x8x16xf32>
    %15 = vector.shape_cast %14 : vector<1x4x8x16xf32> to vector<4x8x16xf32>
    %16 = vector.shape_cast %13 : vector<4x8x16xf32> to vector<1x4x8x16xf32>
    tpu.vector_store %arg4[%c2, %c0_21, %c1_22, %c1_23], %16 {strides = array<i32>} : memref<4x4x10x18xf32, #tpu.memory_space<vmem>>, vector<1x4x8x16xf32>,
    %c1_24 = arith.constant 1 : index
    %c0_25 = arith.constant 0 : index
    %c8_26 = arith.constant 8 : index
    %c0_27 = arith.constant 0 : index
    %17 = vector.load %arg1[%c1_24, %c0_25, %c8_26, %c0_27] : memref<2x4x16x16xf32, #tpu.memory_space<vmem>>, vector<1x4x8x16xf32>
    %18 = vector.shape_cast %17 : vector<1x4x8x16xf32> to vector<4x8x16xf32>
    %c3 = arith.constant 3 : index
    %c0_28 = arith.constant 0 : index
    %c1_29 = arith.constant 1 : index
    %c1_30 = arith.constant 1 : index
    %19 = vector.load %arg4[%c3, %c0_28, %c1_29, %c1_30] : memref<4x4x10x18xf32, #tpu.memory_space<vmem>>, vector<1x4x8x16xf32>
    %20 = vector.shape_cast %19 : vector<1x4x8x16xf32> to vector<4x8x16xf32>
    %21 = vector.shape_cast %18 : vector<4x8x16xf32> to vector<1x4x8x16xf32>
    tpu.vector_store %arg4[%c3, %c0_28, %c1_29, %c1_30], %21 {strides = array<i32>} : memref<4x4x10x18xf32, #tpu.memory_space<vmem>>, vector<1x4x8x16xf32>,
    %c0_31 = arith.constant 0 : index
    %c0_32 = arith.constant 0 : index
    %c0_33 = arith.constant 0 : index
    %c0_34 = arith.constant 0 : index
    %22 = vector.load %arg4[%c0_31, %c0_32, %c0_33, %c0_34] : memref<4x4x10x18xf32, #tpu.memory_space<vmem>>, vector<1x4x8x16xf32>
    %23 = vector.shape_cast %22 : vector<1x4x8x16xf32> to vector<4x8x16xf32>
    %c0_35 = arith.constant 0 : index
    %c0_36 = arith.constant 0 : index
    %c0_37 = arith.constant 0 : index
    %c1_38 = arith.constant 1 : index
    %24 = vector.load %arg4[%c0_35, %c0_36, %c0_37, %c1_38] : memref<4x4x10x18xf32, #tpu.memory_space<vmem>>, vector<1x4x8x16xf32>
    %25 = vector.shape_cast %24 : vector<1x4x8x16xf32> to vector<4x8x16xf32>
    %c0_39 = arith.constant 0 : index
    %c0_40 = arith.constant 0 : index
    %c0_41 = arith.constant 0 : index
    %c2_42 = arith.constant 2 : index
    %26 = vector.load %arg4[%c0_39, %c0_40, %c0_41, %c2_42] : memref<4x4x10x18xf32, #tpu.memory_space<vmem>>, vector<1x4x8x16xf32>
    %27 = vector.shape_cast %26 : vector<1x4x8x16xf32> to vector<4x8x16xf32>
    %c0_43 = arith.constant 0 : index
    %c0_44 = arith.constant 0 : index
    %c1_45 = arith.constant 1 : index
    %c0_46 = arith.constant 0 : index
    %28 = vector.load %arg4[%c0_43, %c0_44, %c1_45, %c0_46] : memref<4x4x10x18xf32, #tpu.memory_space<vmem>>, vector<1x4x8x16xf32>
    %29 = vector.shape_cast %28 : vector<1x4x8x16xf32> to vector<4x8x16xf32>
    %c0_47 = arith.constant 0 : index
    %c0_48 = arith.constant 0 : index
    %c1_49 = arith.constant 1 : index
    %c1_50 = arith.constant 1 : index
    %30 = vector.load %arg4[%c0_47, %c0_48, %c1_49, %c1_50] : memref<4x4x10x18xf32, #tpu.memory_space<vmem>>, vector<1x4x8x16xf32>
    %31 = vector.shape_cast %30 : vector<1x4x8x16xf32> to vector<4x8x16xf32>
    %c0_51 = arith.constant 0 : index
    %c0_52 = arith.constant 0 : index
    %c1_53 = arith.constant 1 : index
    %c2_54 = arith.constant 2 : index
    %32 = vector.load %arg4[%c0_51, %c0_52, %c1_53, %c2_54] : memref<4x4x10x18xf32, #tpu.memory_space<vmem>>, vector<1x4x8x16xf32>
    %33 = vector.shape_cast %32 : vector<1x4x8x16xf32> to vector<4x8x16xf32>
    %c0_55 = arith.constant 0 : index
    %c0_56 = arith.constant 0 : index
    %c2_57 = arith.constant 2 : index
    %c0_58 = arith.constant 0 : index
    %34 = vector.load %arg4[%c0_55, %c0_56, %c2_57, %c0_58] : memref<4x4x10x18xf32, #tpu.memory_space<vmem>>, vector<1x4x8x16xf32>
    %35 = vector.shape_cast %34 : vector<1x4x8x16xf32> to vector<4x8x16xf32>
    %c0_59 = arith.constant 0 : index
    %c0_60 = arith.constant 0 : index
    %c2_61 = arith.constant 2 : index
    %c1_62 = arith.constant 1 : index
    %36 = vector.load %arg4[%c0_59, %c0_60, %c2_61, %c1_62] : memref<4x4x10x18xf32, #tpu.memory_space<vmem>>, vector<1x4x8x16xf32>
    %37 = vector.shape_cast %36 : vector<1x4x8x16xf32> to vector<4x8x16xf32>
    %c0_63 = arith.constant 0 : index
    %c0_64 = arith.constant 0 : index
    %c2_65 = arith.constant 2 : index
    %c2_66 = arith.constant 2 : index
    %38 = vector.load %arg4[%c0_63, %c0_64, %c2_65, %c2_66] : memref<4x4x10x18xf32, #tpu.memory_space<vmem>>, vector<1x4x8x16xf32>
    %39 = vector.shape_cast %38 : vector<1x4x8x16xf32> to vector<4x8x16xf32>
    %40 = tpu.concatenate %23, %25, %27, %29, %31, %33, %35, %37, %39 in 0 : vector<4x8x16xf32>, vector<4x8x16xf32>, vector<4x8x16xf32>, vector<4x8x16xf32>, vector<4x8x16xf32>, vector<4x8x16xf32>, vector<4x8x16xf32>, vector<4x8x16xf32>, vector<4x8x16xf32> -> vector<36x8x16xf32>
    %41 = vector.shape_cast %40 : vector<36x8x16xf32> to vector<36x128xf32>
    %c1_67 = arith.constant 1 : index
    %c0_68 = arith.constant 0 : index
    %c0_69 = arith.constant 0 : index
    %c0_70 = arith.constant 0 : index
    %42 = vector.load %arg4[%c1_67, %c0_68, %c0_69, %c0_70] : memref<4x4x10x18xf32, #tpu.memory_space<vmem>>, vector<1x4x8x16xf32>
    %43 = vector.shape_cast %42 : vector<1x4x8x16xf32> to vector<4x8x16xf32>
    %c1_71 = arith.constant 1 : index
    %c0_72 = arith.constant 0 : index
    %c0_73 = arith.constant 0 : index
    %c1_74 = arith.constant 1 : index
    %44 = vector.load %arg4[%c1_71, %c0_72, %c0_73, %c1_74] : memref<4x4x10x18xf32, #tpu.memory_space<vmem>>, vector<1x4x8x16xf32>
    %45 = vector.shape_cast %44 : vector<1x4x8x16xf32> to vector<4x8x16xf32>
    %c1_75 = arith.constant 1 : index
    %c0_76 = arith.constant 0 : index
    %c0_77 = arith.constant 0 : index
    %c2_78 = arith.constant 2 : index
    %46 = vector.load %arg4[%c1_75, %c0_76, %c0_77, %c2_78] : memref<4x4x10x18xf32, #tpu.memory_space<vmem>>, vector<1x4x8x16xf32>
    %47 = vector.shape_cast %46 : vector<1x4x8x16xf32> to vector<4x8x16xf32>
    %c1_79 = arith.constant 1 : index
    %c0_80 = arith.constant 0 : index
    %c1_81 = arith.constant 1 : index
    %c0_82 = arith.constant 0 : index
    %48 = vector.load %arg4[%c1_79, %c0_80, %c1_81, %c0_82] : memref<4x4x10x18xf32, #tpu.memory_space<vmem>>, vector<1x4x8x16xf32>
    %49 = vector.shape_cast %48 : vector<1x4x8x16xf32> to vector<4x8x16xf32>
    %c1_83 = arith.constant 1 : index
    %c0_84 = arith.constant 0 : index
    %c1_85 = arith.constant 1 : index
    %c1_86 = arith.constant 1 : index
    %50 = vector.load %arg4[%c1_83, %c0_84, %c1_85, %c1_86] : memref<4x4x10x18xf32, #tpu.memory_space<vmem>>, vector<1x4x8x16xf32>
    %51 = vector.shape_cast %50 : vector<1x4x8x16xf32> to vector<4x8x16xf32>
    %c1_87 = arith.constant 1 : index
    %c0_88 = arith.constant 0 : index
    %c1_89 = arith.constant 1 : index
    %c2_90 = arith.constant 2 : index
    %52 = vector.load %arg4[%c1_87, %c0_88, %c1_89, %c2_90] : memref<4x4x10x18xf32, #tpu.memory_space<vmem>>, vector<1x4x8x16xf32>
    %53 = vector.shape_cast %52 : vector<1x4x8x16xf32> to vector<4x8x16xf32>
    %c1_91 = arith.constant 1 : index
    %c0_92 = arith.constant 0 : index
    %c2_93 = arith.constant 2 : index
    %c0_94 = arith.constant 0 : index
    %54 = vector.load %arg4[%c1_91, %c0_92, %c2_93, %c0_94] : memref<4x4x10x18xf32, #tpu.memory_space<vmem>>, vector<1x4x8x16xf32>
    %55 = vector.shape_cast %54 : vector<1x4x8x16xf32> to vector<4x8x16xf32>
    %c1_95 = arith.constant 1 : index
    %c0_96 = arith.constant 0 : index
    %c2_97 = arith.constant 2 : index
    %c1_98 = arith.constant 1 : index
    %56 = vector.load %arg4[%c1_95, %c0_96, %c2_97, %c1_98] : memref<4x4x10x18xf32, #tpu.memory_space<vmem>>, vector<1x4x8x16xf32>
    %57 = vector.shape_cast %56 : vector<1x4x8x16xf32> to vector<4x8x16xf32>
    %c1_99 = arith.constant 1 : index
    %c0_100 = arith.constant 0 : index
    %c2_101 = arith.constant 2 : index
    %c2_102 = arith.constant 2 : index
    %58 = vector.load %arg4[%c1_99, %c0_100, %c2_101, %c2_102] : memref<4x4x10x18xf32, #tpu.memory_space<vmem>>, vector<1x4x8x16xf32>
    %59 = vector.shape_cast %58 : vector<1x4x8x16xf32> to vector<4x8x16xf32>
    %60 = tpu.concatenate %43, %45, %47, %49, %51, %53, %55, %57, %59 in 0 : vector<4x8x16xf32>, vector<4x8x16xf32>, vector<4x8x16xf32>, vector<4x8x16xf32>, vector<4x8x16xf32>, vector<4x8x16xf32>, vector<4x8x16xf32>, vector<4x8x16xf32>, vector<4x8x16xf32> -> vector<36x8x16xf32>
    %61 = vector.shape_cast %60 : vector<36x8x16xf32> to vector<36x128xf32>
    %c2_103 = arith.constant 2 : index
    %c0_104 = arith.constant 0 : index
    %c0_105 = arith.constant 0 : index
    %c0_106 = arith.constant 0 : index
    %62 = vector.load %arg4[%c2_103, %c0_104, %c0_105, %c0_106] : memref<4x4x10x18xf32, #tpu.memory_space<vmem>>, vector<1x4x8x16xf32>
    %63 = vector.shape_cast %62 : vector<1x4x8x16xf32> to vector<4x8x16xf32>
    %c2_107 = arith.constant 2 : index
    %c0_108 = arith.constant 0 : index
    %c0_109 = arith.constant 0 : index
    %c1_110 = arith.constant 1 : index
    %64 = vector.load %arg4[%c2_107, %c0_108, %c0_109, %c1_110] : memref<4x4x10x18xf32, #tpu.memory_space<vmem>>, vector<1x4x8x16xf32>
    %65 = vector.shape_cast %64 : vector<1x4x8x16xf32> to vector<4x8x16xf32>
    %c2_111 = arith.constant 2 : index
    %c0_112 = arith.constant 0 : index
    %c0_113 = arith.constant 0 : index
    %c2_114 = arith.constant 2 : index
    %66 = vector.load %arg4[%c2_111, %c0_112, %c0_113, %c2_114] : memref<4x4x10x18xf32, #tpu.memory_space<vmem>>, vector<1x4x8x16xf32>
    %67 = vector.shape_cast %66 : vector<1x4x8x16xf32> to vector<4x8x16xf32>
    %c2_115 = arith.constant 2 : index
    %c0_116 = arith.constant 0 : index
    %c1_117 = arith.constant 1 : index
    %c0_118 = arith.constant 0 : index
    %68 = vector.load %arg4[%c2_115, %c0_116, %c1_117, %c0_118] : memref<4x4x10x18xf32, #tpu.memory_space<vmem>>, vector<1x4x8x16xf32>
    %69 = vector.shape_cast %68 : vector<1x4x8x16xf32> to vector<4x8x16xf32>
    %c2_119 = arith.constant 2 : index
    %c0_120 = arith.constant 0 : index
    %c1_121 = arith.constant 1 : index
    %c1_122 = arith.constant 1 : index
    %70 = vector.load %arg4[%c2_119, %c0_120, %c1_121, %c1_122] : memref<4x4x10x18xf32, #tpu.memory_space<vmem>>, vector<1x4x8x16xf32>
    %71 = vector.shape_cast %70 : vector<1x4x8x16xf32> to vector<4x8x16xf32>
    %c2_123 = arith.constant 2 : index
    %c0_124 = arith.constant 0 : index
    %c1_125 = arith.constant 1 : index
    %c2_126 = arith.constant 2 : index
    %72 = vector.load %arg4[%c2_123, %c0_124, %c1_125, %c2_126] : memref<4x4x10x18xf32, #tpu.memory_space<vmem>>, vector<1x4x8x16xf32>
    %73 = vector.shape_cast %72 : vector<1x4x8x16xf32> to vector<4x8x16xf32>
    %c2_127 = arith.constant 2 : index
    %c0_128 = arith.constant 0 : index
    %c2_129 = arith.constant 2 : index
    %c0_130 = arith.constant 0 : index
    %74 = vector.load %arg4[%c2_127, %c0_128, %c2_129, %c0_130] : memref<4x4x10x18xf32, #tpu.memory_space<vmem>>, vector<1x4x8x16xf32>
    %75 = vector.shape_cast %74 : vector<1x4x8x16xf32> to vector<4x8x16xf32>
    %c2_131 = arith.constant 2 : index
    %c0_132 = arith.constant 0 : index
    %c2_133 = arith.constant 2 : index
    %c1_134 = arith.constant 1 : index
    %76 = vector.load %arg4[%c2_131, %c0_132, %c2_133, %c1_134] : memref<4x4x10x18xf32, #tpu.memory_space<vmem>>, vector<1x4x8x16xf32>
    %77 = vector.shape_cast %76 : vector<1x4x8x16xf32> to vector<4x8x16xf32>
    %c2_135 = arith.constant 2 : index
    %c0_136 = arith.constant 0 : index
    %c2_137 = arith.constant 2 : index
    %c2_138 = arith.constant 2 : index
    %78 = vector.load %arg4[%c2_135, %c0_136, %c2_137, %c2_138] : memref<4x4x10x18xf32, #tpu.memory_space<vmem>>, vector<1x4x8x16xf32>
    %79 = vector.shape_cast %78 : vector<1x4x8x16xf32> to vector<4x8x16xf32>
    %80 = tpu.concatenate %63, %65, %67, %69, %71, %73, %75, %77, %79 in 0 : vector<4x8x16xf32>, vector<4x8x16xf32>, vector<4x8x16xf32>, vector<4x8x16xf32>, vector<4x8x16xf32>, vector<4x8x16xf32>, vector<4x8x16xf32>, vector<4x8x16xf32>, vector<4x8x16xf32> -> vector<36x8x16xf32>
    %81 = vector.shape_cast %80 : vector<36x8x16xf32> to vector<36x128xf32>
    %c3_139 = arith.constant 3 : index
    %c0_140 = arith.constant 0 : index
    %c0_141 = arith.constant 0 : index
    %c0_142 = arith.constant 0 : index
    %82 = vector.load %arg4[%c3_139, %c0_140, %c0_141, %c0_142] : memref<4x4x10x18xf32, #tpu.memory_space<vmem>>, vector<1x4x8x16xf32>
    %83 = vector.shape_cast %82 : vector<1x4x8x16xf32> to vector<4x8x16xf32>
    %c3_143 = arith.constant 3 : index
    %c0_144 = arith.constant 0 : index
    %c0_145 = arith.constant 0 : index
    %c1_146 = arith.constant 1 : index
    %84 = vector.load %arg4[%c3_143, %c0_144, %c0_145, %c1_146] : memref<4x4x10x18xf32, #tpu.memory_space<vmem>>, vector<1x4x8x16xf32>
    %85 = vector.shape_cast %84 : vector<1x4x8x16xf32> to vector<4x8x16xf32>
    %c3_147 = arith.constant 3 : index
    %c0_148 = arith.constant 0 : index
    %c0_149 = arith.constant 0 : index
    %c2_150 = arith.constant 2 : index
    %86 = vector.load %arg4[%c3_147, %c0_148, %c0_149, %c2_150] : memref<4x4x10x18xf32, #tpu.memory_space<vmem>>, vector<1x4x8x16xf32>
    %87 = vector.shape_cast %86 : vector<1x4x8x16xf32> to vector<4x8x16xf32>
    %c3_151 = arith.constant 3 : index
    %c0_152 = arith.constant 0 : index
    %c1_153 = arith.constant 1 : index
    %c0_154 = arith.constant 0 : index
    %88 = vector.load %arg4[%c3_151, %c0_152, %c1_153, %c0_154] : memref<4x4x10x18xf32, #tpu.memory_space<vmem>>, vector<1x4x8x16xf32>
    %89 = vector.shape_cast %88 : vector<1x4x8x16xf32> to vector<4x8x16xf32>
    %c3_155 = arith.constant 3 : index
    %c0_156 = arith.constant 0 : index
    %c1_157 = arith.constant 1 : index
    %c1_158 = arith.constant 1 : index
    %90 = vector.load %arg4[%c3_155, %c0_156, %c1_157, %c1_158] : memref<4x4x10x18xf32, #tpu.memory_space<vmem>>, vector<1x4x8x16xf32>
    %91 = vector.shape_cast %90 : vector<1x4x8x16xf32> to vector<4x8x16xf32>
    %c3_159 = arith.constant 3 : index
    %c0_160 = arith.constant 0 : index
    %c1_161 = arith.constant 1 : index
    %c2_162 = arith.constant 2 : index
    %92 = vector.load %arg4[%c3_159, %c0_160, %c1_161, %c2_162] : memref<4x4x10x18xf32, #tpu.memory_space<vmem>>, vector<1x4x8x16xf32>
    %93 = vector.shape_cast %92 : vector<1x4x8x16xf32> to vector<4x8x16xf32>
    %c3_163 = arith.constant 3 : index
    %c0_164 = arith.constant 0 : index
    %c2_165 = arith.constant 2 : index
    %c0_166 = arith.constant 0 : index
    %94 = vector.load %arg4[%c3_163, %c0_164, %c2_165, %c0_166] : memref<4x4x10x18xf32, #tpu.memory_space<vmem>>, vector<1x4x8x16xf32>
    %95 = vector.shape_cast %94 : vector<1x4x8x16xf32> to vector<4x8x16xf32>
    %c3_167 = arith.constant 3 : index
    %c0_168 = arith.constant 0 : index
    %c2_169 = arith.constant 2 : index
    %c1_170 = arith.constant 1 : index
    %96 = vector.load %arg4[%c3_167, %c0_168, %c2_169, %c1_170] : memref<4x4x10x18xf32, #tpu.memory_space<vmem>>, vector<1x4x8x16xf32>
    %97 = vector.shape_cast %96 : vector<1x4x8x16xf32> to vector<4x8x16xf32>
    %c3_171 = arith.constant 3 : index
    %c0_172 = arith.constant 0 : index
    %c2_173 = arith.constant 2 : index
    %c2_174 = arith.constant 2 : index
    %98 = vector.load %arg4[%c3_171, %c0_172, %c2_173, %c2_174] : memref<4x4x10x18xf32, #tpu.memory_space<vmem>>, vector<1x4x8x16xf32>
    %99 = vector.shape_cast %98 : vector<1x4x8x16xf32> to vector<4x8x16xf32>
    %100 = tpu.concatenate %83, %85, %87, %89, %91, %93, %95, %97, %99 in 0 : vector<4x8x16xf32>, vector<4x8x16xf32>, vector<4x8x16xf32>, vector<4x8x16xf32>, vector<4x8x16xf32>, vector<4x8x16xf32>, vector<4x8x16xf32>, vector<4x8x16xf32>, vector<4x8x16xf32> -> vector<36x8x16xf32>
    %101 = vector.shape_cast %100 : vector<36x8x16xf32> to vector<36x128xf32>
    %102 = tpu.concatenate %41, %61, %81, %101 in 1 : vector<36x128xf32>, vector<36x128xf32>, vector<36x128xf32>, vector<36x128xf32> -> vector<36x512xf32>
    %c0_175 = arith.constant 0 : index
    %c0_176 = arith.constant 0 : index
    %103 = vector.load %arg2[%c0_175, %c0_176] : memref<8x36xf32, #tpu.memory_space<vmem>>, vector<8x36xf32>
    %cst_177 = arith.constant dense<0.000000e+00> : vector<8x512xf32>
    %104 = tpu.matmul %103, %102, %cst_177 {dimension_numbers = #tpu.dot_dimension_numbers<[1], [0], [0], [1], [0, 0, 1, 1], [], []>} : vector<8x36xf32>, vector<36x512xf32>, vector<8x512xf32> -> vector<8x512xf32>
    %cst_178 = arith.constant 0.000000e+00 : f32
    %105 = vector.broadcast %cst_178 : f32 to vector<8x512xf32>
    %106 = arith.cmpf oge, %104, %105 : vector<8x512xf32>
    %cst_179 = arith.constant 9.99999974E-5 : f32
    %107 = vector.broadcast %cst_179 : f32 to vector<8x512xf32>
    %108 = arith.mulf %107, %104 : vector<8x512xf32>
    %109 = arith.select %106, %104, %108 : vector<8x512xi1>, vector<8x512xf32>
    %c0_180 = arith.constant 0 : index
    %c0_181 = arith.constant 0 : index
    %110 = vector.load %arg3[%c0_180, %c0_181] : memref<8x512xf32, #tpu.memory_space<vmem>>, vector<8x512xf32>
    tpu.vector_store %arg3[%c0_180, %c0_181], %109 {strides = array<i32>} : memref<8x512xf32, #tpu.memory_space<vmem>>, vector<8x512xf32>,
    return
  }
  func.func @transform_0(%arg0: i32) -> (i32, i32, i32, i32) {
    %c0_i32 = arith.constant 0 : i32
    %c0_i32_0 = arith.constant 0 : i32
    %c0_i32_1 = arith.constant 0 : i32
    %c0_i32_2 = arith.constant 0 : i32
    %c0_i32_3 = arith.constant 0 : i32
    return %c0_i32, %c0_i32_0, %c0_i32_1, %c0_i32_2 : i32, i32, i32, i32
  }
  func.func @transform_1(%arg0: i32) -> (i32, i32) {
    %c0_i32 = arith.constant 0 : i32
    %c0_i32_0 = arith.constant 0 : i32
    %c0_i32_1 = arith.constant 0 : i32
    return %c0_i32, %c0_i32_0 : i32, i32
  }
  func.func @transform_2(%arg0: i32) -> (i32, i32) {
    %c0_i32 = arith.constant 0 : i32
    %c0_i32_0 = arith.constant 0 : i32
    %c0_i32_1 = arith.constant 0 : i32
    return %c0_i32, %c0_i32_0 : i32, i32
  }
}

</mosaic_0001>

<llo_original>
// kernel: fconv_forward.1
$region0: #{fconv_forward.1}
  #allocation0 [shape = 'u32[]', space=smem, size = 0x4, offset = 0x4, fixed_abs, tag = 'smem constant byte address 0x4 - core index']
  #allocation1 [shape = 'u32[144,128]{1,0:T(1,128)}', space=vmem, size = 0x12000, scoped, tag = 'internal scratch']
  #allocation2 [shape = 'f32[4,4,10,18]{3,2,1,0:T(8,128)}', space=vmem, size = 0x20000, scoped, tag = 'scratch operand']
  %s0 = inlined_call_operand.hbm [shape: f32[2,4,16,16], index: 0, kind: input, shape index: {}]
  %s1 = inlined_call_operand.vmem [shape: f32[8,36], index: 1, kind: input, shape index: {}]
  %s2 = inlined_call_operand.vmem [shape: f32[8,512], index: 2, kind: output, shape index: {}]
  %s3 = sld [smem:[#allocation0]]
  $region22: #{fconv_forward.1} parent=0
    _
  %s5 = ssub.s32 1, %s3
  %s6 = scalar_select 0, %s5, %s3
  $region1: #{fconv_forward.1} parent=0
    #allocation3 [shape = 'u8[65536]{0}', space=vmem, size = 0x10000, scoped, tag = 'input window, operand 0, single buffered']
    #allocation4 [shape = 's32[1]{0}', space=sflag, size = 0x4, scoped, tag = 'scoped memory for fconv_forward.1']
    %7 = vsyncpa [#allocation4], 0
    // Predicated region
    $region2: #{fconv_forward.1} parent=1 // pred_check
      _
    $region3: #{fconv_forward.1} parent=1 // pred_check_branch
      %9 = sbr.rel (0) target = $region5
    $region4: #{fconv_forward.1} parent=1 // pred_region
      %s11 = ssub.s32 2048, 2048
      %12 = vsyncadd [#allocation4], %s11
      %s13 = sshll.u32 [#allocation3], 4
      %s14 = int_to_ptr.vmem [resolvable:$true] %s13
      %19 = dma.hbm_to_vmem [thread:$0]  %s0, 2048, %s14, [#allocation4], 128, 128, 8
    $region5: #{fconv_forward.1} parent=1 // pred_fallthru
      _
    // Predicated region
    $region6: #{fconv_forward.1} parent=1 // pred_check
      _
    $region7: #{fconv_forward.1} parent=1 // pred_check_branch
      %21 = sbr.rel (0) target = $region9
    $region8: #{fconv_forward.1} parent=1 // pred_region
      _
    $region9: #{fconv_forward.1} parent=1 // pred_fallthru
      _
    // Predicated region
    $region10: #{fconv_forward.1} parent=1 // pred_check
      _
    $region11: #{fconv_forward.1} parent=1 // pred_check_branch
      %23 = sbr.rel (0) target = $region13
    $region12: #{fconv_forward.1} parent=1 // pred_region
      %24 = dma.done [#allocation4], 2048
    $region13: #{fconv_forward.1} parent=1 // pred_fallthru
      _
    %vm25 = vcmask 146432
    %26 = vst.msk [vmem:[#allocation2] sm:$0xff] %vm25, 0.0
    %vm27 = vcmask 140288
    %28 = vst.msk [vmem:[#allocation2 + $0x8] sm:$0x3] %vm27, 0.0
    %29 = vst.msk [vmem:[#allocation2 + $0x10] sm:$0xff] %vm25, 0.0
    %30 = vst.msk [vmem:[#allocation2 + $0x18] sm:$0x3] %vm27, 0.0
    %31 = vst.msk [vmem:[#allocation2 + $0x20] sm:$0xff] %vm25, 0.0
    %32 = vst.msk [vmem:[#allocation2 + $0x28] sm:$0x3] %vm27, 0.0
    %33 = vst.msk [vmem:[#allocation2 + $0x30] sm:$0xff] %vm25, 0.0
    %34 = vst.msk [vmem:[#allocation2 + $0x38] sm:$0x3] %vm27, 0.0
    %35 = vst.msk [vmem:[#allocation2 + $0x40] sm:$0xff] %vm25, 0.0
    %36 = vst.msk [vmem:[#allocation2 + $0x48] sm:$0x3] %vm27, 0.0
    %37 = vst.msk [vmem:[#allocation2 + $0x50] sm:$0xff] %vm25, 0.0
    %38 = vst.msk [vmem:[#allocation2 + $0x58] sm:$0x3] %vm27, 0.0
    %39 = vst.msk [vmem:[#allocation2 + $0x60] sm:$0xff] %vm25, 0.0
    %40 = vst.msk [vmem:[#allocation2 + $0x68] sm:$0x3] %vm27, 0.0
    %41 = vst.msk [vmem:[#allocation2 + $0x70] sm:$0xff] %vm25, 0.0
    %42 = vst.msk [vmem:[#allocation2 + $0x78] sm:$0x3] %vm27, 0.0
    %43 = vst.msk [vmem:[#allocation2 + $0x80] sm:$0xff] %vm25, 0.0
    %44 = vst.msk [vmem:[#allocation2 + $0x88] sm:$0x3] %vm27, 0.0
    %45 = vst.msk [vmem:[#allocation2 + $0x90] sm:$0xff] %vm25, 0.0
    %46 = vst.msk [vmem:[#allocation2 + $0x98] sm:$0x3] %vm27, 0.0
    %47 = vst.msk [vmem:[#allocation2 + $0xa0] sm:$0xff] %vm25, 0.0
    %48 = vst.msk [vmem:[#allocation2 + $0xa8] sm:$0x3] %vm27, 0.0
    %49 = vst.msk [vmem:[#allocation2 + $0xb0] sm:$0xff] %vm25, 0.0
    %50 = vst.msk [vmem:[#allocation2 + $0xb8] sm:$0x3] %vm27, 0.0
    %51 = vst.msk [vmem:[#allocation2 + $0xc0] sm:$0xff] %vm25, 0.0
    %52 = vst.msk [vmem:[#allocation2 + $0xc8] sm:$0x3] %vm27, 0.0
    %53 = vst.msk [vmem:[#allocation2 + $0xd0] sm:$0xff] %vm25, 0.0
    %54 = vst.msk [vmem:[#allocation2 + $0xd8] sm:$0x3] %vm27, 0.0
    %55 = vst.msk [vmem:[#allocation2 + $0xe0] sm:$0xff] %vm25, 0.0
    %56 = vst.msk [vmem:[#allocation2 + $0xe8] sm:$0x3] %vm27, 0.0
    %57 = vst.msk [vmem:[#allocation2 + $0xf0] sm:$0xff] %vm25, 0.0
    %58 = vst.msk [vmem:[#allocation2 + $0xf8] sm:$0x3] %vm27, 0.0
    %v59 = vld [vmem:[#allocation3] sm:$0xff]
    %v60 = vld [vmem:[#allocation3 + $0x10] sm:$0xff]
    %v61 = vld [vmem:[#allocation3 + $0x20] sm:$0xff]
    %v62 = vld [vmem:[#allocation3 + $0x30] sm:$0xff]
    %67 = vrot.lane.b32.xlu0 %v59, 1
    %v68 = vpop.permute.xlu0 %67
    %69 = vrot.lane.b32.xlu0 %v60, 1
    %v70 = vpop.permute.xlu0 %69
    %71 = vrot.lane.b32.xlu0 %v61, 1
    %v72 = vpop.permute.xlu0 %71
    %73 = vrot.lane.b32.xlu0 %v62, 1
    %v74 = vpop.permute.xlu0 %73
    %vm79 = vcmask 138248
    %80 = vst.msk [vmem:[#allocation2 + $0x1] sm:$0xff] %vm79, %v68
    %81 = vst.msk [vmem:[#allocation2 + $0x11] sm:$0xff] %vm79, %v70
    %82 = vst.msk [vmem:[#allocation2 + $0x21] sm:$0xff] %vm79, %v72
    %83 = vst.msk [vmem:[#allocation2 + $0x31] sm:$0xff] %vm79, %v74
    %s84 = scalar_lea.vmem [#allocation3], 64
    %v85 = vld [vmem:[%s84] sm:$0xff]
    %v86 = vld [vmem:[%s84 + $0x10] sm:$0xff]
    %v87 = vld [vmem:[%s84 + $0x20] sm:$0xff]
    %v88 = vld [vmem:[%s84 + $0x30] sm:$0xff]
    %93 = vrot.lane.b32.xlu0 %v85, 1
    %v94 = vpop.permute.xlu0 %93
    %95 = vrot.lane.b32.xlu0 %v86, 1
    %v96 = vpop.permute.xlu0 %95
    %97 = vrot.lane.b32.xlu0 %v87, 1
    %v98 = vpop.permute.xlu0 %97
    %99 = vrot.lane.b32.xlu0 %v88, 1
    %v100 = vpop.permute.xlu0 %99
    %s105 = scalar_lea.vmem [#allocation2], 64
    %106 = vst.msk [vmem:[%s105 + $0x1] sm:$0xff] %vm79, %v94
    %107 = vst.msk [vmem:[%s105 + $0x11] sm:$0xff] %vm79, %v96
    %108 = vst.msk [vmem:[%s105 + $0x21] sm:$0xff] %vm79, %v98
    %109 = vst.msk [vmem:[%s105 + $0x31] sm:$0xff] %vm79, %v100
    %v110 = vld [vmem:[#allocation3 + $0x8] sm:$0xff]
    %v111 = vld [vmem:[#allocation3 + $0x18] sm:$0xff]
    %v112 = vld [vmem:[#allocation3 + $0x28] sm:$0xff]
    %v113 = vld [vmem:[#allocation3 + $0x38] sm:$0xff]
    %118 = vrot.lane.b32.xlu0 %v110, 1
    %v119 = vpop.permute.xlu0 %118
    %120 = vrot.lane.b32.xlu0 %v111, 1
    %v121 = vpop.permute.xlu0 %120
    %122 = vrot.lane.b32.xlu0 %v112, 1
    %v123 = vpop.permute.xlu0 %122
    %124 = vrot.lane.b32.xlu0 %v113, 1
    %v125 = vpop.permute.xlu0 %124
    %s130 = scalar_lea.vmem [#allocation2], 128
    %131 = vst.msk [vmem:[%s130 + $0x1] sm:$0xff] %vm79, %v119
    %132 = vst.msk [vmem:[%s130 + $0x11] sm:$0xff] %vm79, %v121
    %133 = vst.msk [vmem:[%s130 + $0x21] sm:$0xff] %vm79, %v123
    %134 = vst.msk [vmem:[%s130 + $0x31] sm:$0xff] %vm79, %v125
    %v135 = vld [vmem:[%s84 + $0x8] sm:$0xff]
    %v136 = vld [vmem:[%s84 + $0x18] sm:$0xff]
    %v137 = vld [vmem:[%s84 + $0x28] sm:$0xff]
    %v138 = vld [vmem:[%s84 + $0x38] sm:$0xff]
    %143 = vrot.lane.b32.xlu0 %v135, 1
    %v144 = vpop.permute.xlu0 %143
    %145 = vrot.lane.b32.xlu0 %v136, 1
    %v146 = vpop.permute.xlu0 %145
    %147 = vrot.lane.b32.xlu0 %v137, 1
    %v148 = vpop.permute.xlu0 %147
    %149 = vrot.lane.b32.xlu0 %v138, 1
    %v150 = vpop.permute.xlu0 %149
    %s155 = scalar_lea.vmem [#allocation2], 192
    %156 = vst.msk [vmem:[%s155 + $0x1] sm:$0xff] %vm79, %v144
    %157 = vst.msk [vmem:[%s155 + $0x11] sm:$0xff] %vm79, %v146
    %158 = vst.msk [vmem:[%s155 + $0x21] sm:$0xff] %vm79, %v148
    %159 = vst.msk [vmem:[%s155 + $0x31] sm:$0xff] %vm79, %v150
    %v160 = vld [vmem:[#allocation2] sm:$0xff]
    %v161 = vld [vmem:[#allocation2 + $0x10] sm:$0xff]
    %v162 = vld [vmem:[#allocation2 + $0x20] sm:$0xff]
    %v163 = vld [vmem:[#allocation2 + $0x30] sm:$0xff]
    %v164 = vld [vmem:[#allocation2 + $0x1] sm:$0xff]
    %v165 = vld [vmem:[#allocation2 + $0x11] sm:$0xff]
    %v166 = vld [vmem:[#allocation2 + $0x21] sm:$0xff]
    %v167 = vld [vmem:[#allocation2 + $0x31] sm:$0xff]
    %v168 = vld [vmem:[#allocation2 + $0x2] sm:$0xff]
    %v169 = vld [vmem:[#allocation2 + $0x12] sm:$0xff]
    %v170 = vld [vmem:[#allocation2 + $0x22] sm:$0xff]
    %v171 = vld [vmem:[#allocation2 + $0x32] sm:$0xff]
    %176 = vrot.lane.b32.xlu0 %v160, 127
    %v177 = vpop.permute.xlu0 %176
    %178 = vrot.lane.b32.xlu0 %v161, 127
    %v179 = vpop.permute.xlu0 %178
    %180 = vrot.lane.b32.xlu0 %v162, 127
    %v181 = vpop.permute.xlu0 %180
    %182 = vrot.lane.b32.xlu0 %v163, 127
    %v183 = vpop.permute.xlu0 %182
    %188 = vrot.lane.b32.xlu0 %v160, 126
    %v189 = vpop.permute.xlu0 %188
    %190 = vrot.lane.b32.xlu0 %v161, 126
    %v191 = vpop.permute.xlu0 %190
    %192 = vrot.lane.b32.xlu0 %v162, 126
    %v193 = vpop.permute.xlu0 %192
    %194 = vrot.lane.b32.xlu0 %v163, 126
    %v195 = vpop.permute.xlu0 %194
    %204 = vrot.lane.b32.xlu0 %v164, 127
    %v205 = vpop.permute.xlu0 %204
    %206 = vrot.lane.b32.xlu0 %v165, 127
    %v207 = vpop.permute.xlu0 %206
    %208 = vrot.lane.b32.xlu0 %v166, 127
    %v209 = vpop.permute.xlu0 %208
    %210 = vrot.lane.b32.xlu0 %v167, 127
    %v211 = vpop.permute.xlu0 %210
    %216 = vrot.lane.b32.xlu0 %v164, 126
    %v217 = vpop.permute.xlu0 %216
    %218 = vrot.lane.b32.xlu0 %v165, 126
    %v219 = vpop.permute.xlu0 %218
    %220 = vrot.lane.b32.xlu0 %v166, 126
    %v221 = vpop.permute.xlu0 %220
    %222 = vrot.lane.b32.xlu0 %v167, 126
    %v223 = vpop.permute.xlu0 %222
    %232 = vrot.lane.b32.xlu0 %v168, 127
    %v233 = vpop.permute.xlu0 %232
    %234 = vrot.lane.b32.xlu0 %v169, 127
    %v235 = vpop.permute.xlu0 %234
    %236 = vrot.lane.b32.xlu0 %v170, 127
    %v237 = vpop.permute.xlu0 %236
    %238 = vrot.lane.b32.xlu0 %v171, 127
    %v239 = vpop.permute.xlu0 %238
    %244 = vrot.lane.b32.xlu0 %v168, 126
    %v245 = vpop.permute.xlu0 %244
    %246 = vrot.lane.b32.xlu0 %v169, 126
    %v247 = vpop.permute.xlu0 %246
    %248 = vrot.lane.b32.xlu0 %v170, 126
    %v249 = vpop.permute.xlu0 %248
    %250 = vrot.lane.b32.xlu0 %v171, 126
    %v251 = vpop.permute.xlu0 %250
    %v256 = vcombine.low %v160, %v162
    %v257 = vcombine.high %v160, %v162
    %v259 = vunpack.c.l.s4 1983009808
    %v260 = vunpack.c.0.s8 %v259
    %v261 = vlaneseq
    %v262 = vshrl.u32 %v261, 7
    %v263 = vsub.s32 %v260, %v262
    %v264 = vrot.slane %v256, %v263
    %v266 = vunpack.c.l.s4 1983009808
    %v267 = vunpack.c.0.s8 %v266
    %v268 = vlaneseq
    %v269 = vshrl.u32 %v268, 7
    %v270 = vsub.s32 %v267, %v269
    %v271 = vrot.slane %v257, %v270
    %v272 = vcombine.low %v161, %v163
    %v273 = vcombine.high %v161, %v163
    %v275 = vunpack.c.l.s4 1983009808
    %v276 = vunpack.c.0.s8 %v275
    %v277 = vlaneseq
    %v278 = vshrl.u32 %v277, 7
    %v279 = vsub.s32 %v276, %v278
    %v280 = vrot.slane %v272, %v279
    %v282 = vunpack.c.l.s4 1983009808
    %v283 = vunpack.c.0.s8 %v282
    %v284 = vlaneseq
    %v285 = vshrl.u32 %v284, 7
    %v286 = vsub.s32 %v283, %v285
    %v287 = vrot.slane %v273, %v286
    %v288 = vcombine.low %v177, %v181
    %v289 = vcombine.high %v177, %v181
    %v291 = vunpack.c.l.s4 1983009808
    %v292 = vunpack.c.0.s8 %v291
    %v293 = vlaneseq
    %v294 = vshrl.u32 %v293, 7
    %v295 = vsub.s32 %v292, %v294
    %v296 = vrot.slane %v288, %v295
    %v298 = vunpack.c.l.s4 1983009808
    %v299 = vunpack.c.0.s8 %v298
    %v300 = vlaneseq
    %v301 = vshrl.u32 %v300, 7
    %v302 = vsub.s32 %v299, %v301
    %v303 = vrot.slane %v289, %v302
    %v304 = vcombine.low %v179, %v183
    %v305 = vcombine.high %v179, %v183
    %v307 = vunpack.c.l.s4 1983009808
    %v308 = vunpack.c.0.s8 %v307
    %v309 = vlaneseq
    %v310 = vshrl.u32 %v309, 7
    %v311 = vsub.s32 %v308, %v310
    %v312 = vrot.slane %v304, %v311
    %v314 = vunpack.c.l.s4 1983009808
    %v315 = vunpack.c.0.s8 %v314
    %v316 = vlaneseq
    %v317 = vshrl.u32 %v316, 7
    %v318 = vsub.s32 %v315, %v317
    %v319 = vrot.slane %v305, %v318
    %v320 = vcombine.low %v264, %v280
    %v321 = vcombine.high %v264, %v280
    %v323 = vunpack.c.l.s4 1934713408
    %v324 = vunpack.c.0.s8 %v323
    %v325 = vlaneseq
    %v326 = vshrl.u32 %v325, 7
    %v327 = vsub.s32 %v324, %v326
    %v328 = vrot.slane %v320, %v327
    %v330 = vunpack.c.l.s4 1934713408
    %v331 = vunpack.c.0.s8 %v330
    %v332 = vlaneseq
    %v333 = vshrl.u32 %v332, 7
    %v334 = vsub.s32 %v331, %v333
    %v335 = vrot.slane %v321, %v334
    %v336 = vcombine.low %v271, %v287
    %v337 = vcombine.high %v271, %v287
    %v339 = vunpack.c.l.s4 1934713408
    %v340 = vunpack.c.0.s8 %v339
    %v341 = vlaneseq
    %v342 = vshrl.u32 %v341, 7
    %v343 = vsub.s32 %v340, %v342
    %v344 = vrot.slane %v336, %v343
    %v346 = vunpack.c.l.s4 1934713408
    %v347 = vunpack.c.0.s8 %v346
    %v348 = vlaneseq
    %v349 = vshrl.u32 %v348, 7
    %v350 = vsub.s32 %v347, %v349
    %v351 = vrot.slane %v337, %v350
    %v352 = vcombine.low %v296, %v312
    %v353 = vcombine.high %v296, %v312
    %v355 = vunpack.c.l.s4 1934713408
    %v356 = vunpack.c.0.s8 %v355
    %v357 = vlaneseq
    %v358 = vshrl.u32 %v357, 7
    %v359 = vsub.s32 %v356, %v358
    %v360 = vrot.slane %v352, %v359
    %v362 = vunpack.c.l.s4 1934713408
    %v363 = vunpack.c.0.s8 %v362
    %v364 = vlaneseq
    %v365 = vshrl.u32 %v364, 7
    %v366 = vsub.s32 %v363, %v365
    %v367 = vrot.slane %v353, %v366
    %v368 = vcombine.low %v303, %v319
    %v369 = vcombine.high %v303, %v319
    %v371 = vunpack.c.l.s4 1934713408
    %v372 = vunpack.c.0.s8 %v371
    %v373 = vlaneseq
    %v374 = vshrl.u32 %v373, 7
    %v375 = vsub.s32 %v372, %v374
    %v376 = vrot.slane %v368, %v375
    %v378 = vunpack.c.l.s4 1934713408
    %v379 = vunpack.c.0.s8 %v378
    %v380 = vlaneseq
    %v381 = vshrl.u32 %v380, 7
    %v382 = vsub.s32 %v379, %v381
    %v383 = vrot.slane %v369, %v382
    %v384 = vcombine.low %v328, %v360
    %v385 = vcombine.high %v328, %v360
    %v386 = vcombine.low %v335, %v367
    %v387 = vcombine.high %v335, %v367
    %v388 = vcombine.low %v344, %v376
    %v389 = vcombine.high %v344, %v376
    %v390 = vcombine.low %v351, %v383
    %v391 = vcombine.high %v351, %v383
    %v392 = vcombine.low %v189, %v193
    %v393 = vcombine.high %v189, %v193
    %v395 = vunpack.c.l.s4 1983009808
    %v396 = vunpack.c.0.s8 %v395
    %v397 = vlaneseq
    %v398 = vshrl.u32 %v397, 7
    %v399 = vsub.s32 %v396, %v398
    %v400 = vrot.slane %v392, %v399
    %v402 = vunpack.c.l.s4 1983009808
    %v403 = vunpack.c.0.s8 %v402
    %v404 = vlaneseq
    %v405 = vshrl.u32 %v404, 7
    %v406 = vsub.s32 %v403, %v405
    %v407 = vrot.slane %v393, %v406
    %v408 = vcombine.low %v191, %v195
    %v409 = vcombine.high %v191, %v195
    %v411 = vunpack.c.l.s4 1983009808
    %v412 = vunpack.c.0.s8 %v411
    %v413 = vlaneseq
    %v414 = vshrl.u32 %v413, 7
    %v415 = vsub.s32 %v412, %v414
    %v416 = vrot.slane %v408, %v415
    %v418 = vunpack.c.l.s4 1983009808
    %v419 = vunpack.c.0.s8 %v418
    %v420 = vlaneseq
    %v421 = vshrl.u32 %v420, 7
    %v422 = vsub.s32 %v419, %v421
    %v423 = vrot.slane %v409, %v422
    %v424 = vcombine.low %v164, %v166
    %v425 = vcombine.high %v164, %v166
    %v427 = vunpack.c.l.s4 1983009808
    %v428 = vunpack.c.0.s8 %v427
    %v429 = vlaneseq
    %v430 = vshrl.u32 %v429, 7
    %v431 = vsub.s32 %v428, %v430
    %v432 = vrot.slane %v424, %v431
    %v434 = vunpack.c.l.s4 1983009808
    %v435 = vunpack.c.0.s8 %v434
    %v436 = vlaneseq
    %v437 = vshrl.u32 %v436, 7
    %v438 = vsub.s32 %v435, %v437
    %v439 = vrot.slane %v425, %v438
    %v440 = vcombine.low %v165, %v167
    %v441 = vcombine.high %v165, %v167
    %v443 = vunpack.c.l.s4 1983009808
    %v444 = vunpack.c.0.s8 %v443
    %v445 = vlaneseq
    %v446 = vshrl.u32 %v445, 7
    %v447 = vsub.s32 %v444, %v446
    %v448 = vrot.slane %v440, %v447
    %v450 = vunpack.c.l.s4 1983009808
    %v451 = vunpack.c.0.s8 %v450
    %v452 = vlaneseq
    %v453 = vshrl.u32 %v452, 7
    %v454 = vsub.s32 %v451, %v453
    %v455 = vrot.slane %v441, %v454
    %v456 = vcombine.low %v400, %v416
    %v457 = vcombine.high %v400, %v416
    %v459 = vunpack.c.l.s4 1934713408
    %v460 = vunpack.c.0.s8 %v459
    %v461 = vlaneseq
    %v462 = vshrl.u32 %v461, 7
    %v463 = vsub.s32 %v460, %v462
    %v464 = vrot.slane %v456, %v463
    %v466 = vunpack.c.l.s4 1934713408
    %v467 = vunpack.c.0.s8 %v466
    %v468 = vlaneseq
    %v469 = vshrl.u32 %v468, 7
    %v470 = vsub.s32 %v467, %v469
    %v471 = vrot.slane %v457, %v470
    %v472 = vcombine.low %v407, %v423
    %v473 = vcombine.high %v407, %v423
    %v475 = vunpack.c.l.s4 1934713408
    %v476 = vunpack.c.0.s8 %v475
    %v477 = vlaneseq
    %v478 = vshrl.u32 %v477, 7
    %v479 = vsub.s32 %v476, %v478
    %v480 = vrot.slane %v472, %v479
    %v482 = vunpack.c.l.s4 1934713408
    %v483 = vunpack.c.0.s8 %v482
    %v484 = vlaneseq
    %v485 = vshrl.u32 %v484, 7
    %v486 = vsub.s32 %v483, %v485
    %v487 = vrot.slane %v473, %v486
    %v488 = vcombine.low %v432, %v448
    %v489 = vcombine.high %v432, %v448
    %v491 = vunpack.c.l.s4 1934713408
    %v492 = vunpack.c.0.s8 %v491
    %v493 = vlaneseq
    %v494 = vshrl.u32 %v493, 7
    %v495 = vsub.s32 %v492, %v494
    %v496 = vrot.slane %v488, %v495
    %v498 = vunpack.c.l.s4 1934713408
    %v499 = vunpack.c.0.s8 %v498
    %v500 = vlaneseq
    %v501 = vshrl.u32 %v500, 7
    %v502 = vsub.s32 %v499, %v501
    %v503 = vrot.slane %v489, %v502
    %v504 = vcombine.low %v439, %v455
    %v505 = vcombine.high %v439, %v455
    %v507 = vunpack.c.l.s4 1934713408
    %v508 = vunpack.c.0.s8 %v507
    %v509 = vlaneseq
    %v510 = vshrl.u32 %v509, 7
    %v511 = vsub.s32 %v508, %v510
    %v512 = vrot.slane %v504, %v511
    %v514 = vunpack.c.l.s4 1934713408
    %v515 = vunpack.c.0.s8 %v514
    %v516 = vlaneseq
    %v517 = vshrl.u32 %v516, 7
    %v518 = vsub.s32 %v515, %v517
    %v519 = vrot.slane %v505, %v518
    %v520 = vcombine.low %v464, %v496
    %v521 = vcombine.high %v464, %v496
    %v522 = vcombine.low %v471, %v503
    %v523 = vcombine.high %v471, %v503
    %v524 = vcombine.low %v480, %v512
    %v525 = vcombine.high %v480, %v512
    %v526 = vcombine.low %v487, %v519
    %v527 = vcombine.high %v487, %v519
    %v528 = vcombine.low %v205, %v209
    %v529 = vcombine.high %v205, %v209
    %v531 = vunpack.c.l.s4 1983009808
    %v532 = vunpack.c.0.s8 %v531
    %v533 = vlaneseq
    %v534 = vshrl.u32 %v533, 7
    %v535 = vsub.s32 %v532, %v534
    %v536 = vrot.slane %v528, %v535
    %v538 = vunpack.c.l.s4 1983009808
    %v539 = vunpack.c.0.s8 %v538
    %v540 = vlaneseq
    %v541 = vshrl.u32 %v540, 7
    %v542 = vsub.s32 %v539, %v541
    %v543 = vrot.slane %v529, %v542
    %v544 = vcombine.low %v207, %v211
    %v545 = vcombine.high %v207, %v211
    %v547 = vunpack.c.l.s4 1983009808
    %v548 = vunpack.c.0.s8 %v547
    %v549 = vlaneseq
    %v550 = vshrl.u32 %v549, 7
    %v551 = vsub.s32 %v548, %v550
    %v552 = vrot.slane %v544, %v551
    %v554 = vunpack.c.l.s4 1983009808
    %v555 = vunpack.c.0.s8 %v554
    %v556 = vlaneseq
    %v557 = vshrl.u32 %v556, 7
    %v558 = vsub.s32 %v555, %v557
    %v559 = vrot.slane %v545, %v558
    %v560 = vcombine.low %v217, %v221
    %v561 = vcombine.high %v217, %v221
    %v563 = vunpack.c.l.s4 1983009808
    %v564 = vunpack.c.0.s8 %v563
    %v565 = vlaneseq
    %v566 = vshrl.u32 %v565, 7
    %v567 = vsub.s32 %v564, %v566
    %v568 = vrot.slane %v560, %v567
    %v570 = vunpack.c.l.s4 1983009808
    %v571 = vunpack.c.0.s8 %v570
    %v572 = vlaneseq
    %v573 = vshrl.u32 %v572, 7
    %v574 = vsub.s32 %v571, %v573
    %v575 = vrot.slane %v561, %v574
    %v576 = vcombine.low %v219, %v223
    %v577 = vcombine.high %v219, %v223
    %v579 = vunpack.c.l.s4 1983009808
    %v580 = vunpack.c.0.s8 %v579
    %v581 = vlaneseq
    %v582 = vshrl.u32 %v581, 7
    %v583 = vsub.s32 %v580, %v582
    %v584 = vrot.slane %v576, %v583
    %v586 = vunpack.c.l.s4 1983009808
    %v587 = vunpack.c.0.s8 %v586
    %v588 = vlaneseq
    %v589 = vshrl.u32 %v588, 7
    %v590 = vsub.s32 %v587, %v589
    %v591 = vrot.slane %v577, %v590
    %v592 = vcombine.low %v536, %v552
    %v593 = vcombine.high %v536, %v552
    %v595 = vunpack.c.l.s4 1934713408
    %v596 = vunpack.c.0.s8 %v595
    %v597 = vlaneseq
    %v598 = vshrl.u32 %v597, 7
    %v599 = vsub.s32 %v596, %v598
    %v600 = vrot.slane %v592, %v599
    %v602 = vunpack.c.l.s4 1934713408
    %v603 = vunpack.c.0.s8 %v602
    %v604 = vlaneseq
    %v605 = vshrl.u32 %v604, 7
    %v606 = vsub.s32 %v603, %v605
    %v607 = vrot.slane %v593, %v606
    %v608 = vcombine.low %v543, %v559
    %v609 = vcombine.high %v543, %v559
    %v611 = vunpack.c.l.s4 1934713408
    %v612 = vunpack.c.0.s8 %v611
    %v613 = vlaneseq
    %v614 = vshrl.u32 %v613, 7
    %v615 = vsub.s32 %v612, %v614
    %v616 = vrot.slane %v608, %v615
    %v618 = vunpack.c.l.s4 1934713408
    %v619 = vunpack.c.0.s8 %v618
    %v620 = vlaneseq
    %v621 = vshrl.u32 %v620, 7
    %v622 = vsub.s32 %v619, %v621
    %v623 = vrot.slane %v609, %v622
    %v624 = vcombine.low %v568, %v584
    %v625 = vcombine.high %v568, %v584
    %v627 = vunpack.c.l.s4 1934713408
    %v628 = vunpack.c.0.s8 %v627
    %v629 = vlaneseq
    %v630 = vshrl.u32 %v629, 7
    %v631 = vsub.s32 %v628, %v630
    %v632 = vrot.slane %v624, %v631
    %v634 = vunpack.c.l.s4 1934713408
    %v635 = vunpack.c.0.s8 %v634
    %v636 = vlaneseq
    %v637 = vshrl.u32 %v636, 7
    %v638 = vsub.s32 %v635, %v637
    %v639 = vrot.slane %v625, %v638
    %v640 = vcombine.low %v575, %v591
    %v641 = vcombine.high %v575, %v591
    %v643 = vunpack.c.l.s4 1934713408
    %v644 = vunpack.c.0.s8 %v643
    %v645 = vlaneseq
    %v646 = vshrl.u32 %v645, 7
    %v647 = vsub.s32 %v644, %v646
    %v648 = vrot.slane %v640, %v647
    %v650 = vunpack.c.l.s4 1934713408
    %v651 = vunpack.c.0.s8 %v650
    %v652 = vlaneseq
    %v653 = vshrl.u32 %v652, 7
    %v654 = vsub.s32 %v651, %v653
    %v655 = vrot.slane %v641, %v654
    %v656 = vcombine.low %v600, %v632
    %v657 = vcombine.high %v600, %v632
    %v658 = vcombine.low %v607, %v639
    %v659 = vcombine.high %v607, %v639
    %v660 = vcombine.low %v616, %v648
    %v661 = vcombine.high %v616, %v648
    %v662 = vcombine.low %v623, %v655
    %v663 = vcombine.high %v623, %v655
    %v664 = vcombine.low %v168, %v170
    %v665 = vcombine.high %v168, %v170
    %v667 = vunpack.c.l.s4 1983009808
    %v668 = vunpack.c.0.s8 %v667
    %v669 = vlaneseq
    %v670 = vshrl.u32 %v669, 7
    %v671 = vsub.s32 %v668, %v670
    %v672 = vrot.slane %v664, %v671
    %v674 = vunpack.c.l.s4 1983009808
    %v675 = vunpack.c.0.s8 %v674
    %v676 = vlaneseq
    %v677 = vshrl.u32 %v676, 7
    %v678 = vsub.s32 %v675, %v677
    %v679 = vrot.slane %v665, %v678
    %v680 = vcombine.low %v169, %v171
    %v681 = vcombine.high %v169, %v171
    %v683 = vunpack.c.l.s4 1983009808
    %v684 = vunpack.c.0.s8 %v683
    %v685 = vlaneseq
    %v686 = vshrl.u32 %v685, 7
    %v687 = vsub.s32 %v684, %v686
    %v688 = vrot.slane %v680, %v687
    %v690 = vunpack.c.l.s4 1983009808
    %v691 = vunpack.c.0.s8 %v690
    %v692 = vlaneseq
    %v693 = vshrl.u32 %v692, 7
    %v694 = vsub.s32 %v691, %v693
    %v695 = vrot.slane %v681, %v694
    %v696 = vcombine.low %v233, %v237
    %v697 = vcombine.high %v233, %v237
    %v699 = vunpack.c.l.s4 1983009808
    %v700 = vunpack.c.0.s8 %v699
    %v701 = vlaneseq
    %v702 = vshrl.u32 %v701, 7
    %v703 = vsub.s32 %v700, %v702
    %v704 = vrot.slane %v696, %v703
    %v706 = vunpack.c.l.s4 1983009808
    %v707 = vunpack.c.0.s8 %v706
    %v708 = vlaneseq
    %v709 = vshrl.u32 %v708, 7
    %v710 = vsub.s32 %v707, %v709
    %v711 = vrot.slane %v697, %v710
    %v712 = vcombine.low %v235, %v239
    %v713 = vcombine.high %v235, %v239
    %v715 = vunpack.c.l.s4 1983009808
    %v716 = vunpack.c.0.s8 %v715
    %v717 = vlaneseq
    %v718 = vshrl.u32 %v717, 7
    %v719 = vsub.s32 %v716, %v718
    %v720 = vrot.slane %v712, %v719
    %v722 = vunpack.c.l.s4 1983009808
    %v723 = vunpack.c.0.s8 %v722
    %v724 = vlaneseq
    %v725 = vshrl.u32 %v724, 7
    %v726 = vsub.s32 %v723, %v725
    %v727 = vrot.slane %v713, %v726
    %v728 = vcombine.low %v672, %v688
    %v729 = vcombine.high %v672, %v688
    %v731 = vunpack.c.l.s4 1934713408
    %v732 = vunpack.c.0.s8 %v731
    %v733 = vlaneseq
    %v734 = vshrl.u32 %v733, 7
    %v735 = vsub.s32 %v732, %v734
    %v736 = vrot.slane %v728, %v735
    %v738 = vunpack.c.l.s4 1934713408
    %v739 = vunpack.c.0.s8 %v738
    %v740 = vlaneseq
    %v741 = vshrl.u32 %v740, 7
    %v742 = vsub.s32 %v739, %v741
    %v743 = vrot.slane %v729, %v742
    %v744 = vcombine.low %v679, %v695
    %v745 = vcombine.high %v679, %v695
    %v747 = vunpack.c.l.s4 1934713408
    %v748 = vunpack.c.0.s8 %v747
    %v749 = vlaneseq
    %v750 = vshrl.u32 %v749, 7
    %v751 = vsub.s32 %v748, %v750
    %v752 = vrot.slane %v744, %v751
    %v754 = vunpack.c.l.s4 1934713408
    %v755 = vunpack.c.0.s8 %v754
    %v756 = vlaneseq
    %v757 = vshrl.u32 %v756, 7
    %v758 = vsub.s32 %v755, %v757
    %v759 = vrot.slane %v745, %v758
    %v760 = vcombine.low %v704, %v720
    %v761 = vcombine.high %v704, %v720
    %v763 = vunpack.c.l.s4 1934713408
    %v764 = vunpack.c.0.s8 %v763
    %v765 = vlaneseq
    %v766 = vshrl.u32 %v765, 7
    %v767 = vsub.s32 %v764, %v766
    %v768 = vrot.slane %v760, %v767
    %v770 = vunpack.c.l.s4 1934713408
    %v771 = vunpack.c.0.s8 %v770
    %v772 = vlaneseq
    %v773 = vshrl.u32 %v772, 7
    %v774 = vsub.s32 %v771, %v773
    %v775 = vrot.slane %v761, %v774
    %v776 = vcombine.low %v711, %v727
    %v777 = vcombine.high %v711, %v727
    %v779 = vunpack.c.l.s4 1934713408
    %v780 = vunpack.c.0.s8 %v779
    %v781 = vlaneseq
    %v782 = vshrl.u32 %v781, 7
    %v783 = vsub.s32 %v780, %v782
    %v784 = vrot.slane %v776, %v783
    %v786 = vunpack.c.l.s4 1934713408
    %v787 = vunpack.c.0.s8 %v786
    %v788 = vlaneseq
    %v789 = vshrl.u32 %v788, 7
    %v790 = vsub.s32 %v787, %v789
    %v791 = vrot.slane %v777, %v790
    %v792 = vcombine.low %v736, %v768
    %v793 = vcombine.high %v736, %v768
    %v794 = vcombine.low %v743, %v775
    %v795 = vcombine.high %v743, %v775
    %v796 = vcombine.low %v752, %v784
    %v797 = vcombine.high %v752, %v784
    %v798 = vcombine.low %v759, %v791
    %v799 = vcombine.high %v759, %v791
    %v800 = vcombine.low %v245, %v249
    %v801 = vcombine.high %v245, %v249
    %v803 = vunpack.c.l.s4 1983009808
    %v804 = vunpack.c.0.s8 %v803
    %v805 = vlaneseq
    %v806 = vshrl.u32 %v805, 7
    %v807 = vsub.s32 %v804, %v806
    %v808 = vrot.slane %v800, %v807
    %v810 = vunpack.c.l.s4 1983009808
    %v811 = vunpack.c.0.s8 %v810
    %v812 = vlaneseq
    %v813 = vshrl.u32 %v812, 7
    %v814 = vsub.s32 %v811, %v813
    %v815 = vrot.slane %v801, %v814
    %v816 = vcombine.low %v247, %v251
    %v817 = vcombine.high %v247, %v251
    %v819 = vunpack.c.l.s4 1983009808
    %v820 = vunpack.c.0.s8 %v819
    %v821 = vlaneseq
    %v822 = vshrl.u32 %v821, 7
    %v823 = vsub.s32 %v820, %v822
    %v824 = vrot.slane %v816, %v823
    %v826 = vunpack.c.l.s4 1983009808
    %v827 = vunpack.c.0.s8 %v826
    %v828 = vlaneseq
    %v829 = vshrl.u32 %v828, 7
    %v830 = vsub.s32 %v827, %v829
    %v831 = vrot.slane %v817, %v830
    %v832 = vcombine.low %v808, %v824
    %v833 = vcombine.high %v808, %v824
    %v835 = vunpack.c.l.s4 1934713408
    %v836 = vunpack.c.0.s8 %v835
    %v837 = vlaneseq
    %v838 = vshrl.u32 %v837, 7
    %v839 = vsub.s32 %v836, %v838
    %v840 = vrot.slane %v832, %v839
    %v842 = vunpack.c.l.s4 1934713408
    %v843 = vunpack.c.0.s8 %v842
    %v844 = vlaneseq
    %v845 = vshrl.u32 %v844, 7
    %v846 = vsub.s32 %v843, %v845
    %v847 = vrot.slane %v833, %v846
    %v848 = vcombine.low %v815, %v831
    %v849 = vcombine.high %v815, %v831
    %v851 = vunpack.c.l.s4 1934713408
    %v852 = vunpack.c.0.s8 %v851
    %v853 = vlaneseq
    %v854 = vshrl.u32 %v853, 7
    %v855 = vsub.s32 %v852, %v854
    %v856 = vrot.slane %v848, %v855
    %v858 = vunpack.c.l.s4 1934713408
    %v859 = vunpack.c.0.s8 %v858
    %v860 = vlaneseq
    %v861 = vshrl.u32 %v860, 7
    %v862 = vsub.s32 %v859, %v861
    %v863 = vrot.slane %v849, %v862
    %v864 = vcombine.high %v840, 0.0
    %v865 = vcombine.high %v847, 0.0
    %v866 = vcombine.high %v856, 0.0
    %v867 = vcombine.high %v863, 0.0
    %873 = vrot.lane.b32.xlu0 %v385, 16
    %v874 = vpop.permute.xlu0 %873
    %875 = vrot.lane.b32.xlu0 %v521, 16
    %v876 = vpop.permute.xlu0 %875
    %877 = vrot.lane.b32.xlu0 %v657, 16
    %v878 = vpop.permute.xlu0 %877
    %879 = vrot.lane.b32.xlu0 %v793, 16
    %v880 = vpop.permute.xlu0 %879
    %881 = vrot.lane.b32.xlu0 %v864, 16
    %v882 = vpop.permute.xlu0 %881
    %893 = vrot.lane.b32.xlu0 %v386, 32
    %v894 = vpop.permute.xlu0 %893
    %895 = vrot.lane.b32.xlu0 %v522, 32
    %v896 = vpop.permute.xlu0 %895
    %897 = vrot.lane.b32.xlu0 %v658, 32
    %v898 = vpop.permute.xlu0 %897
    %899 = vrot.lane.b32.xlu0 %v794, 32
    %v900 = vpop.permute.xlu0 %899
    %901 = vrot.lane.b32.xlu0 %v847, 32
    %v902 = vpop.permute.xlu0 %901
    %913 = vrot.lane.b32.xlu0 %v387, 48
    %v914 = vpop.permute.xlu0 %913
    %915 = vrot.lane.b32.xlu0 %v523, 48
    %v916 = vpop.permute.xlu0 %915
    %917 = vrot.lane.b32.xlu0 %v659, 48
    %v918 = vpop.permute.xlu0 %917
    %919 = vrot.lane.b32.xlu0 %v795, 48
    %v920 = vpop.permute.xlu0 %919
    %921 = vrot.lane.b32.xlu0 %v865, 48
    %v922 = vpop.permute.xlu0 %921
    %933 = vrot.lane.b32.xlu0 %v388, 64
    %v934 = vpop.permute.xlu0 %933
    %935 = vrot.lane.b32.xlu0 %v524, 64
    %v936 = vpop.permute.xlu0 %935
    %937 = vrot.lane.b32.xlu0 %v660, 64
    %v938 = vpop.permute.xlu0 %937
    %939 = vrot.lane.b32.xlu0 %v796, 64
    %v940 = vpop.permute.xlu0 %939
    %941 = vrot.lane.b32.xlu0 %v856, 64
    %v942 = vpop.permute.xlu0 %941
    %953 = vrot.lane.b32.xlu0 %v389, 80
    %v954 = vpop.permute.xlu0 %953
    %955 = vrot.lane.b32.xlu0 %v525, 80
    %v956 = vpop.permute.xlu0 %955
    %957 = vrot.lane.b32.xlu0 %v661, 80
    %v958 = vpop.permute.xlu0 %957
    %959 = vrot.lane.b32.xlu0 %v797, 80
    %v960 = vpop.permute.xlu0 %959
    %961 = vrot.lane.b32.xlu0 %v866, 80
    %v962 = vpop.permute.xlu0 %961
    %973 = vrot.lane.b32.xlu0 %v390, 96
    %v974 = vpop.permute.xlu0 %973
    %975 = vrot.lane.b32.xlu0 %v526, 96
    %v976 = vpop.permute.xlu0 %975
    %977 = vrot.lane.b32.xlu0 %v662, 96
    %v978 = vpop.permute.xlu0 %977
    %979 = vrot.lane.b32.xlu0 %v798, 96
    %v980 = vpop.permute.xlu0 %979
    %981 = vrot.lane.b32.xlu0 %v863, 96
    %v982 = vpop.permute.xlu0 %981
    %993 = vrot.lane.b32.xlu0 %v391, 112
    %v994 = vpop.permute.xlu0 %993
    %995 = vrot.lane.b32.xlu0 %v527, 112
    %v996 = vpop.permute.xlu0 %995
    %997 = vrot.lane.b32.xlu0 %v663, 112
    %v998 = vpop.permute.xlu0 %997
    %999 = vrot.lane.b32.xlu0 %v799, 112
    %v1000 = vpop.permute.xlu0 %999
    %1001 = vrot.lane.b32.xlu0 %v867, 112
    %v1002 = vpop.permute.xlu0 %1001
    %vm1008 = vcmask 130048
    %v1009 = vsel %vm1008, %v384, %v874
    %v1010 = vsel %vm1008, %v520, %v876
    %v1011 = vsel %vm1008, %v656, %v878
    %v1012 = vsel %vm1008, %v792, %v880
    %v1013 = vsel %vm1008, %v840, %v882
    %vm1014 = vcmask 261120
    %v1015 = vsel %vm1014, %v1009, %v894
    %v1016 = vsel %vm1014, %v1010, %v896
    %v1017 = vsel %vm1014, %v1011, %v898
    %v1018 = vsel %vm1014, %v1012, %v900
    %v1019 = vsel %vm1014, %v1013, %v902
    %vm1020 = vcmask 392192
    %v1021 = vsel %vm1020, %v1015, %v914
    %v1022 = vsel %vm1020, %v1016, %v916
    %v1023 = vsel %vm1020, %v1017, %v918
    %v1024 = vsel %vm1020, %v1018, %v920
    %v1025 = vsel %vm1020, %v1019, %v922
    %vm1026 = vcmask 523264
    %v1027 = vsel %vm1026, %v1021, %v934
    %v1028 = vsel %vm1026, %v1022, %v936
    %v1029 = vsel %vm1026, %v1023, %v938
    %v1030 = vsel %vm1026, %v1024, %v940
    %v1031 = vsel %vm1026, %v1025, %v942
    %vm1032 = vcmask 654336
    %v1033 = vsel %vm1032, %v1027, %v954
    %v1034 = vsel %vm1032, %v1028, %v956
    %v1035 = vsel %vm1032, %v1029, %v958
    %v1036 = vsel %vm1032, %v1030, %v960
    %v1037 = vsel %vm1032, %v1031, %v962
    %vm1038 = vcmask 785408
    %v1039 = vsel %vm1038, %v1033, %v974
    %v1040 = vsel %vm1038, %v1034, %v976
    %v1041 = vsel %vm1038, %v1035, %v978
    %v1042 = vsel %vm1038, %v1036, %v980
    %v1043 = vsel %vm1038, %v1037, %v982
    %vm1044 = vcmask 916480
    %v1045 = vsel %vm1044, %v1039, %v994
    %v1046 = vsel %vm1044, %v1040, %v996
    %v1047 = vsel %vm1044, %v1041, %v998
    %v1048 = vsel %vm1044, %v1042, %v1000
    %v1049 = vsel %vm1044, %v1043, %v1002
    %v1050 = vld [vmem:[%s105] sm:$0xff]
    %v1051 = vld [vmem:[%s105 + $0x10] sm:$0xff]
    %v1052 = vld [vmem:[%s105 + $0x20] sm:$0xff]
    %v1053 = vld [vmem:[%s105 + $0x30] sm:$0xff]
    %v1054 = vld [vmem:[%s105 + $0x1] sm:$0xff]
    %v1055 = vld [vmem:[%s105 + $0x11] sm:$0xff]
    %v1056 = vld [vmem:[%s105 + $0x21] sm:$0xff]
    %v1057 = vld [vmem:[%s105 + $0x31] sm:$0xff]
    %v1058 = vld [vmem:[%s105 + $0x2] sm:$0xff]
    %v1059 = vld [vmem:[%s105 + $0x12] sm:$0xff]
    %v1060 = vld [vmem:[%s105 + $0x22] sm:$0xff]
    %v1061 = vld [vmem:[%s105 + $0x32] sm:$0xff]
    %1066 = vrot.lane.b32.xlu0 %v1050, 127
    %v1067 = vpop.permute.xlu0 %1066
    %1068 = vrot.lane.b32.xlu0 %v1051, 127
    %v1069 = vpop.permute.xlu0 %1068
    %1070 = vrot.lane.b32.xlu0 %v1052, 127
    %v1071 = vpop.permute.xlu0 %1070
    %1072 = vrot.lane.b32.xlu0 %v1053, 127
    %v1073 = vpop.permute.xlu0 %1072
    %1078 = vrot.lane.b32.xlu0 %v1050, 126
    %v1079 = vpop.permute.xlu0 %1078
    %1080 = vrot.lane.b32.xlu0 %v1051, 126
    %v1081 = vpop.permute.xlu0 %1080
    %1082 = vrot.lane.b32.xlu0 %v1052, 126
    %v1083 = vpop.permute.xlu0 %1082
    %1084 = vrot.lane.b32.xlu0 %v1053, 126
    %v1085 = vpop.permute.xlu0 %1084
    %1094 = vrot.lane.b32.xlu0 %v1054, 127
    %v1095 = vpop.permute.xlu0 %1094
    %1096 = vrot.lane.b32.xlu0 %v1055, 127
    %v1097 = vpop.permute.xlu0 %1096
    %1098 = vrot.lane.b32.xlu0 %v1056, 127
    %v1099 = vpop.permute.xlu0 %1098
    %1100 = vrot.lane.b32.xlu0 %v1057, 127
    %v1101 = vpop.permute.xlu0 %1100
    %1106 = vrot.lane.b32.xlu0 %v1054, 126
    %v1107 = vpop.permute.xlu0 %1106
    %1108 = vrot.lane.b32.xlu0 %v1055, 126
    %v1109 = vpop.permute.xlu0 %1108
    %1110 = vrot.lane.b32.xlu0 %v1056, 126
    %v1111 = vpop.permute.xlu0 %1110
    %1112 = vrot.lane.b32.xlu0 %v1057, 126
    %v1113 = vpop.permute.xlu0 %1112
    %1122 = vrot.lane.b32.xlu0 %v1058, 127
    %v1123 = vpop.permute.xlu0 %1122
    %1124 = vrot.lane.b32.xlu0 %v1059, 127
    %v1125 = vpop.permute.xlu0 %1124
    %1126 = vrot.lane.b32.xlu0 %v1060, 127
    %v1127 = vpop.permute.xlu0 %1126
    %1128 = vrot.lane.b32.xlu0 %v1061, 127
    %v1129 = vpop.permute.xlu0 %1128
    %1134 = vrot.lane.b32.xlu0 %v1058, 126
    %v1135 = vpop.permute.xlu0 %1134
    %1136 = vrot.lane.b32.xlu0 %v1059, 126
    %v1137 = vpop.permute.xlu0 %1136
    %1138 = vrot.lane.b32.xlu0 %v1060, 126
    %v1139 = vpop.permute.xlu0 %1138
    %1140 = vrot.lane.b32.xlu0 %v1061, 126
    %v1141 = vpop.permute.xlu0 %1140
    %v1146 = vcombine.low %v1050, %v1052
    %v1147 = vcombine.high %v1050, %v1052
    %v1149 = vunpack.c.l.s4 1983009808
    %v1150 = vunpack.c.0.s8 %v1149
    %v1151 = vlaneseq
    %v1152 = vshrl.u32 %v1151, 7
    %v1153 = vsub.s32 %v1150, %v1152
    %v1154 = vrot.slane %v1146, %v1153
    %v1156 = vunpack.c.l.s4 1983009808
    %v1157 = vunpack.c.0.s8 %v1156
    %v1158 = vlaneseq
    %v1159 = vshrl.u32 %v1158, 7
    %v1160 = vsub.s32 %v1157, %v1159
    %v1161 = vrot.slane %v1147, %v1160
    %v1162 = vcombine.low %v1051, %v1053
    %v1163 = vcombine.high %v1051, %v1053
    %v1165 = vunpack.c.l.s4 1983009808
    %v1166 = vunpack.c.0.s8 %v1165
    %v1167 = vlaneseq
    %v1168 = vshrl.u32 %v1167, 7
    %v1169 = vsub.s32 %v1166, %v1168
    %v1170 = vrot.slane %v1162, %v1169
    %v1172 = vunpack.c.l.s4 1983009808
    %v1173 = vunpack.c.0.s8 %v1172
    %v1174 = vlaneseq
    %v1175 = vshrl.u32 %v1174, 7
    %v1176 = vsub.s32 %v1173, %v1175
    %v1177 = vrot.slane %v1163, %v1176
    %v1178 = vcombine.low %v1067, %v1071
    %v1179 = vcombine.high %v1067, %v1071
    %v1181 = vunpack.c.l.s4 1983009808
    %v1182 = vunpack.c.0.s8 %v1181
    %v1183 = vlaneseq
    %v1184 = vshrl.u32 %v1183, 7
    %v1185 = vsub.s32 %v1182, %v1184
    %v1186 = vrot.slane %v1178, %v1185
    %v1188 = vunpack.c.l.s4 1983009808
    %v1189 = vunpack.c.0.s8 %v1188
    %v1190 = vlaneseq
    %v1191 = vshrl.u32 %v1190, 7
    %v1192 = vsub.s32 %v1189, %v1191
    %v1193 = vrot.slane %v1179, %v1192
    %v1194 = vcombine.low %v1069, %v1073
    %v1195 = vcombine.high %v1069, %v1073
    %v1197 = vunpack.c.l.s4 1983009808
    %v1198 = vunpack.c.0.s8 %v1197
    %v1199 = vlaneseq
    %v1200 = vshrl.u32 %v1199, 7
    %v1201 = vsub.s32 %v1198, %v1200
    %v1202 = vrot.slane %v1194, %v1201
    %v1204 = vunpack.c.l.s4 1983009808
    %v1205 = vunpack.c.0.s8 %v1204
    %v1206 = vlaneseq
    %v1207 = vshrl.u32 %v1206, 7
    %v1208 = vsub.s32 %v1205, %v1207
    %v1209 = vrot.slane %v1195, %v1208
    %v1210 = vcombine.low %v1154, %v1170
    %v1211 = vcombine.high %v1154, %v1170
    %v1213 = vunpack.c.l.s4 1934713408
    %v1214 = vunpack.c.0.s8 %v1213
    %v1215 = vlaneseq
    %v1216 = vshrl.u32 %v1215, 7
    %v1217 = vsub.s32 %v1214, %v1216
    %v1218 = vrot.slane %v1210, %v1217
    %v1220 = vunpack.c.l.s4 1934713408
    %v1221 = vunpack.c.0.s8 %v1220
    %v1222 = vlaneseq
    %v1223 = vshrl.u32 %v1222, 7
    %v1224 = vsub.s32 %v1221, %v1223
    %v1225 = vrot.slane %v1211, %v1224
    %v1226 = vcombine.low %v1161, %v1177
    %v1227 = vcombine.high %v1161, %v1177
    %v1229 = vunpack.c.l.s4 1934713408
    %v1230 = vunpack.c.0.s8 %v1229
    %v1231 = vlaneseq
    %v1232 = vshrl.u32 %v1231, 7
    %v1233 = vsub.s32 %v1230, %v1232
    %v1234 = vrot.slane %v1226, %v1233
    %v1236 = vunpack.c.l.s4 1934713408
    %v1237 = vunpack.c.0.s8 %v1236
    %v1238 = vlaneseq
    %v1239 = vshrl.u32 %v1238, 7
    %v1240 = vsub.s32 %v1237, %v1239
    %v1241 = vrot.slane %v1227, %v1240
    %v1242 = vcombine.low %v1186, %v1202
    %v1243 = vcombine.high %v1186, %v1202
    %v1245 = vunpack.c.l.s4 1934713408
    %v1246 = vunpack.c.0.s8 %v1245
    %v1247 = vlaneseq
    %v1248 = vshrl.u32 %v1247, 7
    %v1249 = vsub.s32 %v1246, %v1248
    %v1250 = vrot.slane %v1242, %v1249
    %v1252 = vunpack.c.l.s4 1934713408
    %v1253 = vunpack.c.0.s8 %v1252
    %v1254 = vlaneseq
    %v1255 = vshrl.u32 %v1254, 7
    %v1256 = vsub.s32 %v1253, %v1255
    %v1257 = vrot.slane %v1243, %v1256
    %v1258 = vcombine.low %v1193, %v1209
    %v1259 = vcombine.high %v1193, %v1209
    %v1261 = vunpack.c.l.s4 1934713408
    %v1262 = vunpack.c.0.s8 %v1261
    %v1263 = vlaneseq
    %v1264 = vshrl.u32 %v1263, 7
    %v1265 = vsub.s32 %v1262, %v1264
    %v1266 = vrot.slane %v1258, %v1265
    %v1268 = vunpack.c.l.s4 1934713408
    %v1269 = vunpack.c.0.s8 %v1268
    %v1270 = vlaneseq
    %v1271 = vshrl.u32 %v1270, 7
    %v1272 = vsub.s32 %v1269, %v1271
    %v1273 = vrot.slane %v1259, %v1272
    %v1274 = vcombine.low %v1218, %v1250
    %v1275 = vcombine.high %v1218, %v1250
    %v1276 = vcombine.low %v1225, %v1257
    %v1277 = vcombine.high %v1225, %v1257
    %v1278 = vcombine.low %v1234, %v1266
    %v1279 = vcombine.high %v1234, %v1266
    %v1280 = vcombine.low %v1241, %v1273
    %v1281 = vcombine.high %v1241, %v1273
    %v1282 = vcombine.low %v1079, %v1083
    %v1283 = vcombine.high %v1079, %v1083
    %v1285 = vunpack.c.l.s4 1983009808
    %v1286 = vunpack.c.0.s8 %v1285
    %v1287 = vlaneseq
    %v1288 = vshrl.u32 %v1287, 7
    %v1289 = vsub.s32 %v1286, %v1288
    %v1290 = vrot.slane %v1282, %v1289
    %v1292 = vunpack.c.l.s4 1983009808
    %v1293 = vunpack.c.0.s8 %v1292
    %v1294 = vlaneseq
    %v1295 = vshrl.u32 %v1294, 7
    %v1296 = vsub.s32 %v1293, %v1295
    %v1297 = vrot.slane %v1283, %v1296
    %v1298 = vcombine.low %v1081, %v1085
    %v1299 = vcombine.high %v1081, %v1085
    %v1301 = vunpack.c.l.s4 1983009808
    %v1302 = vunpack.c.0.s8 %v1301
    %v1303 = vlaneseq
    %v1304 = vshrl.u32 %v1303, 7
    %v1305 = vsub.s32 %v1302, %v1304
    %v1306 = vrot.slane %v1298, %v1305
    %v1308 = vunpack.c.l.s4 1983009808
    %v1309 = vunpack.c.0.s8 %v1308
    %v1310 = vlaneseq
    %v1311 = vshrl.u32 %v1310, 7
    %v1312 = vsub.s32 %v1309, %v1311
    %v1313 = vrot.slane %v1299, %v1312
    %v1314 = vcombine.low %v1054, %v1056
    %v1315 = vcombine.high %v1054, %v1056
    %v1317 = vunpack.c.l.s4 1983009808
    %v1318 = vunpack.c.0.s8 %v1317
    %v1319 = vlaneseq
    %v1320 = vshrl.u32 %v1319, 7
    %v1321 = vsub.s32 %v1318, %v1320
    %v1322 = vrot.slane %v1314, %v1321
    %v1324 = vunpack.c.l.s4 1983009808
    %v1325 = vunpack.c.0.s8 %v1324
    %v1326 = vlaneseq
    %v1327 = vshrl.u32 %v1326, 7
    %v1328 = vsub.s32 %v1325, %v1327
    %v1329 = vrot.slane %v1315, %v1328
    %v1330 = vcombine.low %v1055, %v1057
    %v1331 = vcombine.high %v1055, %v1057
    %v1333 = vunpack.c.l.s4 1983009808
    %v1334 = vunpack.c.0.s8 %v1333
    %v1335 = vlaneseq
    %v1336 = vshrl.u32 %v1335, 7
    %v1337 = vsub.s32 %v1334, %v1336
    %v1338 = vrot.slane %v1330, %v1337
    %v1340 = vunpack.c.l.s4 1983009808
    %v1341 = vunpack.c.0.s8 %v1340
    %v1342 = vlaneseq
    %v1343 = vshrl.u32 %v1342, 7
    %v1344 = vsub.s32 %v1341, %v1343
    %v1345 = vrot.slane %v1331, %v1344
    %v1346 = vcombine.low %v1290, %v1306
    %v1347 = vcombine.high %v1290, %v1306
    %v1349 = vunpack.c.l.s4 1934713408
    %v1350 = vunpack.c.0.s8 %v1349
    %v1351 = vlaneseq
    %v1352 = vshrl.u32 %v1351, 7
    %v1353 = vsub.s32 %v1350, %v1352
    %v1354 = vrot.slane %v1346, %v1353
    %v1356 = vunpack.c.l.s4 1934713408
    %v1357 = vunpack.c.0.s8 %v1356
    %v1358 = vlaneseq
    %v1359 = vshrl.u32 %v1358, 7
    %v1360 = vsub.s32 %v1357, %v1359
    %v1361 = vrot.slane %v1347, %v1360
    %v1362 = vcombine.low %v1297, %v1313
    %v1363 = vcombine.high %v1297, %v1313
    %v1365 = vunpack.c.l.s4 1934713408
    %v1366 = vunpack.c.0.s8 %v1365
    %v1367 = vlaneseq
    %v1368 = vshrl.u32 %v1367, 7
    %v1369 = vsub.s32 %v1366, %v1368
    %v1370 = vrot.slane %v1362, %v1369
    %v1372 = vunpack.c.l.s4 1934713408
    %v1373 = vunpack.c.0.s8 %v1372
    %v1374 = vlaneseq
    %v1375 = vshrl.u32 %v1374, 7
    %v1376 = vsub.s32 %v1373, %v1375
    %v1377 = vrot.slane %v1363, %v1376
    %v1378 = vcombine.low %v1322, %v1338
    %v1379 = vcombine.high %v1322, %v1338
    %v1381 = vunpack.c.l.s4 1934713408
    %v1382 = vunpack.c.0.s8 %v1381
    %v1383 = vlaneseq
    %v1384 = vshrl.u32 %v1383, 7
    %v1385 = vsub.s32 %v1382, %v1384
    %v1386 = vrot.slane %v1378, %v1385
    %v1388 = vunpack.c.l.s4 1934713408
    %v1389 = vunpack.c.0.s8 %v1388
    %v1390 = vlaneseq
    %v1391 = vshrl.u32 %v1390, 7
    %v1392 = vsub.s32 %v1389, %v1391
    %v1393 = vrot.slane %v1379, %v1392
    %v1394 = vcombine.low %v1329, %v1345
    %v1395 = vcombine.high %v1329, %v1345
    %v1397 = vunpack.c.l.s4 1934713408
    %v1398 = vunpack.c.0.s8 %v1397
    %v1399 = vlaneseq
    %v1400 = vshrl.u32 %v1399, 7
    %v1401 = vsub.s32 %v1398, %v1400
    %v1402 = vrot.slane %v1394, %v1401
    %v1404 = vunpack.c.l.s4 1934713408
    %v1405 = vunpack.c.0.s8 %v1404
    %v1406 = vlaneseq
    %v1407 = vshrl.u32 %v1406, 7
    %v1408 = vsub.s32 %v1405, %v1407
    %v1409 = vrot.slane %v1395, %v1408
    %v1410 = vcombine.low %v1354, %v1386
    %v1411 = vcombine.high %v1354, %v1386
    %v1412 = vcombine.low %v1361, %v1393
    %v1413 = vcombine.high %v1361, %v1393
    %v1414 = vcombine.low %v1370, %v1402
    %v1415 = vcombine.high %v1370, %v1402
    %v1416 = vcombine.low %v1377, %v1409
    %v1417 = vcombine.high %v1377, %v1409
    %v1418 = vcombine.low %v1095, %v1099
    %v1419 = vcombine.high %v1095, %v1099
    %v1421 = vunpack.c.l.s4 1983009808
    %v1422 = vunpack.c.0.s8 %v1421
    %v1423 = vlaneseq
    %v1424 = vshrl.u32 %v1423, 7
    %v1425 = vsub.s32 %v1422, %v1424
    %v1426 = vrot.slane %v1418, %v1425
    %v1428 = vunpack.c.l.s4 1983009808
    %v1429 = vunpack.c.0.s8 %v1428
    %v1430 = vlaneseq
    %v1431 = vshrl.u32 %v1430, 7
    %v1432 = vsub.s32 %v1429, %v1431
    %v1433 = vrot.slane %v1419, %v1432
    %v1434 = vcombine.low %v1097, %v1101
    %v1435 = vcombine.high %v1097, %v1101
    %v1437 = vunpack.c.l.s4 1983009808
    %v1438 = vunpack.c.0.s8 %v1437
    %v1439 = vlaneseq
    %v1440 = vshrl.u32 %v1439, 7
    %v1441 = vsub.s32 %v1438, %v1440
    %v1442 = vrot.slane %v1434, %v1441
    %v1444 = vunpack.c.l.s4 1983009808
    %v1445 = vunpack.c.0.s8 %v1444
    %v1446 = vlaneseq
    %v1447 = vshrl.u32 %v1446, 7
    %v1448 = vsub.s32 %v1445, %v1447
    %v1449 = vrot.slane %v1435, %v1448
    %v1450 = vcombine.low %v1107, %v1111
    %v1451 = vcombine.high %v1107, %v1111
    %v1453 = vunpack.c.l.s4 1983009808
    %v1454 = vunpack.c.0.s8 %v1453
    %v1455 = vlaneseq
    %v1456 = vshrl.u32 %v1455, 7
    %v1457 = vsub.s32 %v1454, %v1456
    %v1458 = vrot.slane %v1450, %v1457
    %v1460 = vunpack.c.l.s4 1983009808
    %v1461 = vunpack.c.0.s8 %v1460
    %v1462 = vlaneseq
    %v1463 = vshrl.u32 %v1462, 7
    %v1464 = vsub.s32 %v1461, %v1463
    %v1465 = vrot.slane %v1451, %v1464
    %v1466 = vcombine.low %v1109, %v1113
    %v1467 = vcombine.high %v1109, %v1113
    %v1469 = vunpack.c.l.s4 1983009808
    %v1470 = vunpack.c.0.s8 %v1469
    %v1471 = vlaneseq
    %v1472 = vshrl.u32 %v1471, 7
    %v1473 = vsub.s32 %v1470, %v1472
    %v1474 = vrot.slane %v1466, %v1473
    %v1476 = vunpack.c.l.s4 1983009808
    %v1477 = vunpack.c.0.s8 %v1476
    %v1478 = vlaneseq
    %v1479 = vshrl.u32 %v1478, 7
    %v1480 = vsub.s32 %v1477, %v1479
    %v1481 = vrot.slane %v1467, %v1480
    %v1482 = vcombine.low %v1426, %v1442
    %v1483 = vcombine.high %v1426, %v1442
    %v1485 = vunpack.c.l.s4 1934713408
    %v1486 = vunpack.c.0.s8 %v1485
    %v1487 = vlaneseq
    %v1488 = vshrl.u32 %v1487, 7
    %v1489 = vsub.s32 %v1486, %v1488
    %v1490 = vrot.slane %v1482, %v1489
    %v1492 = vunpack.c.l.s4 1934713408
    %v1493 = vunpack.c.0.s8 %v1492
    %v1494 = vlaneseq
    %v1495 = vshrl.u32 %v1494, 7
    %v1496 = vsub.s32 %v1493, %v1495
    %v1497 = vrot.slane %v1483, %v1496
    %v1498 = vcombine.low %v1433, %v1449
    %v1499 = vcombine.high %v1433, %v1449
    %v1501 = vunpack.c.l.s4 1934713408
    %v1502 = vunpack.c.0.s8 %v1501
    %v1503 = vlaneseq
    %v1504 = vshrl.u32 %v1503, 7
    %v1505 = vsub.s32 %v1502, %v1504
    %v1506 = vrot.slane %v1498, %v1505
    %v1508 = vunpack.c.l.s4 1934713408
    %v1509 = vunpack.c.0.s8 %v1508
    %v1510 = vlaneseq
    %v1511 = vshrl.u32 %v1510, 7
    %v1512 = vsub.s32 %v1509, %v1511
    %v1513 = vrot.slane %v1499, %v1512
    %v1514 = vcombine.low %v1458, %v1474
    %v1515 = vcombine.high %v1458, %v1474
    %v1517 = vunpack.c.l.s4 1934713408
    %v1518 = vunpack.c.0.s8 %v1517
    %v1519 = vlaneseq
    %v1520 = vshrl.u32 %v1519, 7
    %v1521 = vsub.s32 %v1518, %v1520
    %v1522 = vrot.slane %v1514, %v1521
    %v1524 = vunpack.c.l.s4 1934713408
    %v1525 = vunpack.c.0.s8 %v1524
    %v1526 = vlaneseq
    %v1527 = vshrl.u32 %v1526, 7
    %v1528 = vsub.s32 %v1525, %v1527
    %v1529 = vrot.slane %v1515, %v1528
    %v1530 = vcombine.low %v1465, %v1481
    %v1531 = vcombine.high %v1465, %v1481
    %v1533 = vunpack.c.l.s4 1934713408
    %v1534 = vunpack.c.0.s8 %v1533
    %v1535 = vlaneseq
    %v1536 = vshrl.u32 %v1535, 7
    %v1537 = vsub.s32 %v1534, %v1536
    %v1538 = vrot.slane %v1530, %v1537
    %v1540 = vunpack.c.l.s4 1934713408
    %v1541 = vunpack.c.0.s8 %v1540
    %v1542 = vlaneseq
    %v1543 = vshrl.u32 %v1542, 7
    %v1544 = vsub.s32 %v1541, %v1543
    %v1545 = vrot.slane %v1531, %v1544
    %v1546 = vcombine.low %v1490, %v1522
    %v1547 = vcombine.high %v1490, %v1522
    %v1548 = vcombine.low %v1497, %v1529
    %v1549 = vcombine.high %v1497, %v1529
    %v1550 = vcombine.low %v1506, %v1538
    %v1551 = vcombine.high %v1506, %v1538
    %v1552 = vcombine.low %v1513, %v1545
    %v1553 = vcombine.high %v1513, %v1545
    %v1554 = vcombine.low %v1058, %v1060
    %v1555 = vcombine.high %v1058, %v1060
    %v1557 = vunpack.c.l.s4 1983009808
    %v1558 = vunpack.c.0.s8 %v1557
    %v1559 = vlaneseq
    %v1560 = vshrl.u32 %v1559, 7
    %v1561 = vsub.s32 %v1558, %v1560
    %v1562 = vrot.slane %v1554, %v1561
    %v1564 = vunpack.c.l.s4 1983009808
    %v1565 = vunpack.c.0.s8 %v1564
    %v1566 = vlaneseq
    %v1567 = vshrl.u32 %v1566, 7
    %v1568 = vsub.s32 %v1565, %v1567
    %v1569 = vrot.slane %v1555, %v1568
    %v1570 = vcombine.low %v1059, %v1061
    %v1571 = vcombine.high %v1059, %v1061
    %v1573 = vunpack.c.l.s4 1983009808
    %v1574 = vunpack.c.0.s8 %v1573
    %v1575 = vlaneseq
    %v1576 = vshrl.u32 %v1575, 7
    %v1577 = vsub.s32 %v1574, %v1576
    %v1578 = vrot.slane %v1570, %v1577
    %v1580 = vunpack.c.l.s4 1983009808
    %v1581 = vunpack.c.0.s8 %v1580
    %v1582 = vlaneseq
    %v1583 = vshrl.u32 %v1582, 7
    %v1584 = vsub.s32 %v1581, %v1583
    %v1585 = vrot.slane %v1571, %v1584
    %v1586 = vcombine.low %v1123, %v1127
    %v1587 = vcombine.high %v1123, %v1127
    %v1589 = vunpack.c.l.s4 1983009808
    %v1590 = vunpack.c.0.s8 %v1589
    %v1591 = vlaneseq
    %v1592 = vshrl.u32 %v1591, 7
    %v1593 = vsub.s32 %v1590, %v1592
    %v1594 = vrot.slane %v1586, %v1593
    %v1596 = vunpack.c.l.s4 1983009808
    %v1597 = vunpack.c.0.s8 %v1596
    %v1598 = vlaneseq
    %v1599 = vshrl.u32 %v1598, 7
    %v1600 = vsub.s32 %v1597, %v1599
    %v1601 = vrot.slane %v1587, %v1600
    %v1602 = vcombine.low %v1125, %v1129
    %v1603 = vcombine.high %v1125, %v1129
    %v1605 = vunpack.c.l.s4 1983009808
    %v1606 = vunpack.c.0.s8 %v1605
    %v1607 = vlaneseq
    %v1608 = vshrl.u32 %v1607, 7
    %v1609 = vsub.s32 %v1606, %v1608
    %v1610 = vrot.slane %v1602, %v1609
    %v1612 = vunpack.c.l.s4 1983009808
    %v1613 = vunpack.c.0.s8 %v1612
    %v1614 = vlaneseq
    %v1615 = vshrl.u32 %v1614, 7
    %v1616 = vsub.s32 %v1613, %v1615
    %v1617 = vrot.slane %v1603, %v1616
    %v1618 = vcombine.low %v1562, %v1578
    %v1619 = vcombine.high %v1562, %v1578
    %v1621 = vunpack.c.l.s4 1934713408
    %v1622 = vunpack.c.0.s8 %v1621
    %v1623 = vlaneseq
    %v1624 = vshrl.u32 %v1623, 7
    %v1625 = vsub.s32 %v1622, %v1624
    %v1626 = vrot.slane %v1618, %v1625
    %v1628 = vunpack.c.l.s4 1934713408
    %v1629 = vunpack.c.0.s8 %v1628
    %v1630 = vlaneseq
    %v1631 = vshrl.u32 %v1630, 7
    %v1632 = vsub.s32 %v1629, %v1631
    %v1633 = vrot.slane %v1619, %v1632
    %v1634 = vcombine.low %v1569, %v1585
    %v1635 = vcombine.high %v1569, %v1585
    %v1637 = vunpack.c.l.s4 1934713408
    %v1638 = vunpack.c.0.s8 %v1637
    %v1639 = vlaneseq
    %v1640 = vshrl.u32 %v1639, 7
    %v1641 = vsub.s32 %v1638, %v1640
    %v1642 = vrot.slane %v1634, %v1641
    %v1644 = vunpack.c.l.s4 1934713408
    %v1645 = vunpack.c.0.s8 %v1644
    %v1646 = vlaneseq
    %v1647 = vshrl.u32 %v1646, 7
    %v1648 = vsub.s32 %v1645, %v1647
    %v1649 = vrot.slane %v1635, %v1648
    %v1650 = vcombine.low %v1594, %v1610
    %v1651 = vcombine.high %v1594, %v1610
    %v1653 = vunpack.c.l.s4 1934713408
    %v1654 = vunpack.c.0.s8 %v1653
    %v1655 = vlaneseq
    %v1656 = vshrl.u32 %v1655, 7
    %v1657 = vsub.s32 %v1654, %v1656
    %v1658 = vrot.slane %v1650, %v1657
    %v1660 = vunpack.c.l.s4 1934713408
    %v1661 = vunpack.c.0.s8 %v1660
    %v1662 = vlaneseq
    %v1663 = vshrl.u32 %v1662, 7
    %v1664 = vsub.s32 %v1661, %v1663
    %v1665 = vrot.slane %v1651, %v1664
    %v1666 = vcombine.low %v1601, %v1617
    %v1667 = vcombine.high %v1601, %v1617
    %v1669 = vunpack.c.l.s4 1934713408
    %v1670 = vunpack.c.0.s8 %v1669
    %v1671 = vlaneseq
    %v1672 = vshrl.u32 %v1671, 7
    %v1673 = vsub.s32 %v1670, %v1672
    %v1674 = vrot.slane %v1666, %v1673
    %v1676 = vunpack.c.l.s4 1934713408
    %v1677 = vunpack.c.0.s8 %v1676
    %v1678 = vlaneseq
    %v1679 = vshrl.u32 %v1678, 7
    %v1680 = vsub.s32 %v1677, %v1679
    %v1681 = vrot.slane %v1667, %v1680
    %v1682 = vcombine.low %v1626, %v1658
    %v1683 = vcombine.high %v1626, %v1658
    %v1684 = vcombine.low %v1633, %v1665
    %v1685 = vcombine.high %v1633, %v1665
    %v1686 = vcombine.low %v1642, %v1674
    %v1687 = vcombine.high %v1642, %v1674
    %v1688 = vcombine.low %v1649, %v1681
    %v1689 = vcombine.high %v1649, %v1681
    %v1690 = vcombine.low %v1135, %v1139
    %v1691 = vcombine.high %v1135, %v1139
    %v1693 = vunpack.c.l.s4 1983009808
    %v1694 = vunpack.c.0.s8 %v1693
    %v1695 = vlaneseq
    %v1696 = vshrl.u32 %v1695, 7
    %v1697 = vsub.s32 %v1694, %v1696
    %v1698 = vrot.slane %v1690, %v1697
    %v1700 = vunpack.c.l.s4 1983009808
    %v1701 = vunpack.c.0.s8 %v1700
    %v1702 = vlaneseq
    %v1703 = vshrl.u32 %v1702, 7
    %v1704 = vsub.s32 %v1701, %v1703
    %v1705 = vrot.slane %v1691, %v1704
    %v1706 = vcombine.low %v1137, %v1141
    %v1707 = vcombine.high %v1137, %v1141
    %v1709 = vunpack.c.l.s4 1983009808
    %v1710 = vunpack.c.0.s8 %v1709
    %v1711 = vlaneseq
    %v1712 = vshrl.u32 %v1711, 7
    %v1713 = vsub.s32 %v1710, %v1712
    %v1714 = vrot.slane %v1706, %v1713
    %v1716 = vunpack.c.l.s4 1983009808
    %v1717 = vunpack.c.0.s8 %v1716
    %v1718 = vlaneseq
    %v1719 = vshrl.u32 %v1718, 7
    %v1720 = vsub.s32 %v1717, %v1719
    %v1721 = vrot.slane %v1707, %v1720
    %v1722 = vcombine.low %v1698, %v1714
    %v1723 = vcombine.high %v1698, %v1714
    %v1725 = vunpack.c.l.s4 1934713408
    %v1726 = vunpack.c.0.s8 %v1725
    %v1727 = vlaneseq
    %v1728 = vshrl.u32 %v1727, 7
    %v1729 = vsub.s32 %v1726, %v1728
    %v1730 = vrot.slane %v1722, %v1729
    %v1732 = vunpack.c.l.s4 1934713408
    %v1733 = vunpack.c.0.s8 %v1732
    %v1734 = vlaneseq
    %v1735 = vshrl.u32 %v1734, 7
    %v1736 = vsub.s32 %v1733, %v1735
    %v1737 = vrot.slane %v1723, %v1736
    %v1738 = vcombine.low %v1705, %v1721
    %v1739 = vcombine.high %v1705, %v1721
    %v1741 = vunpack.c.l.s4 1934713408
    %v1742 = vunpack.c.0.s8 %v1741
    %v1743 = vlaneseq
    %v1744 = vshrl.u32 %v1743, 7
    %v1745 = vsub.s32 %v1742, %v1744
    %v1746 = vrot.slane %v1738, %v1745
    %v1748 = vunpack.c.l.s4 1934713408
    %v1749 = vunpack.c.0.s8 %v1748
    %v1750 = vlaneseq
    %v1751 = vshrl.u32 %v1750, 7
    %v1752 = vsub.s32 %v1749, %v1751
    %v1753 = vrot.slane %v1739, %v1752
    %v1754 = vcombine.high %v1730, 0.0
    %v1755 = vcombine.high %v1737, 0.0
    %v1756 = vcombine.high %v1746, 0.0
    %v1757 = vcombine.high %v1753, 0.0
    %1763 = vrot.lane.b32.xlu0 %v1275, 16
    %v1764 = vpop.permute.xlu0 %1763
    %1765 = vrot.lane.b32.xlu0 %v1411, 16
    %v1766 = vpop.permute.xlu0 %1765
    %1767 = vrot.lane.b32.xlu0 %v1547, 16
    %v1768 = vpop.permute.xlu0 %1767
    %1769 = vrot.lane.b32.xlu0 %v1683, 16
    %v1770 = vpop.permute.xlu0 %1769
    %1771 = vrot.lane.b32.xlu0 %v1754, 16
    %v1772 = vpop.permute.xlu0 %1771
    %1783 = vrot.lane.b32.xlu0 %v1276, 32
    %v1784 = vpop.permute.xlu0 %1783
    %1785 = vrot.lane.b32.xlu0 %v1412, 32
    %v1786 = vpop.permute.xlu0 %1785
    %1787 = vrot.lane.b32.xlu0 %v1548, 32
    %v1788 = vpop.permute.xlu0 %1787
    %1789 = vrot.lane.b32.xlu0 %v1684, 32
    %v1790 = vpop.permute.xlu0 %1789
    %1791 = vrot.lane.b32.xlu0 %v1737, 32
    %v1792 = vpop.permute.xlu0 %1791
    %1803 = vrot.lane.b32.xlu0 %v1277, 48
    %v1804 = vpop.permute.xlu0 %1803
    %1805 = vrot.lane.b32.xlu0 %v1413, 48
    %v1806 = vpop.permute.xlu0 %1805
    %1807 = vrot.lane.b32.xlu0 %v1549, 48
    %v1808 = vpop.permute.xlu0 %1807
    %1809 = vrot.lane.b32.xlu0 %v1685, 48
    %v1810 = vpop.permute.xlu0 %1809
    %1811 = vrot.lane.b32.xlu0 %v1755, 48
    %v1812 = vpop.permute.xlu0 %1811
    %1823 = vrot.lane.b32.xlu0 %v1278, 64
    %v1824 = vpop.permute.xlu0 %1823
    %1825 = vrot.lane.b32.xlu0 %v1414, 64
    %v1826 = vpop.permute.xlu0 %1825
    %1827 = vrot.lane.b32.xlu0 %v1550, 64
    %v1828 = vpop.permute.xlu0 %1827
    %1829 = vrot.lane.b32.xlu0 %v1686, 64
    %v1830 = vpop.permute.xlu0 %1829
    %1831 = vrot.lane.b32.xlu0 %v1746, 64
    %v1832 = vpop.permute.xlu0 %1831
    %1843 = vrot.lane.b32.xlu0 %v1279, 80
    %v1844 = vpop.permute.xlu0 %1843
    %1845 = vrot.lane.b32.xlu0 %v1415, 80
    %v1846 = vpop.permute.xlu0 %1845
    %1847 = vrot.lane.b32.xlu0 %v1551, 80
    %v1848 = vpop.permute.xlu0 %1847
    %1849 = vrot.lane.b32.xlu0 %v1687, 80
    %v1850 = vpop.permute.xlu0 %1849
    %1851 = vrot.lane.b32.xlu0 %v1756, 80
    %v1852 = vpop.permute.xlu0 %1851
    %1863 = vrot.lane.b32.xlu0 %v1280, 96
    %v1864 = vpop.permute.xlu0 %1863
    %1865 = vrot.lane.b32.xlu0 %v1416, 96
    %v1866 = vpop.permute.xlu0 %1865
    %1867 = vrot.lane.b32.xlu0 %v1552, 96
    %v1868 = vpop.permute.xlu0 %1867
    %1869 = vrot.lane.b32.xlu0 %v1688, 96
    %v1870 = vpop.permute.xlu0 %1869
    %1871 = vrot.lane.b32.xlu0 %v1753, 96
    %v1872 = vpop.permute.xlu0 %1871
    %1883 = vrot.lane.b32.xlu0 %v1281, 112
    %v1884 = vpop.permute.xlu0 %1883
    %1885 = vrot.lane.b32.xlu0 %v1417, 112
    %v1886 = vpop.permute.xlu0 %1885
    %1887 = vrot.lane.b32.xlu0 %v1553, 112
    %v1888 = vpop.permute.xlu0 %1887
    %1889 = vrot.lane.b32.xlu0 %v1689, 112
    %v1890 = vpop.permute.xlu0 %1889
    %1891 = vrot.lane.b32.xlu0 %v1757, 112
    %v1892 = vpop.permute.xlu0 %1891
    %v1898 = vsel %vm1008, %v1274, %v1764
    %v1899 = vsel %vm1008, %v1410, %v1766
    %v1900 = vsel %vm1008, %v1546, %v1768
    %v1901 = vsel %vm1008, %v1682, %v1770
    %v1902 = vsel %vm1008, %v1730, %v1772
    %v1903 = vsel %vm1014, %v1898, %v1784
    %v1904 = vsel %vm1014, %v1899, %v1786
    %v1905 = vsel %vm1014, %v1900, %v1788
    %v1906 = vsel %vm1014, %v1901, %v1790
    %v1907 = vsel %vm1014, %v1902, %v1792
    %v1908 = vsel %vm1020, %v1903, %v1804
    %v1909 = vsel %vm1020, %v1904, %v1806
    %v1910 = vsel %vm1020, %v1905, %v1808
    %v1911 = vsel %vm1020, %v1906, %v1810
    %v1912 = vsel %vm1020, %v1907, %v1812
    %v1913 = vsel %vm1026, %v1908, %v1824
    %v1914 = vsel %vm1026, %v1909, %v1826
    %v1915 = vsel %vm1026, %v1910, %v1828
    %v1916 = vsel %vm1026, %v1911, %v1830
    %v1917 = vsel %vm1026, %v1912, %v1832
    %v1918 = vsel %vm1032, %v1913, %v1844
    %v1919 = vsel %vm1032, %v1914, %v1846
    %v1920 = vsel %vm1032, %v1915, %v1848
    %v1921 = vsel %vm1032, %v1916, %v1850
    %v1922 = vsel %vm1032, %v1917, %v1852
    %v1923 = vsel %vm1038, %v1918, %v1864
    %v1924 = vsel %vm1038, %v1919, %v1866
    %v1925 = vsel %vm1038, %v1920, %v1868
    %v1926 = vsel %vm1038, %v1921, %v1870
    %v1927 = vsel %vm1038, %v1922, %v1872
    %v1928 = vsel %vm1044, %v1923, %v1884
    %v1929 = vsel %vm1044, %v1924, %v1886
    %v1930 = vsel %vm1044, %v1925, %v1888
    %v1931 = vsel %vm1044, %v1926, %v1890
    %v1932 = vsel %vm1044, %v1927, %v1892
    %v1933 = vld [vmem:[%s130] sm:$0xff]
    %v1934 = vld [vmem:[%s130 + $0x10] sm:$0xff]
    %v1935 = vld [vmem:[%s130 + $0x20] sm:$0xff]
    %v1936 = vld [vmem:[%s130 + $0x30] sm:$0xff]
    %v1937 = vld [vmem:[%s130 + $0x1] sm:$0xff]
    %v1938 = vld [vmem:[%s130 + $0x11] sm:$0xff]
    %v1939 = vld [vmem:[%s130 + $0x21] sm:$0xff]
    %v1940 = vld [vmem:[%s130 + $0x31] sm:$0xff]
    %v1941 = vld [vmem:[%s130 + $0x2] sm:$0xff]
    %v1942 = vld [vmem:[%s130 + $0x12] sm:$0xff]
    %v1943 = vld [vmem:[%s130 + $0x22] sm:$0xff]
    %v1944 = vld [vmem:[%s130 + $0x32] sm:$0xff]
    %1949 = vrot.lane.b32.xlu0 %v1933, 127
    %v1950 = vpop.permute.xlu0 %1949
    %1951 = vrot.lane.b32.xlu0 %v1934, 127
    %v1952 = vpop.permute.xlu0 %1951
    %1953 = vrot.lane.b32.xlu0 %v1935, 127
    %v1954 = vpop.permute.xlu0 %1953
    %1955 = vrot.lane.b32.xlu0 %v1936, 127
    %v1956 = vpop.permute.xlu0 %1955
    %1961 = vrot.lane.b32.xlu0 %v1933, 126
    %v1962 = vpop.permute.xlu0 %1961
    %1963 = vrot.lane.b32.xlu0 %v1934, 126
    %v1964 = vpop.permute.xlu0 %1963
    %1965 = vrot.lane.b32.xlu0 %v1935, 126
    %v1966 = vpop.permute.xlu0 %1965
    %1967 = vrot.lane.b32.xlu0 %v1936, 126
    %v1968 = vpop.permute.xlu0 %1967
    %1977 = vrot.lane.b32.xlu0 %v1937, 127
    %v1978 = vpop.permute.xlu0 %1977
    %1979 = vrot.lane.b32.xlu0 %v1938, 127
    %v1980 = vpop.permute.xlu0 %1979
    %1981 = vrot.lane.b32.xlu0 %v1939, 127
    %v1982 = vpop.permute.xlu0 %1981
    %1983 = vrot.lane.b32.xlu0 %v1940, 127
    %v1984 = vpop.permute.xlu0 %1983
    %1989 = vrot.lane.b32.xlu0 %v1937, 126
    %v1990 = vpop.permute.xlu0 %1989
    %1991 = vrot.lane.b32.xlu0 %v1938, 126
    %v1992 = vpop.permute.xlu0 %1991
    %1993 = vrot.lane.b32.xlu0 %v1939, 126
    %v1994 = vpop.permute.xlu0 %1993
    %1995 = vrot.lane.b32.xlu0 %v1940, 126
    %v1996 = vpop.permute.xlu0 %1995
    %2005 = vrot.lane.b32.xlu0 %v1941, 127
    %v2006 = vpop.permute.xlu0 %2005
    %2007 = vrot.lane.b32.xlu0 %v1942, 127
    %v2008 = vpop.permute.xlu0 %2007
    %2009 = vrot.lane.b32.xlu0 %v1943, 127
    %v2010 = vpop.permute.xlu0 %2009
    %2011 = vrot.lane.b32.xlu0 %v1944, 127
    %v2012 = vpop.permute.xlu0 %2011
    %2017 = vrot.lane.b32.xlu0 %v1941, 126
    %v2018 = vpop.permute.xlu0 %2017
    %2019 = vrot.lane.b32.xlu0 %v1942, 126
    %v2020 = vpop.permute.xlu0 %2019
    %2021 = vrot.lane.b32.xlu0 %v1943, 126
    %v2022 = vpop.permute.xlu0 %2021
    %2023 = vrot.lane.b32.xlu0 %v1944, 126
    %v2024 = vpop.permute.xlu0 %2023
    %v2029 = vcombine.low %v1933, %v1935
    %v2030 = vcombine.high %v1933, %v1935
    %v2032 = vunpack.c.l.s4 1983009808
    %v2033 = vunpack.c.0.s8 %v2032
    %v2034 = vlaneseq
    %v2035 = vshrl.u32 %v2034, 7
    %v2036 = vsub.s32 %v2033, %v2035
    %v2037 = vrot.slane %v2029, %v2036
    %v2039 = vunpack.c.l.s4 1983009808
    %v2040 = vunpack.c.0.s8 %v2039
    %v2041 = vlaneseq
    %v2042 = vshrl.u32 %v2041, 7
    %v2043 = vsub.s32 %v2040, %v2042
    %v2044 = vrot.slane %v2030, %v2043
    %v2045 = vcombine.low %v1934, %v1936
    %v2046 = vcombine.high %v1934, %v1936
    %v2048 = vunpack.c.l.s4 1983009808
    %v2049 = vunpack.c.0.s8 %v2048
    %v2050 = vlaneseq
    %v2051 = vshrl.u32 %v2050, 7
    %v2052 = vsub.s32 %v2049, %v2051
    %v2053 = vrot.slane %v2045, %v2052
    %v2055 = vunpack.c.l.s4 1983009808
    %v2056 = vunpack.c.0.s8 %v2055
    %v2057 = vlaneseq
    %v2058 = vshrl.u32 %v2057, 7
    %v2059 = vsub.s32 %v2056, %v2058
    %v2060 = vrot.slane %v2046, %v2059
    %v2061 = vcombine.low %v1950, %v1954
    %v2062 = vcombine.high %v1950, %v1954
    %v2064 = vunpack.c.l.s4 1983009808
    %v2065 = vunpack.c.0.s8 %v2064
    %v2066 = vlaneseq
    %v2067 = vshrl.u32 %v2066, 7
    %v2068 = vsub.s32 %v2065, %v2067
    %v2069 = vrot.slane %v2061, %v2068
    %v2071 = vunpack.c.l.s4 1983009808
    %v2072 = vunpack.c.0.s8 %v2071
    %v2073 = vlaneseq
    %v2074 = vshrl.u32 %v2073, 7
    %v2075 = vsub.s32 %v2072, %v2074
    %v2076 = vrot.slane %v2062, %v2075
    %v2077 = vcombine.low %v1952, %v1956
    %v2078 = vcombine.high %v1952, %v1956
    %v2080 = vunpack.c.l.s4 1983009808
    %v2081 = vunpack.c.0.s8 %v2080
    %v2082 = vlaneseq
    %v2083 = vshrl.u32 %v2082, 7
    %v2084 = vsub.s32 %v2081, %v2083
    %v2085 = vrot.slane %v2077, %v2084
    %v2087 = vunpack.c.l.s4 1983009808
    %v2088 = vunpack.c.0.s8 %v2087
    %v2089 = vlaneseq
    %v2090 = vshrl.u32 %v2089, 7
    %v2091 = vsub.s32 %v2088, %v2090
    %v2092 = vrot.slane %v2078, %v2091
    %v2093 = vcombine.low %v2037, %v2053
    %v2094 = vcombine.high %v2037, %v2053
    %v2096 = vunpack.c.l.s4 1934713408
    %v2097 = vunpack.c.0.s8 %v2096
    %v2098 = vlaneseq
    %v2099 = vshrl.u32 %v2098, 7
    %v2100 = vsub.s32 %v2097, %v2099
    %v2101 = vrot.slane %v2093, %v2100
    %v2103 = vunpack.c.l.s4 1934713408
    %v2104 = vunpack.c.0.s8 %v2103
    %v2105 = vlaneseq
    %v2106 = vshrl.u32 %v2105, 7
    %v2107 = vsub.s32 %v2104, %v2106
    %v2108 = vrot.slane %v2094, %v2107
    %v2109 = vcombine.low %v2044, %v2060
    %v2110 = vcombine.high %v2044, %v2060
    %v2112 = vunpack.c.l.s4 1934713408
    %v2113 = vunpack.c.0.s8 %v2112
    %v2114 = vlaneseq
    %v2115 = vshrl.u32 %v2114, 7
    %v2116 = vsub.s32 %v2113, %v2115
    %v2117 = vrot.slane %v2109, %v2116
    %v2119 = vunpack.c.l.s4 1934713408
    %v2120 = vunpack.c.0.s8 %v2119
    %v2121 = vlaneseq
    %v2122 = vshrl.u32 %v2121, 7
    %v2123 = vsub.s32 %v2120, %v2122
    %v2124 = vrot.slane %v2110, %v2123
    %v2125 = vcombine.low %v2069, %v2085
    %v2126 = vcombine.high %v2069, %v2085
    %v2128 = vunpack.c.l.s4 1934713408
    %v2129 = vunpack.c.0.s8 %v2128
    %v2130 = vlaneseq
    %v2131 = vshrl.u32 %v2130, 7
    %v2132 = vsub.s32 %v2129, %v2131
    %v2133 = vrot.slane %v2125, %v2132
    %v2135 = vunpack.c.l.s4 1934713408
    %v2136 = vunpack.c.0.s8 %v2135
    %v2137 = vlaneseq
    %v2138 = vshrl.u32 %v2137, 7
    %v2139 = vsub.s32 %v2136, %v2138
    %v2140 = vrot.slane %v2126, %v2139
    %v2141 = vcombine.low %v2076, %v2092
    %v2142 = vcombine.high %v2076, %v2092
    %v2144 = vunpack.c.l.s4 1934713408
    %v2145 = vunpack.c.0.s8 %v2144
    %v2146 = vlaneseq
    %v2147 = vshrl.u32 %v2146, 7
    %v2148 = vsub.s32 %v2145, %v2147
    %v2149 = vrot.slane %v2141, %v2148
    %v2151 = vunpack.c.l.s4 1934713408
    %v2152 = vunpack.c.0.s8 %v2151
    %v2153 = vlaneseq
    %v2154 = vshrl.u32 %v2153, 7
    %v2155 = vsub.s32 %v2152, %v2154
    %v2156 = vrot.slane %v2142, %v2155
    %v2157 = vcombine.low %v2101, %v2133
    %v2158 = vcombine.high %v2101, %v2133
    %v2159 = vcombine.low %v2108, %v2140
    %v2160 = vcombine.high %v2108, %v2140
    %v2161 = vcombine.low %v2117, %v2149
    %v2162 = vcombine.high %v2117, %v2149
    %v2163 = vcombine.low %v2124, %v2156
    %v2164 = vcombine.high %v2124, %v2156
    %v2165 = vcombine.low %v1962, %v1966
    %v2166 = vcombine.high %v1962, %v1966
    %v2168 = vunpack.c.l.s4 1983009808
    %v2169 = vunpack.c.0.s8 %v2168
    %v2170 = vlaneseq
    %v2171 = vshrl.u32 %v2170, 7
    %v2172 = vsub.s32 %v2169, %v2171
    %v2173 = vrot.slane %v2165, %v2172
    %v2175 = vunpack.c.l.s4 1983009808
    %v2176 = vunpack.c.0.s8 %v2175
    %v2177 = vlaneseq
    %v2178 = vshrl.u32 %v2177, 7
    %v2179 = vsub.s32 %v2176, %v2178
    %v2180 = vrot.slane %v2166, %v2179
    %v2181 = vcombine.low %v1964, %v1968
    %v2182 = vcombine.high %v1964, %v1968
    %v2184 = vunpack.c.l.s4 1983009808
    %v2185 = vunpack.c.0.s8 %v2184
    %v2186 = vlaneseq
    %v2187 = vshrl.u32 %v2186, 7
    %v2188 = vsub.s32 %v2185, %v2187
    %v2189 = vrot.slane %v2181, %v2188
    %v2191 = vunpack.c.l.s4 1983009808
    %v2192 = vunpack.c.0.s8 %v2191
    %v2193 = vlaneseq
    %v2194 = vshrl.u32 %v2193, 7
    %v2195 = vsub.s32 %v2192, %v2194
    %v2196 = vrot.slane %v2182, %v2195
    %v2197 = vcombine.low %v1937, %v1939
    %v2198 = vcombine.high %v1937, %v1939
    %v2200 = vunpack.c.l.s4 1983009808
    %v2201 = vunpack.c.0.s8 %v2200
    %v2202 = vlaneseq
    %v2203 = vshrl.u32 %v2202, 7
    %v2204 = vsub.s32 %v2201, %v2203
    %v2205 = vrot.slane %v2197, %v2204
    %v2207 = vunpack.c.l.s4 1983009808
    %v2208 = vunpack.c.0.s8 %v2207
    %v2209 = vlaneseq
    %v2210 = vshrl.u32 %v2209, 7
    %v2211 = vsub.s32 %v2208, %v2210
    %v2212 = vrot.slane %v2198, %v2211
    %v2213 = vcombine.low %v1938, %v1940
    %v2214 = vcombine.high %v1938, %v1940
    %v2216 = vunpack.c.l.s4 1983009808
    %v2217 = vunpack.c.0.s8 %v2216
    %v2218 = vlaneseq
    %v2219 = vshrl.u32 %v2218, 7
    %v2220 = vsub.s32 %v2217, %v2219
    %v2221 = vrot.slane %v2213, %v2220
    %v2223 = vunpack.c.l.s4 1983009808
    %v2224 = vunpack.c.0.s8 %v2223
    %v2225 = vlaneseq
    %v2226 = vshrl.u32 %v2225, 7
    %v2227 = vsub.s32 %v2224, %v2226
    %v2228 = vrot.slane %v2214, %v2227
    %v2229 = vcombine.low %v2173, %v2189
    %v2230 = vcombine.high %v2173, %v2189
    %v2232 = vunpack.c.l.s4 1934713408
    %v2233 = vunpack.c.0.s8 %v2232
    %v2234 = vlaneseq
    %v2235 = vshrl.u32 %v2234, 7
    %v2236 = vsub.s32 %v2233, %v2235
    %v2237 = vrot.slane %v2229, %v2236
    %v2239 = vunpack.c.l.s4 1934713408
    %v2240 = vunpack.c.0.s8 %v2239
    %v2241 = vlaneseq
    %v2242 = vshrl.u32 %v2241, 7
    %v2243 = vsub.s32 %v2240, %v2242
    %v2244 = vrot.slane %v2230, %v2243
    %v2245 = vcombine.low %v2180, %v2196
    %v2246 = vcombine.high %v2180, %v2196
    %v2248 = vunpack.c.l.s4 1934713408
    %v2249 = vunpack.c.0.s8 %v2248
    %v2250 = vlaneseq
    %v2251 = vshrl.u32 %v2250, 7
    %v2252 = vsub.s32 %v2249, %v2251
    %v2253 = vrot.slane %v2245, %v2252
    %v2255 = vunpack.c.l.s4 1934713408
    %v2256 = vunpack.c.0.s8 %v2255
    %v2257 = vlaneseq
    %v2258 = vshrl.u32 %v2257, 7
    %v2259 = vsub.s32 %v2256, %v2258
    %v2260 = vrot.slane %v2246, %v2259
    %v2261 = vcombine.low %v2205, %v2221
    %v2262 = vcombine.high %v2205, %v2221
    %v2264 = vunpack.c.l.s4 1934713408
    %v2265 = vunpack.c.0.s8 %v2264
    %v2266 = vlaneseq
    %v2267 = vshrl.u32 %v2266, 7
    %v2268 = vsub.s32 %v2265, %v2267
    %v2269 = vrot.slane %v2261, %v2268
    %v2271 = vunpack.c.l.s4 1934713408
    %v2272 = vunpack.c.0.s8 %v2271
    %v2273 = vlaneseq
    %v2274 = vshrl.u32 %v2273, 7
    %v2275 = vsub.s32 %v2272, %v2274
    %v2276 = vrot.slane %v2262, %v2275
    %v2277 = vcombine.low %v2212, %v2228
    %v2278 = vcombine.high %v2212, %v2228
    %v2280 = vunpack.c.l.s4 1934713408
    %v2281 = vunpack.c.0.s8 %v2280
    %v2282 = vlaneseq
    %v2283 = vshrl.u32 %v2282, 7
    %v2284 = vsub.s32 %v2281, %v2283
    %v2285 = vrot.slane %v2277, %v2284
    %v2287 = vunpack.c.l.s4 1934713408
    %v2288 = vunpack.c.0.s8 %v2287
    %v2289 = vlaneseq
    %v2290 = vshrl.u32 %v2289, 7
    %v2291 = vsub.s32 %v2288, %v2290
    %v2292 = vrot.slane %v2278, %v2291
    %v2293 = vcombine.low %v2237, %v2269
    %v2294 = vcombine.high %v2237, %v2269
    %v2295 = vcombine.low %v2244, %v2276
    %v2296 = vcombine.high %v2244, %v2276
    %v2297 = vcombine.low %v2253, %v2285
    %v2298 = vcombine.high %v2253, %v2285
    %v2299 = vcombine.low %v2260, %v2292
    %v2300 = vcombine.high %v2260, %v2292
    %v2301 = vcombine.low %v1978, %v1982
    %v2302 = vcombine.high %v1978, %v1982
    %v2304 = vunpack.c.l.s4 1983009808
    %v2305 = vunpack.c.0.s8 %v2304
    %v2306 = vlaneseq
    %v2307 = vshrl.u32 %v2306, 7
    %v2308 = vsub.s32 %v2305, %v2307
    %v2309 = vrot.slane %v2301, %v2308
    %v2311 = vunpack.c.l.s4 1983009808
    %v2312 = vunpack.c.0.s8 %v2311
    %v2313 = vlaneseq
    %v2314 = vshrl.u32 %v2313, 7
    %v2315 = vsub.s32 %v2312, %v2314
    %v2316 = vrot.slane %v2302, %v2315
    %v2317 = vcombine.low %v1980, %v1984
    %v2318 = vcombine.high %v1980, %v1984
    %v2320 = vunpack.c.l.s4 1983009808
    %v2321 = vunpack.c.0.s8 %v2320
    %v2322 = vlaneseq
    %v2323 = vshrl.u32 %v2322, 7
    %v2324 = vsub.s32 %v2321, %v2323
    %v2325 = vrot.slane %v2317, %v2324
    %v2327 = vunpack.c.l.s4 1983009808
    %v2328 = vunpack.c.0.s8 %v2327
    %v2329 = vlaneseq
    %v2330 = vshrl.u32 %v2329, 7
    %v2331 = vsub.s32 %v2328, %v2330
    %v2332 = vrot.slane %v2318, %v2331
    %v2333 = vcombine.low %v1990, %v1994
    %v2334 = vcombine.high %v1990, %v1994
    %v2336 = vunpack.c.l.s4 1983009808
    %v2337 = vunpack.c.0.s8 %v2336
    %v2338 = vlaneseq
    %v2339 = vshrl.u32 %v2338, 7
    %v2340 = vsub.s32 %v2337, %v2339
    %v2341 = vrot.slane %v2333, %v2340
    %v2343 = vunpack.c.l.s4 1983009808
    %v2344 = vunpack.c.0.s8 %v2343
    %v2345 = vlaneseq
    %v2346 = vshrl.u32 %v2345, 7
    %v2347 = vsub.s32 %v2344, %v2346
    %v2348 = vrot.slane %v2334, %v2347
    %v2349 = vcombine.low %v1992, %v1996
    %v2350 = vcombine.high %v1992, %v1996
    %v2352 = vunpack.c.l.s4 1983009808
    %v2353 = vunpack.c.0.s8 %v2352
    %v2354 = vlaneseq
    %v2355 = vshrl.u32 %v2354, 7
    %v2356 = vsub.s32 %v2353, %v2355
    %v2357 = vrot.slane %v2349, %v2356
    %v2359 = vunpack.c.l.s4 1983009808
    %v2360 = vunpack.c.0.s8 %v2359
    %v2361 = vlaneseq
    %v2362 = vshrl.u32 %v2361, 7
    %v2363 = vsub.s32 %v2360, %v2362
    %v2364 = vrot.slane %v2350, %v2363
    %v2365 = vcombine.low %v2309, %v2325
    %v2366 = vcombine.high %v2309, %v2325
    %v2368 = vunpack.c.l.s4 1934713408
    %v2369 = vunpack.c.0.s8 %v2368
    %v2370 = vlaneseq
    %v2371 = vshrl.u32 %v2370, 7
    %v2372 = vsub.s32 %v2369, %v2371
    %v2373 = vrot.slane %v2365, %v2372
    %v2375 = vunpack.c.l.s4 1934713408
    %v2376 = vunpack.c.0.s8 %v2375
    %v2377 = vlaneseq
    %v2378 = vshrl.u32 %v2377, 7
    %v2379 = vsub.s32 %v2376, %v2378
    %v2380 = vrot.slane %v2366, %v2379
    %v2381 = vcombine.low %v2316, %v2332
    %v2382 = vcombine.high %v2316, %v2332
    %v2384 = vunpack.c.l.s4 1934713408
    %v2385 = vunpack.c.0.s8 %v2384
    %v2386 = vlaneseq
    %v2387 = vshrl.u32 %v2386, 7
    %v2388 = vsub.s32 %v2385, %v2387
    %v2389 = vrot.slane %v2381, %v2388
    %v2391 = vunpack.c.l.s4 1934713408
    %v2392 = vunpack.c.0.s8 %v2391
    %v2393 = vlaneseq
    %v2394 = vshrl.u32 %v2393, 7
    %v2395 = vsub.s32 %v2392, %v2394
    %v2396 = vrot.slane %v2382, %v2395
    %v2397 = vcombine.low %v2341, %v2357
    %v2398 = vcombine.high %v2341, %v2357
    %v2400 = vunpack.c.l.s4 1934713408
    %v2401 = vunpack.c.0.s8 %v2400
    %v2402 = vlaneseq
    %v2403 = vshrl.u32 %v2402, 7
    %v2404 = vsub.s32 %v2401, %v2403
    %v2405 = vrot.slane %v2397, %v2404
    %v2407 = vunpack.c.l.s4 1934713408
    %v2408 = vunpack.c.0.s8 %v2407
    %v2409 = vlaneseq
    %v2410 = vshrl.u32 %v2409, 7
    %v2411 = vsub.s32 %v2408, %v2410
    %v2412 = vrot.slane %v2398, %v2411
    %v2413 = vcombine.low %v2348, %v2364
    %v2414 = vcombine.high %v2348, %v2364
    %v2416 = vunpack.c.l.s4 1934713408
    %v2417 = vunpack.c.0.s8 %v2416
    %v2418 = vlaneseq
    %v2419 = vshrl.u32 %v2418, 7
    %v2420 = vsub.s32 %v2417, %v2419
    %v2421 = vrot.slane %v2413, %v2420
    %v2423 = vunpack.c.l.s4 1934713408
    %v2424 = vunpack.c.0.s8 %v2423
    %v2425 = vlaneseq
    %v2426 = vshrl.u32 %v2425, 7
    %v2427 = vsub.s32 %v2424, %v2426
    %v2428 = vrot.slane %v2414, %v2427
    %v2429 = vcombine.low %v2373, %v2405
    %v2430 = vcombine.high %v2373, %v2405
    %v2431 = vcombine.low %v2380, %v2412
    %v2432 = vcombine.high %v2380, %v2412
    %v2433 = vcombine.low %v2389, %v2421
    %v2434 = vcombine.high %v2389, %v2421
    %v2435 = vcombine.low %v2396, %v2428
    %v2436 = vcombine.high %v2396, %v2428
    %v2437 = vcombine.low %v1941, %v1943
    %v2438 = vcombine.high %v1941, %v1943
    %v2440 = vunpack.c.l.s4 1983009808
    %v2441 = vunpack.c.0.s8 %v2440
    %v2442 = vlaneseq
    %v2443 = vshrl.u32 %v2442, 7
    %v2444 = vsub.s32 %v2441, %v2443
    %v2445 = vrot.slane %v2437, %v2444
    %v2447 = vunpack.c.l.s4 1983009808
    %v2448 = vunpack.c.0.s8 %v2447
    %v2449 = vlaneseq
    %v2450 = vshrl.u32 %v2449, 7
    %v2451 = vsub.s32 %v2448, %v2450
    %v2452 = vrot.slane %v2438, %v2451
    %v2453 = vcombine.low %v1942, %v1944
    %v2454 = vcombine.high %v1942, %v1944
    %v2456 = vunpack.c.l.s4 1983009808
    %v2457 = vunpack.c.0.s8 %v2456
    %v2458 = vlaneseq
    %v2459 = vshrl.u32 %v2458, 7
    %v2460 = vsub.s32 %v2457, %v2459
    %v2461 = vrot.slane %v2453, %v2460
    %v2463 = vunpack.c.l.s4 1983009808
    %v2464 = vunpack.c.0.s8 %v2463
    %v2465 = vlaneseq
    %v2466 = vshrl.u32 %v2465, 7
    %v2467 = vsub.s32 %v2464, %v2466
    %v2468 = vrot.slane %v2454, %v2467
    %v2469 = vcombine.low %v2006, %v2010
    %v2470 = vcombine.high %v2006, %v2010
    %v2472 = vunpack.c.l.s4 1983009808
    %v2473 = vunpack.c.0.s8 %v2472
    %v2474 = vlaneseq
    %v2475 = vshrl.u32 %v2474, 7
    %v2476 = vsub.s32 %v2473, %v2475
    %v2477 = vrot.slane %v2469, %v2476
    %v2479 = vunpack.c.l.s4 1983009808
    %v2480 = vunpack.c.0.s8 %v2479
    %v2481 = vlaneseq
    %v2482 = vshrl.u32 %v2481, 7
    %v2483 = vsub.s32 %v2480, %v2482
    %v2484 = vrot.slane %v2470, %v2483
    %v2485 = vcombine.low %v2008, %v2012
    %v2486 = vcombine.high %v2008, %v2012
    %v2488 = vunpack.c.l.s4 1983009808
    %v2489 = vunpack.c.0.s8 %v2488
    %v2490 = vlaneseq
    %v2491 = vshrl.u32 %v2490, 7
    %v2492 = vsub.s32 %v2489, %v2491
    %v2493 = vrot.slane %v2485, %v2492
    %v2495 = vunpack.c.l.s4 1983009808
    %v2496 = vunpack.c.0.s8 %v2495
    %v2497 = vlaneseq
    %v2498 = vshrl.u32 %v2497, 7
    %v2499 = vsub.s32 %v2496, %v2498
    %v2500 = vrot.slane %v2486, %v2499
    %v2501 = vcombine.low %v2445, %v2461
    %v2502 = vcombine.high %v2445, %v2461
    %v2504 = vunpack.c.l.s4 1934713408
    %v2505 = vunpack.c.0.s8 %v2504
    %v2506 = vlaneseq
    %v2507 = vshrl.u32 %v2506, 7
    %v2508 = vsub.s32 %v2505, %v2507
    %v2509 = vrot.slane %v2501, %v2508
    %v2511 = vunpack.c.l.s4 1934713408
    %v2512 = vunpack.c.0.s8 %v2511
    %v2513 = vlaneseq
    %v2514 = vshrl.u32 %v2513, 7
    %v2515 = vsub.s32 %v2512, %v2514
    %v2516 = vrot.slane %v2502, %v2515
    %v2517 = vcombine.low %v2452, %v2468
    %v2518 = vcombine.high %v2452, %v2468
    %v2520 = vunpack.c.l.s4 1934713408
    %v2521 = vunpack.c.0.s8 %v2520
    %v2522 = vlaneseq
    %v2523 = vshrl.u32 %v2522, 7
    %v2524 = vsub.s32 %v2521, %v2523
    %v2525 = vrot.slane %v2517, %v2524
    %v2527 = vunpack.c.l.s4 1934713408
    %v2528 = vunpack.c.0.s8 %v2527
    %v2529 = vlaneseq
    %v2530 = vshrl.u32 %v2529, 7
    %v2531 = vsub.s32 %v2528, %v2530
    %v2532 = vrot.slane %v2518, %v2531
    %v2533 = vcombine.low %v2477, %v2493
    %v2534 = vcombine.high %v2477, %v2493
    %v2536 = vunpack.c.l.s4 1934713408
    %v2537 = vunpack.c.0.s8 %v2536
    %v2538 = vlaneseq
    %v2539 = vshrl.u32 %v2538, 7
    %v2540 = vsub.s32 %v2537, %v2539
    %v2541 = vrot.slane %v2533, %v2540
    %v2543 = vunpack.c.l.s4 1934713408
    %v2544 = vunpack.c.0.s8 %v2543
    %v2545 = vlaneseq
    %v2546 = vshrl.u32 %v2545, 7
    %v2547 = vsub.s32 %v2544, %v2546
    %v2548 = vrot.slane %v2534, %v2547
    %v2549 = vcombine.low %v2484, %v2500
    %v2550 = vcombine.high %v2484, %v2500
    %v2552 = vunpack.c.l.s4 1934713408
    %v2553 = vunpack.c.0.s8 %v2552
    %v2554 = vlaneseq
    %v2555 = vshrl.u32 %v2554, 7
    %v2556 = vsub.s32 %v2553, %v2555
    %v2557 = vrot.slane %v2549, %v2556
    %v2559 = vunpack.c.l.s4 1934713408
    %v2560 = vunpack.c.0.s8 %v2559
    %v2561 = vlaneseq
    %v2562 = vshrl.u32 %v2561, 7
    %v2563 = vsub.s32 %v2560, %v2562
    %v2564 = vrot.slane %v2550, %v2563
    %v2565 = vcombine.low %v2509, %v2541
    %v2566 = vcombine.high %v2509, %v2541
    %v2567 = vcombine.low %v2516, %v2548
    %v2568 = vcombine.high %v2516, %v2548
    %v2569 = vcombine.low %v2525, %v2557
    %v2570 = vcombine.high %v2525, %v2557
    %v2571 = vcombine.low %v2532, %v2564
    %v2572 = vcombine.high %v2532, %v2564
    %v2573 = vcombine.low %v2018, %v2022
    %v2574 = vcombine.high %v2018, %v2022
    %v2576 = vunpack.c.l.s4 1983009808
    %v2577 = vunpack.c.0.s8 %v2576
    %v2578 = vlaneseq
    %v2579 = vshrl.u32 %v2578, 7
    %v2580 = vsub.s32 %v2577, %v2579
    %v2581 = vrot.slane %v2573, %v2580
    %v2583 = vunpack.c.l.s4 1983009808
    %v2584 = vunpack.c.0.s8 %v2583
    %v2585 = vlaneseq
    %v2586 = vshrl.u32 %v2585, 7
    %v2587 = vsub.s32 %v2584, %v2586
    %v2588 = vrot.slane %v2574, %v2587
    %v2589 = vcombine.low %v2020, %v2024
    %v2590 = vcombine.high %v2020, %v2024
    %v2592 = vunpack.c.l.s4 1983009808
    %v2593 = vunpack.c.0.s8 %v2592
    %v2594 = vlaneseq
    %v2595 = vshrl.u32 %v2594, 7
    %v2596 = vsub.s32 %v2593, %v2595
    %v2597 = vrot.slane %v2589, %v2596
    %v2599 = vunpack.c.l.s4 1983009808
    %v2600 = vunpack.c.0.s8 %v2599
    %v2601 = vlaneseq
    %v2602 = vshrl.u32 %v2601, 7
    %v2603 = vsub.s32 %v2600, %v2602
    %v2604 = vrot.slane %v2590, %v2603
    %v2605 = vcombine.low %v2581, %v2597
    %v2606 = vcombine.high %v2581, %v2597
    %v2608 = vunpack.c.l.s4 1934713408
    %v2609 = vunpack.c.0.s8 %v2608
    %v2610 = vlaneseq
    %v2611 = vshrl.u32 %v2610, 7
    %v2612 = vsub.s32 %v2609, %v2611
    %v2613 = vrot.slane %v2605, %v2612
    %v2615 = vunpack.c.l.s4 1934713408
    %v2616 = vunpack.c.0.s8 %v2615
    %v2617 = vlaneseq
    %v2618 = vshrl.u32 %v2617, 7
    %v2619 = vsub.s32 %v2616, %v2618
    %v2620 = vrot.slane %v2606, %v2619
    %v2621 = vcombine.low %v2588, %v2604
    %v2622 = vcombine.high %v2588, %v2604
    %v2624 = vunpack.c.l.s4 1934713408
    %v2625 = vunpack.c.0.s8 %v2624
    %v2626 = vlaneseq
    %v2627 = vshrl.u32 %v2626, 7
    %v2628 = vsub.s32 %v2625, %v2627
    %v2629 = vrot.slane %v2621, %v2628
    %v2631 = vunpack.c.l.s4 1934713408
    %v2632 = vunpack.c.0.s8 %v2631
    %v2633 = vlaneseq
    %v2634 = vshrl.u32 %v2633, 7
    %v2635 = vsub.s32 %v2632, %v2634
    %v2636 = vrot.slane %v2622, %v2635
    %v2637 = vcombine.high %v2613, 0.0
    %v2638 = vcombine.high %v2620, 0.0
    %v2639 = vcombine.high %v2629, 0.0
    %v2640 = vcombine.high %v2636, 0.0
    %2646 = vrot.lane.b32.xlu0 %v2158, 16
    %v2647 = vpop.permute.xlu0 %2646
    %2648 = vrot.lane.b32.xlu0 %v2294, 16
    %v2649 = vpop.permute.xlu0 %2648
    %2650 = vrot.lane.b32.xlu0 %v2430, 16
    %v2651 = vpop.permute.xlu0 %2650
    %2652 = vrot.lane.b32.xlu0 %v2566, 16
    %v2653 = vpop.permute.xlu0 %2652
    %2654 = vrot.lane.b32.xlu0 %v2637, 16
    %v2655 = vpop.permute.xlu0 %2654
    %2666 = vrot.lane.b32.xlu0 %v2159, 32
    %v2667 = vpop.permute.xlu0 %2666
    %2668 = vrot.lane.b32.xlu0 %v2295, 32
    %v2669 = vpop.permute.xlu0 %2668
    %2670 = vrot.lane.b32.xlu0 %v2431, 32
    %v2671 = vpop.permute.xlu0 %2670
    %2672 = vrot.lane.b32.xlu0 %v2567, 32
    %v2673 = vpop.permute.xlu0 %2672
    %2674 = vrot.lane.b32.xlu0 %v2620, 32
    %v2675 = vpop.permute.xlu0 %2674
    %2686 = vrot.lane.b32.xlu0 %v2160, 48
    %v2687 = vpop.permute.xlu0 %2686
    %2688 = vrot.lane.b32.xlu0 %v2296, 48
    %v2689 = vpop.permute.xlu0 %2688
    %2690 = vrot.lane.b32.xlu0 %v2432, 48
    %v2691 = vpop.permute.xlu0 %2690
    %2692 = vrot.lane.b32.xlu0 %v2568, 48
    %v2693 = vpop.permute.xlu0 %2692
    %2694 = vrot.lane.b32.xlu0 %v2638, 48
    %v2695 = vpop.permute.xlu0 %2694
    %2706 = vrot.lane.b32.xlu0 %v2161, 64
    %v2707 = vpop.permute.xlu0 %2706
    %2708 = vrot.lane.b32.xlu0 %v2297, 64
    %v2709 = vpop.permute.xlu0 %2708
    %2710 = vrot.lane.b32.xlu0 %v2433, 64
    %v2711 = vpop.permute.xlu0 %2710
    %2712 = vrot.lane.b32.xlu0 %v2569, 64
    %v2713 = vpop.permute.xlu0 %2712
    %2714 = vrot.lane.b32.xlu0 %v2629, 64
    %v2715 = vpop.permute.xlu0 %2714
    %2726 = vrot.lane.b32.xlu0 %v2162, 80
    %v2727 = vpop.permute.xlu0 %2726
    %2728 = vrot.lane.b32.xlu0 %v2298, 80
    %v2729 = vpop.permute.xlu0 %2728
    %2730 = vrot.lane.b32.xlu0 %v2434, 80
    %v2731 = vpop.permute.xlu0 %2730
    %2732 = vrot.lane.b32.xlu0 %v2570, 80
    %v2733 = vpop.permute.xlu0 %2732
    %2734 = vrot.lane.b32.xlu0 %v2639, 80
    %v2735 = vpop.permute.xlu0 %2734
    %2746 = vrot.lane.b32.xlu0 %v2163, 96
    %v2747 = vpop.permute.xlu0 %2746
    %2748 = vrot.lane.b32.xlu0 %v2299, 96
    %v2749 = vpop.permute.xlu0 %2748
    %2750 = vrot.lane.b32.xlu0 %v2435, 96
    %v2751 = vpop.permute.xlu0 %2750
    %2752 = vrot.lane.b32.xlu0 %v2571, 96
    %v2753 = vpop.permute.xlu0 %2752
    %2754 = vrot.lane.b32.xlu0 %v2636, 96
    %v2755 = vpop.permute.xlu0 %2754
    %2766 = vrot.lane.b32.xlu0 %v2164, 112
    %v2767 = vpop.permute.xlu0 %2766
    %2768 = vrot.lane.b32.xlu0 %v2300, 112
    %v2769 = vpop.permute.xlu0 %2768
    %2770 = vrot.lane.b32.xlu0 %v2436, 112
    %v2771 = vpop.permute.xlu0 %2770
    %2772 = vrot.lane.b32.xlu0 %v2572, 112
    %v2773 = vpop.permute.xlu0 %2772
    %2774 = vrot.lane.b32.xlu0 %v2640, 112
    %v2775 = vpop.permute.xlu0 %2774
    %v2781 = vsel %vm1008, %v2157, %v2647
    %v2782 = vsel %vm1008, %v2293, %v2649
    %v2783 = vsel %vm1008, %v2429, %v2651
    %v2784 = vsel %vm1008, %v2565, %v2653
    %v2785 = vsel %vm1008, %v2613, %v2655
    %v2786 = vsel %vm1014, %v2781, %v2667
    %v2787 = vsel %vm1014, %v2782, %v2669
    %v2788 = vsel %vm1014, %v2783, %v2671
    %v2789 = vsel %vm1014, %v2784, %v2673
    %v2790 = vsel %vm1014, %v2785, %v2675
    %v2791 = vsel %vm1020, %v2786, %v2687
    %v2792 = vsel %vm1020, %v2787, %v2689
    %v2793 = vsel %vm1020, %v2788, %v2691
    %v2794 = vsel %vm1020, %v2789, %v2693
    %v2795 = vsel %vm1020, %v2790, %v2695
    %v2796 = vsel %vm1026, %v2791, %v2707
    %v2797 = vsel %vm1026, %v2792, %v2709
    %v2798 = vsel %vm1026, %v2793, %v2711
    %v2799 = vsel %vm1026, %v2794, %v2713
    %v2800 = vsel %vm1026, %v2795, %v2715
    %v2801 = vsel %vm1032, %v2796, %v2727
    %v2802 = vsel %vm1032, %v2797, %v2729
    %v2803 = vsel %vm1032, %v2798, %v2731
    %v2804 = vsel %vm1032, %v2799, %v2733
    %v2805 = vsel %vm1032, %v2800, %v2735
    %v2806 = vsel %vm1038, %v2801, %v2747
    %v2807 = vsel %vm1038, %v2802, %v2749
    %v2808 = vsel %vm1038, %v2803, %v2751
    %v2809 = vsel %vm1038, %v2804, %v2753
    %v2810 = vsel %vm1038, %v2805, %v2755
    %v2811 = vsel %vm1044, %v2806, %v2767
    %v2812 = vsel %vm1044, %v2807, %v2769
    %v2813 = vsel %vm1044, %v2808, %v2771
    %v2814 = vsel %vm1044, %v2809, %v2773
    %v2815 = vsel %vm1044, %v2810, %v2775
    %v2816 = vld [vmem:[%s155] sm:$0xff]
    %v2817 = vld [vmem:[%s155 + $0x10] sm:$0xff]
    %v2818 = vld [vmem:[%s155 + $0x20] sm:$0xff]
    %v2819 = vld [vmem:[%s155 + $0x30] sm:$0xff]
    %v2820 = vld [vmem:[%s155 + $0x1] sm:$0xff]
    %v2821 = vld [vmem:[%s155 + $0x11] sm:$0xff]
    %v2822 = vld [vmem:[%s155 + $0x21] sm:$0xff]
    %v2823 = vld [vmem:[%s155 + $0x31] sm:$0xff]
    %v2824 = vld [vmem:[%s155 + $0x2] sm:$0xff]
    %v2825 = vld [vmem:[%s155 + $0x12] sm:$0xff]
    %v2826 = vld [vmem:[%s155 + $0x22] sm:$0xff]
    %v2827 = vld [vmem:[%s155 + $0x32] sm:$0xff]
    %2832 = vrot.lane.b32.xlu0 %v2816, 127
    %v2833 = vpop.permute.xlu0 %2832
    %2834 = vrot.lane.b32.xlu0 %v2817, 127
    %v2835 = vpop.permute.xlu0 %2834
    %2836 = vrot.lane.b32.xlu0 %v2818, 127
    %v2837 = vpop.permute.xlu0 %2836
    %2838 = vrot.lane.b32.xlu0 %v2819, 127
    %v2839 = vpop.permute.xlu0 %2838
    %2844 = vrot.lane.b32.xlu0 %v2816, 126
    %v2845 = vpop.permute.xlu0 %2844
    %2846 = vrot.lane.b32.xlu0 %v2817, 126
    %v2847 = vpop.permute.xlu0 %2846
    %2848 = vrot.lane.b32.xlu0 %v2818, 126
    %v2849 = vpop.permute.xlu0 %2848
    %2850 = vrot.lane.b32.xlu0 %v2819, 126
    %v2851 = vpop.permute.xlu0 %2850
    %2860 = vrot.lane.b32.xlu0 %v2820, 127
    %v2861 = vpop.permute.xlu0 %2860
    %2862 = vrot.lane.b32.xlu0 %v2821, 127
    %v2863 = vpop.permute.xlu0 %2862
    %2864 = vrot.lane.b32.xlu0 %v2822, 127
    %v2865 = vpop.permute.xlu0 %2864
    %2866 = vrot.lane.b32.xlu0 %v2823, 127
    %v2867 = vpop.permute.xlu0 %2866
    %2872 = vrot.lane.b32.xlu0 %v2820, 126
    %v2873 = vpop.permute.xlu0 %2872
    %2874 = vrot.lane.b32.xlu0 %v2821, 126
    %v2875 = vpop.permute.xlu0 %2874
    %2876 = vrot.lane.b32.xlu0 %v2822, 126
    %v2877 = vpop.permute.xlu0 %2876
    %2878 = vrot.lane.b32.xlu0 %v2823, 126
    %v2879 = vpop.permute.xlu0 %2878
    %2888 = vrot.lane.b32.xlu0 %v2824, 127
    %v2889 = vpop.permute.xlu0 %2888
    %2890 = vrot.lane.b32.xlu0 %v2825, 127
    %v2891 = vpop.permute.xlu0 %2890
    %2892 = vrot.lane.b32.xlu0 %v2826, 127
    %v2893 = vpop.permute.xlu0 %2892
    %2894 = vrot.lane.b32.xlu0 %v2827, 127
    %v2895 = vpop.permute.xlu0 %2894
    %2900 = vrot.lane.b32.xlu0 %v2824, 126
    %v2901 = vpop.permute.xlu0 %2900
    %2902 = vrot.lane.b32.xlu0 %v2825, 126
    %v2903 = vpop.permute.xlu0 %2902
    %2904 = vrot.lane.b32.xlu0 %v2826, 126
    %v2905 = vpop.permute.xlu0 %2904
    %2906 = vrot.lane.b32.xlu0 %v2827, 126
    %v2907 = vpop.permute.xlu0 %2906
    %v2912 = vcombine.low %v2816, %v2818
    %v2913 = vcombine.high %v2816, %v2818
    %v2915 = vunpack.c.l.s4 1983009808
    %v2916 = vunpack.c.0.s8 %v2915
    %v2917 = vlaneseq
    %v2918 = vshrl.u32 %v2917, 7
    %v2919 = vsub.s32 %v2916, %v2918
    %v2920 = vrot.slane %v2912, %v2919
    %v2922 = vunpack.c.l.s4 1983009808
    %v2923 = vunpack.c.0.s8 %v2922
    %v2924 = vlaneseq
    %v2925 = vshrl.u32 %v2924, 7
    %v2926 = vsub.s32 %v2923, %v2925
    %v2927 = vrot.slane %v2913, %v2926
    %v2928 = vcombine.low %v2817, %v2819
    %v2929 = vcombine.high %v2817, %v2819
    %v2931 = vunpack.c.l.s4 1983009808
    %v2932 = vunpack.c.0.s8 %v2931
    %v2933 = vlaneseq
    %v2934 = vshrl.u32 %v2933, 7
    %v2935 = vsub.s32 %v2932, %v2934
    %v2936 = vrot.slane %v2928, %v2935
    %v2938 = vunpack.c.l.s4 1983009808
    %v2939 = vunpack.c.0.s8 %v2938
    %v2940 = vlaneseq
    %v2941 = vshrl.u32 %v2940, 7
    %v2942 = vsub.s32 %v2939, %v2941
    %v2943 = vrot.slane %v2929, %v2942
    %v2944 = vcombine.low %v2833, %v2837
    %v2945 = vcombine.high %v2833, %v2837
    %v2947 = vunpack.c.l.s4 1983009808
    %v2948 = vunpack.c.0.s8 %v2947
    %v2949 = vlaneseq
    %v2950 = vshrl.u32 %v2949, 7
    %v2951 = vsub.s32 %v2948, %v2950
    %v2952 = vrot.slane %v2944, %v2951
    %v2954 = vunpack.c.l.s4 1983009808
    %v2955 = vunpack.c.0.s8 %v2954
    %v2956 = vlaneseq
    %v2957 = vshrl.u32 %v2956, 7
    %v2958 = vsub.s32 %v2955, %v2957
    %v2959 = vrot.slane %v2945, %v2958
    %v2960 = vcombine.low %v2835, %v2839
    %v2961 = vcombine.high %v2835, %v2839
    %v2963 = vunpack.c.l.s4 1983009808
    %v2964 = vunpack.c.0.s8 %v2963
    %v2965 = vlaneseq
    %v2966 = vshrl.u32 %v2965, 7
    %v2967 = vsub.s32 %v2964, %v2966
    %v2968 = vrot.slane %v2960, %v2967
    %v2970 = vunpack.c.l.s4 1983009808
    %v2971 = vunpack.c.0.s8 %v2970
    %v2972 = vlaneseq
    %v2973 = vshrl.u32 %v2972, 7
    %v2974 = vsub.s32 %v2971, %v2973
    %v2975 = vrot.slane %v2961, %v2974
    %v2976 = vcombine.low %v2920, %v2936
    %v2977 = vcombine.high %v2920, %v2936
    %v2979 = vunpack.c.l.s4 1934713408
    %v2980 = vunpack.c.0.s8 %v2979
    %v2981 = vlaneseq
    %v2982 = vshrl.u32 %v2981, 7
    %v2983 = vsub.s32 %v2980, %v2982
    %v2984 = vrot.slane %v2976, %v2983
    %v2986 = vunpack.c.l.s4 1934713408
    %v2987 = vunpack.c.0.s8 %v2986
    %v2988 = vlaneseq
    %v2989 = vshrl.u32 %v2988, 7
    %v2990 = vsub.s32 %v2987, %v2989
    %v2991 = vrot.slane %v2977, %v2990
    %v2992 = vcombine.low %v2927, %v2943
    %v2993 = vcombine.high %v2927, %v2943
    %v2995 = vunpack.c.l.s4 1934713408
    %v2996 = vunpack.c.0.s8 %v2995
    %v2997 = vlaneseq
    %v2998 = vshrl.u32 %v2997, 7
    %v2999 = vsub.s32 %v2996, %v2998
    %v3000 = vrot.slane %v2992, %v2999
    %v3002 = vunpack.c.l.s4 1934713408
    %v3003 = vunpack.c.0.s8 %v3002
    %v3004 = vlaneseq
    %v3005 = vshrl.u32 %v3004, 7
    %v3006 = vsub.s32 %v3003, %v3005
    %v3007 = vrot.slane %v2993, %v3006
    %v3008 = vcombine.low %v2952, %v2968
    %v3009 = vcombine.high %v2952, %v2968
    %v3011 = vunpack.c.l.s4 1934713408
    %v3012 = vunpack.c.0.s8 %v3011
    %v3013 = vlaneseq
    %v3014 = vshrl.u32 %v3013, 7
    %v3015 = vsub.s32 %v3012, %v3014
    %v3016 = vrot.slane %v3008, %v3015
    %v3018 = vunpack.c.l.s4 1934713408
    %v3019 = vunpack.c.0.s8 %v3018
    %v3020 = vlaneseq
    %v3021 = vshrl.u32 %v3020, 7
    %v3022 = vsub.s32 %v3019, %v3021
    %v3023 = vrot.slane %v3009, %v3022
    %v3024 = vcombine.low %v2959, %v2975
    %v3025 = vcombine.high %v2959, %v2975
    %v3027 = vunpack.c.l.s4 1934713408
    %v3028 = vunpack.c.0.s8 %v3027
    %v3029 = vlaneseq
    %v3030 = vshrl.u32 %v3029, 7
    %v3031 = vsub.s32 %v3028, %v3030
    %v3032 = vrot.slane %v3024, %v3031
    %v3034 = vunpack.c.l.s4 1934713408
    %v3035 = vunpack.c.0.s8 %v3034
    %v3036 = vlaneseq
    %v3037 = vshrl.u32 %v3036, 7
    %v3038 = vsub.s32 %v3035, %v3037
    %v3039 = vrot.slane %v3025, %v3038
    %v3040 = vcombine.low %v2984, %v3016
    %v3041 = vcombine.high %v2984, %v3016
    %v3042 = vcombine.low %v2991, %v3023
    %v3043 = vcombine.high %v2991, %v3023
    %v3044 = vcombine.low %v3000, %v3032
    %v3045 = vcombine.high %v3000, %v3032
    %v3046 = vcombine.low %v3007, %v3039
    %v3047 = vcombine.high %v3007, %v3039
    %v3048 = vcombine.low %v2845, %v2849
    %v3049 = vcombine.high %v2845, %v2849
    %v3051 = vunpack.c.l.s4 1983009808
    %v3052 = vunpack.c.0.s8 %v3051
    %v3053 = vlaneseq
    %v3054 = vshrl.u32 %v3053, 7
    %v3055 = vsub.s32 %v3052, %v3054
    %v3056 = vrot.slane %v3048, %v3055
    %v3058 = vunpack.c.l.s4 1983009808
    %v3059 = vunpack.c.0.s8 %v3058
    %v3060 = vlaneseq
    %v3061 = vshrl.u32 %v3060, 7
    %v3062 = vsub.s32 %v3059, %v3061
    %v3063 = vrot.slane %v3049, %v3062
    %v3064 = vcombine.low %v2847, %v2851
    %v3065 = vcombine.high %v2847, %v2851
    %v3067 = vunpack.c.l.s4 1983009808
    %v3068 = vunpack.c.0.s8 %v3067
    %v3069 = vlaneseq
    %v3070 = vshrl.u32 %v3069, 7
    %v3071 = vsub.s32 %v3068, %v3070
    %v3072 = vrot.slane %v3064, %v3071
    %v3074 = vunpack.c.l.s4 1983009808
    %v3075 = vunpack.c.0.s8 %v3074
    %v3076 = vlaneseq
    %v3077 = vshrl.u32 %v3076, 7
    %v3078 = vsub.s32 %v3075, %v3077
    %v3079 = vrot.slane %v3065, %v3078
    %v3080 = vcombine.low %v2820, %v2822
    %v3081 = vcombine.high %v2820, %v2822
    %v3083 = vunpack.c.l.s4 1983009808
    %v3084 = vunpack.c.0.s8 %v3083
    %v3085 = vlaneseq
    %v3086 = vshrl.u32 %v3085, 7
    %v3087 = vsub.s32 %v3084, %v3086
    %v3088 = vrot.slane %v3080, %v3087
    %v3090 = vunpack.c.l.s4 1983009808
    %v3091 = vunpack.c.0.s8 %v3090
    %v3092 = vlaneseq
    %v3093 = vshrl.u32 %v3092, 7
    %v3094 = vsub.s32 %v3091, %v3093
    %v3095 = vrot.slane %v3081, %v3094
    %v3096 = vcombine.low %v2821, %v2823
    %v3097 = vcombine.high %v2821, %v2823
    %v3099 = vunpack.c.l.s4 1983009808
    %v3100 = vunpack.c.0.s8 %v3099
    %v3101 = vlaneseq
    %v3102 = vshrl.u32 %v3101, 7
    %v3103 = vsub.s32 %v3100, %v3102
    %v3104 = vrot.slane %v3096, %v3103
    %v3106 = vunpack.c.l.s4 1983009808
    %v3107 = vunpack.c.0.s8 %v3106
    %v3108 = vlaneseq
    %v3109 = vshrl.u32 %v3108, 7
    %v3110 = vsub.s32 %v3107, %v3109
    %v3111 = vrot.slane %v3097, %v3110
    %v3112 = vcombine.low %v3056, %v3072
    %v3113 = vcombine.high %v3056, %v3072
    %v3115 = vunpack.c.l.s4 1934713408
    %v3116 = vunpack.c.0.s8 %v3115
    %v3117 = vlaneseq
    %v3118 = vshrl.u32 %v3117, 7
    %v3119 = vsub.s32 %v3116, %v3118
    %v3120 = vrot.slane %v3112, %v3119
    %v3122 = vunpack.c.l.s4 1934713408
    %v3123 = vunpack.c.0.s8 %v3122
    %v3124 = vlaneseq
    %v3125 = vshrl.u32 %v3124, 7
    %v3126 = vsub.s32 %v3123, %v3125
    %v3127 = vrot.slane %v3113, %v3126
    %v3128 = vcombine.low %v3063, %v3079
    %v3129 = vcombine.high %v3063, %v3079
    %v3131 = vunpack.c.l.s4 1934713408
    %v3132 = vunpack.c.0.s8 %v3131
    %v3133 = vlaneseq
    %v3134 = vshrl.u32 %v3133, 7
    %v3135 = vsub.s32 %v3132, %v3134
    %v3136 = vrot.slane %v3128, %v3135
    %v3138 = vunpack.c.l.s4 1934713408
    %v3139 = vunpack.c.0.s8 %v3138
    %v3140 = vlaneseq
    %v3141 = vshrl.u32 %v3140, 7
    %v3142 = vsub.s32 %v3139, %v3141
    %v3143 = vrot.slane %v3129, %v3142
    %v3144 = vcombine.low %v3088, %v3104
    %v3145 = vcombine.high %v3088, %v3104
    %v3147 = vunpack.c.l.s4 1934713408
    %v3148 = vunpack.c.0.s8 %v3147
    %v3149 = vlaneseq
    %v3150 = vshrl.u32 %v3149, 7
    %v3151 = vsub.s32 %v3148, %v3150
    %v3152 = vrot.slane %v3144, %v3151
    %v3154 = vunpack.c.l.s4 1934713408
    %v3155 = vunpack.c.0.s8 %v3154
    %v3156 = vlaneseq
    %v3157 = vshrl.u32 %v3156, 7
    %v3158 = vsub.s32 %v3155, %v3157
    %v3159 = vrot.slane %v3145, %v3158
    %v3160 = vcombine.low %v3095, %v3111
    %v3161 = vcombine.high %v3095, %v3111
    %v3163 = vunpack.c.l.s4 1934713408
    %v3164 = vunpack.c.0.s8 %v3163
    %v3165 = vlaneseq
    %v3166 = vshrl.u32 %v3165, 7
    %v3167 = vsub.s32 %v3164, %v3166
    %v3168 = vrot.slane %v3160, %v3167
    %v3170 = vunpack.c.l.s4 1934713408
    %v3171 = vunpack.c.0.s8 %v3170
    %v3172 = vlaneseq
    %v3173 = vshrl.u32 %v3172, 7
    %v3174 = vsub.s32 %v3171, %v3173
    %v3175 = vrot.slane %v3161, %v3174
    %v3176 = vcombine.low %v3120, %v3152
    %v3177 = vcombine.high %v3120, %v3152
    %v3178 = vcombine.low %v3127, %v3159
    %v3179 = vcombine.high %v3127, %v3159
    %v3180 = vcombine.low %v3136, %v3168
    %v3181 = vcombine.high %v3136, %v3168
    %v3182 = vcombine.low %v3143, %v3175
    %v3183 = vcombine.high %v3143, %v3175
    %v3184 = vcombine.low %v2861, %v2865
    %v3185 = vcombine.high %v2861, %v2865
    %v3187 = vunpack.c.l.s4 1983009808
    %v3188 = vunpack.c.0.s8 %v3187
    %v3189 = vlaneseq
    %v3190 = vshrl.u32 %v3189, 7
    %v3191 = vsub.s32 %v3188, %v3190
    %v3192 = vrot.slane %v3184, %v3191
    %v3194 = vunpack.c.l.s4 1983009808
    %v3195 = vunpack.c.0.s8 %v3194
    %v3196 = vlaneseq
    %v3197 = vshrl.u32 %v3196, 7
    %v3198 = vsub.s32 %v3195, %v3197
    %v3199 = vrot.slane %v3185, %v3198
    %v3200 = vcombine.low %v2863, %v2867
    %v3201 = vcombine.high %v2863, %v2867
    %v3203 = vunpack.c.l.s4 1983009808
    %v3204 = vunpack.c.0.s8 %v3203
    %v3205 = vlaneseq
    %v3206 = vshrl.u32 %v3205, 7
    %v3207 = vsub.s32 %v3204, %v3206
    %v3208 = vrot.slane %v3200, %v3207
    %v3210 = vunpack.c.l.s4 1983009808
    %v3211 = vunpack.c.0.s8 %v3210
    %v3212 = vlaneseq
    %v3213 = vshrl.u32 %v3212, 7
    %v3214 = vsub.s32 %v3211, %v3213
    %v3215 = vrot.slane %v3201, %v3214
    %v3216 = vcombine.low %v2873, %v2877
    %v3217 = vcombine.high %v2873, %v2877
    %v3219 = vunpack.c.l.s4 1983009808
    %v3220 = vunpack.c.0.s8 %v3219
    %v3221 = vlaneseq
    %v3222 = vshrl.u32 %v3221, 7
    %v3223 = vsub.s32 %v3220, %v3222
    %v3224 = vrot.slane %v3216, %v3223
    %v3226 = vunpack.c.l.s4 1983009808
    %v3227 = vunpack.c.0.s8 %v3226
    %v3228 = vlaneseq
    %v3229 = vshrl.u32 %v3228, 7
    %v3230 = vsub.s32 %v3227, %v3229
    %v3231 = vrot.slane %v3217, %v3230
    %v3232 = vcombine.low %v2875, %v2879
    %v3233 = vcombine.high %v2875, %v2879
    %v3235 = vunpack.c.l.s4 1983009808
    %v3236 = vunpack.c.0.s8 %v3235
    %v3237 = vlaneseq
    %v3238 = vshrl.u32 %v3237, 7
    %v3239 = vsub.s32 %v3236, %v3238
    %v3240 = vrot.slane %v3232, %v3239
    %v3242 = vunpack.c.l.s4 1983009808
    %v3243 = vunpack.c.0.s8 %v3242
    %v3244 = vlaneseq
    %v3245 = vshrl.u32 %v3244, 7
    %v3246 = vsub.s32 %v3243, %v3245
    %v3247 = vrot.slane %v3233, %v3246
    %v3248 = vcombine.low %v3192, %v3208
    %v3249 = vcombine.high %v3192, %v3208
    %v3251 = vunpack.c.l.s4 1934713408
    %v3252 = vunpack.c.0.s8 %v3251
    %v3253 = vlaneseq
    %v3254 = vshrl.u32 %v3253, 7
    %v3255 = vsub.s32 %v3252, %v3254
    %v3256 = vrot.slane %v3248, %v3255
    %v3258 = vunpack.c.l.s4 1934713408
    %v3259 = vunpack.c.0.s8 %v3258
    %v3260 = vlaneseq
    %v3261 = vshrl.u32 %v3260, 7
    %v3262 = vsub.s32 %v3259, %v3261
    %v3263 = vrot.slane %v3249, %v3262
    %v3264 = vcombine.low %v3199, %v3215
    %v3265 = vcombine.high %v3199, %v3215
    %v3267 = vunpack.c.l.s4 1934713408
    %v3268 = vunpack.c.0.s8 %v3267
    %v3269 = vlaneseq
    %v3270 = vshrl.u32 %v3269, 7
    %v3271 = vsub.s32 %v3268, %v3270
    %v3272 = vrot.slane %v3264, %v3271
    %v3274 = vunpack.c.l.s4 1934713408
    %v3275 = vunpack.c.0.s8 %v3274
    %v3276 = vlaneseq
    %v3277 = vshrl.u32 %v3276, 7
    %v3278 = vsub.s32 %v3275, %v3277
    %v3279 = vrot.slane %v3265, %v3278
    %v3280 = vcombine.low %v3224, %v3240
    %v3281 = vcombine.high %v3224, %v3240
    %v3283 = vunpack.c.l.s4 1934713408
    %v3284 = vunpack.c.0.s8 %v3283
    %v3285 = vlaneseq
    %v3286 = vshrl.u32 %v3285, 7
    %v3287 = vsub.s32 %v3284, %v3286
    %v3288 = vrot.slane %v3280, %v3287
    %v3290 = vunpack.c.l.s4 1934713408
    %v3291 = vunpack.c.0.s8 %v3290
    %v3292 = vlaneseq
    %v3293 = vshrl.u32 %v3292, 7
    %v3294 = vsub.s32 %v3291, %v3293
    %v3295 = vrot.slane %v3281, %v3294
    %v3296 = vcombine.low %v3231, %v3247
    %v3297 = vcombine.high %v3231, %v3247
    %v3299 = vunpack.c.l.s4 1934713408
    %v3300 = vunpack.c.0.s8 %v3299
    %v3301 = vlaneseq
    %v3302 = vshrl.u32 %v3301, 7
    %v3303 = vsub.s32 %v3300, %v3302
    %v3304 = vrot.slane %v3296, %v3303
    %v3306 = vunpack.c.l.s4 1934713408
    %v3307 = vunpack.c.0.s8 %v3306
    %v3308 = vlaneseq
    %v3309 = vshrl.u32 %v3308, 7
    %v3310 = vsub.s32 %v3307, %v3309
    %v3311 = vrot.slane %v3297, %v3310
    %v3312 = vcombine.low %v3256, %v3288
    %v3313 = vcombine.high %v3256, %v3288
    %v3314 = vcombine.low %v3263, %v3295
    %v3315 = vcombine.high %v3263, %v3295
    %v3316 = vcombine.low %v3272, %v3304
    %v3317 = vcombine.high %v3272, %v3304
    %v3318 = vcombine.low %v3279, %v3311
    %v3319 = vcombine.high %v3279, %v3311
    %v3320 = vcombine.low %v2824, %v2826
    %v3321 = vcombine.high %v2824, %v2826
    %v3323 = vunpack.c.l.s4 1983009808
    %v3324 = vunpack.c.0.s8 %v3323
    %v3325 = vlaneseq
    %v3326 = vshrl.u32 %v3325, 7
    %v3327 = vsub.s32 %v3324, %v3326
    %v3328 = vrot.slane %v3320, %v3327
    %v3330 = vunpack.c.l.s4 1983009808
    %v3331 = vunpack.c.0.s8 %v3330
    %v3332 = vlaneseq
    %v3333 = vshrl.u32 %v3332, 7
    %v3334 = vsub.s32 %v3331, %v3333
    %v3335 = vrot.slane %v3321, %v3334
    %v3336 = vcombine.low %v2825, %v2827
    %v3337 = vcombine.high %v2825, %v2827
    %v3339 = vunpack.c.l.s4 1983009808
    %v3340 = vunpack.c.0.s8 %v3339
    %v3341 = vlaneseq
    %v3342 = vshrl.u32 %v3341, 7
    %v3343 = vsub.s32 %v3340, %v3342
    %v3344 = vrot.slane %v3336, %v3343
    %v3346 = vunpack.c.l.s4 1983009808
    %v3347 = vunpack.c.0.s8 %v3346
    %v3348 = vlaneseq
    %v3349 = vshrl.u32 %v3348, 7
    %v3350 = vsub.s32 %v3347, %v3349
    %v3351 = vrot.slane %v3337, %v3350
    %v3352 = vcombine.low %v2889, %v2893
    %v3353 = vcombine.high %v2889, %v2893
    %v3355 = vunpack.c.l.s4 1983009808
    %v3356 = vunpack.c.0.s8 %v3355
    %v3357 = vlaneseq
    %v3358 = vshrl.u32 %v3357, 7
    %v3359 = vsub.s32 %v3356, %v3358
    %v3360 = vrot.slane %v3352, %v3359
    %v3362 = vunpack.c.l.s4 1983009808
    %v3363 = vunpack.c.0.s8 %v3362
    %v3364 = vlaneseq
    %v3365 = vshrl.u32 %v3364, 7
    %v3366 = vsub.s32 %v3363, %v3365
    %v3367 = vrot.slane %v3353, %v3366
    %v3368 = vcombine.low %v2891, %v2895
    %v3369 = vcombine.high %v2891, %v2895
    %v3371 = vunpack.c.l.s4 1983009808
    %v3372 = vunpack.c.0.s8 %v3371
    %v3373 = vlaneseq
    %v3374 = vshrl.u32 %v3373, 7
    %v3375 = vsub.s32 %v3372, %v3374
    %v3376 = vrot.slane %v3368, %v3375
    %v3378 = vunpack.c.l.s4 1983009808
    %v3379 = vunpack.c.0.s8 %v3378
    %v3380 = vlaneseq
    %v3381 = vshrl.u32 %v3380, 7
    %v3382 = vsub.s32 %v3379, %v3381
    %v3383 = vrot.slane %v3369, %v3382
    %v3384 = vcombine.low %v3328, %v3344
    %v3385 = vcombine.high %v3328, %v3344
    %v3387 = vunpack.c.l.s4 1934713408
    %v3388 = vunpack.c.0.s8 %v3387
    %v3389 = vlaneseq
    %v3390 = vshrl.u32 %v3389, 7
    %v3391 = vsub.s32 %v3388, %v3390
    %v3392 = vrot.slane %v3384, %v3391
    %v3394 = vunpack.c.l.s4 1934713408
    %v3395 = vunpack.c.0.s8 %v3394
    %v3396 = vlaneseq
    %v3397 = vshrl.u32 %v3396, 7
    %v3398 = vsub.s32 %v3395, %v3397
    %v3399 = vrot.slane %v3385, %v3398
    %v3400 = vcombine.low %v3335, %v3351
    %v3401 = vcombine.high %v3335, %v3351
    %v3403 = vunpack.c.l.s4 1934713408
    %v3404 = vunpack.c.0.s8 %v3403
    %v3405 = vlaneseq
    %v3406 = vshrl.u32 %v3405, 7
    %v3407 = vsub.s32 %v3404, %v3406
    %v3408 = vrot.slane %v3400, %v3407
    %v3410 = vunpack.c.l.s4 1934713408
    %v3411 = vunpack.c.0.s8 %v3410
    %v3412 = vlaneseq
    %v3413 = vshrl.u32 %v3412, 7
    %v3414 = vsub.s32 %v3411, %v3413
    %v3415 = vrot.slane %v3401, %v3414
    %v3416 = vcombine.low %v3360, %v3376
    %v3417 = vcombine.high %v3360, %v3376
    %v3419 = vunpack.c.l.s4 1934713408
    %v3420 = vunpack.c.0.s8 %v3419
    %v3421 = vlaneseq
    %v3422 = vshrl.u32 %v3421, 7
    %v3423 = vsub.s32 %v3420, %v3422
    %v3424 = vrot.slane %v3416, %v3423
    %v3426 = vunpack.c.l.s4 1934713408
    %v3427 = vunpack.c.0.s8 %v3426
    %v3428 = vlaneseq
    %v3429 = vshrl.u32 %v3428, 7
    %v3430 = vsub.s32 %v3427, %v3429
    %v3431 = vrot.slane %v3417, %v3430
    %v3432 = vcombine.low %v3367, %v3383
    %v3433 = vcombine.high %v3367, %v3383
    %v3435 = vunpack.c.l.s4 1934713408
    %v3436 = vunpack.c.0.s8 %v3435
    %v3437 = vlaneseq
    %v3438 = vshrl.u32 %v3437, 7
    %v3439 = vsub.s32 %v3436, %v3438
    %v3440 = vrot.slane %v3432, %v3439
    %v3442 = vunpack.c.l.s4 1934713408
    %v3443 = vunpack.c.0.s8 %v3442
    %v3444 = vlaneseq
    %v3445 = vshrl.u32 %v3444, 7
    %v3446 = vsub.s32 %v3443, %v3445
    %v3447 = vrot.slane %v3433, %v3446
    %v3448 = vcombine.low %v3392, %v3424
    %v3449 = vcombine.high %v3392, %v3424
    %v3450 = vcombine.low %v3399, %v3431
    %v3451 = vcombine.high %v3399, %v3431
    %v3452 = vcombine.low %v3408, %v3440
    %v3453 = vcombine.high %v3408, %v3440
    %v3454 = vcombine.low %v3415, %v3447
    %v3455 = vcombine.high %v3415, %v3447
    %v3456 = vcombine.low %v2901, %v2905
    %v3457 = vcombine.high %v2901, %v2905
    %v3459 = vunpack.c.l.s4 1983009808
    %v3460 = vunpack.c.0.s8 %v3459
    %v3461 = vlaneseq
    %v3462 = vshrl.u32 %v3461, 7
    %v3463 = vsub.s32 %v3460, %v3462
    %v3464 = vrot.slane %v3456, %v3463
    %v3466 = vunpack.c.l.s4 1983009808
    %v3467 = vunpack.c.0.s8 %v3466
    %v3468 = vlaneseq
    %v3469 = vshrl.u32 %v3468, 7
    %v3470 = vsub.s32 %v3467, %v3469
    %v3471 = vrot.slane %v3457, %v3470
    %v3472 = vcombine.low %v2903, %v2907
    %v3473 = vcombine.high %v2903, %v2907
    %v3475 = vunpack.c.l.s4 1983009808
    %v3476 = vunpack.c.0.s8 %v3475
    %v3477 = vlaneseq
    %v3478 = vshrl.u32 %v3477, 7
    %v3479 = vsub.s32 %v3476, %v3478
    %v3480 = vrot.slane %v3472, %v3479
    %v3482 = vunpack.c.l.s4 1983009808
    %v3483 = vunpack.c.0.s8 %v3482
    %v3484 = vlaneseq
    %v3485 = vshrl.u32 %v3484, 7
    %v3486 = vsub.s32 %v3483, %v3485
    %v3487 = vrot.slane %v3473, %v3486
    %v3488 = vcombine.low %v3464, %v3480
    %v3489 = vcombine.high %v3464, %v3480
    %v3491 = vunpack.c.l.s4 1934713408
    %v3492 = vunpack.c.0.s8 %v3491
    %v3493 = vlaneseq
    %v3494 = vshrl.u32 %v3493, 7
    %v3495 = vsub.s32 %v3492, %v3494
    %v3496 = vrot.slane %v3488, %v3495
    %v3498 = vunpack.c.l.s4 1934713408
    %v3499 = vunpack.c.0.s8 %v3498
    %v3500 = vlaneseq
    %v3501 = vshrl.u32 %v3500, 7
    %v3502 = vsub.s32 %v3499, %v3501
    %v3503 = vrot.slane %v3489, %v3502
    %v3504 = vcombine.low %v3471, %v3487
    %v3505 = vcombine.high %v3471, %v3487
    %v3507 = vunpack.c.l.s4 1934713408
    %v3508 = vunpack.c.0.s8 %v3507
    %v3509 = vlaneseq
    %v3510 = vshrl.u32 %v3509, 7
    %v3511 = vsub.s32 %v3508, %v3510
    %v3512 = vrot.slane %v3504, %v3511
    %v3514 = vunpack.c.l.s4 1934713408
    %v3515 = vunpack.c.0.s8 %v3514
    %v3516 = vlaneseq
    %v3517 = vshrl.u32 %v3516, 7
    %v3518 = vsub.s32 %v3515, %v3517
    %v3519 = vrot.slane %v3505, %v3518
    %v3520 = vcombine.high %v3496, 0.0
    %v3521 = vcombine.high %v3503, 0.0
    %v3522 = vcombine.high %v3512, 0.0
    %v3523 = vcombine.high %v3519, 0.0
    %3529 = vrot.lane.b32.xlu0 %v3041, 16
    %v3530 = vpop.permute.xlu0 %3529
    %3531 = vrot.lane.b32.xlu0 %v3177, 16
    %v3532 = vpop.permute.xlu0 %3531
    %3533 = vrot.lane.b32.xlu0 %v3313, 16
    %v3534 = vpop.permute.xlu0 %3533
    %3535 = vrot.lane.b32.xlu0 %v3449, 16
    %v3536 = vpop.permute.xlu0 %3535
    %3537 = vrot.lane.b32.xlu0 %v3520, 16
    %v3538 = vpop.permute.xlu0 %3537
    %3549 = vrot.lane.b32.xlu0 %v3042, 32
    %v3550 = vpop.permute.xlu0 %3549
    %3551 = vrot.lane.b32.xlu0 %v3178, 32
    %v3552 = vpop.permute.xlu0 %3551
    %3553 = vrot.lane.b32.xlu0 %v3314, 32
    %v3554 = vpop.permute.xlu0 %3553
    %3555 = vrot.lane.b32.xlu0 %v3450, 32
    %v3556 = vpop.permute.xlu0 %3555
    %3557 = vrot.lane.b32.xlu0 %v3503, 32
    %v3558 = vpop.permute.xlu0 %3557
    %3569 = vrot.lane.b32.xlu0 %v3043, 48
    %v3570 = vpop.permute.xlu0 %3569
    %3571 = vrot.lane.b32.xlu0 %v3179, 48
    %v3572 = vpop.permute.xlu0 %3571
    %3573 = vrot.lane.b32.xlu0 %v3315, 48
    %v3574 = vpop.permute.xlu0 %3573
    %3575 = vrot.lane.b32.xlu0 %v3451, 48
    %v3576 = vpop.permute.xlu0 %3575
    %3577 = vrot.lane.b32.xlu0 %v3521, 48
    %v3578 = vpop.permute.xlu0 %3577
    %3589 = vrot.lane.b32.xlu0 %v3044, 64
    %v3590 = vpop.permute.xlu0 %3589
    %3591 = vrot.lane.b32.xlu0 %v3180, 64
    %v3592 = vpop.permute.xlu0 %3591
    %3593 = vrot.lane.b32.xlu0 %v3316, 64
    %v3594 = vpop.permute.xlu0 %3593
    %3595 = vrot.lane.b32.xlu0 %v3452, 64
    %v3596 = vpop.permute.xlu0 %3595
    %3597 = vrot.lane.b32.xlu0 %v3512, 64
    %v3598 = vpop.permute.xlu0 %3597
    %3609 = vrot.lane.b32.xlu0 %v3045, 80
    %v3610 = vpop.permute.xlu0 %3609
    %3611 = vrot.lane.b32.xlu0 %v3181, 80
    %v3612 = vpop.permute.xlu0 %3611
    %3613 = vrot.lane.b32.xlu0 %v3317, 80
    %v3614 = vpop.permute.xlu0 %3613
    %3615 = vrot.lane.b32.xlu0 %v3453, 80
    %v3616 = vpop.permute.xlu0 %3615
    %3617 = vrot.lane.b32.xlu0 %v3522, 80
    %v3618 = vpop.permute.xlu0 %3617
    %3629 = vrot.lane.b32.xlu0 %v3046, 96
    %v3630 = vpop.permute.xlu0 %3629
    %3631 = vrot.lane.b32.xlu0 %v3182, 96
    %v3632 = vpop.permute.xlu0 %3631
    %3633 = vrot.lane.b32.xlu0 %v3318, 96
    %v3634 = vpop.permute.xlu0 %3633
    %3635 = vrot.lane.b32.xlu0 %v3454, 96
    %v3636 = vpop.permute.xlu0 %3635
    %3637 = vrot.lane.b32.xlu0 %v3519, 96
    %v3638 = vpop.permute.xlu0 %3637
    %3649 = vrot.lane.b32.xlu0 %v3047, 112
    %v3650 = vpop.permute.xlu0 %3649
    %3651 = vrot.lane.b32.xlu0 %v3183, 112
    %v3652 = vpop.permute.xlu0 %3651
    %3653 = vrot.lane.b32.xlu0 %v3319, 112
    %v3654 = vpop.permute.xlu0 %3653
    %3655 = vrot.lane.b32.xlu0 %v3455, 112
    %v3656 = vpop.permute.xlu0 %3655
    %3657 = vrot.lane.b32.xlu0 %v3523, 112
    %v3658 = vpop.permute.xlu0 %3657
    %v3664 = vsel %vm1008, %v3040, %v3530
    %v3665 = vsel %vm1008, %v3176, %v3532
    %v3666 = vsel %vm1008, %v3312, %v3534
    %v3667 = vsel %vm1008, %v3448, %v3536
    %v3668 = vsel %vm1008, %v3496, %v3538
    %v3669 = vsel %vm1014, %v3664, %v3550
    %v3670 = vsel %vm1014, %v3665, %v3552
    %v3671 = vsel %vm1014, %v3666, %v3554
    %v3672 = vsel %vm1014, %v3667, %v3556
    %v3673 = vsel %vm1014, %v3668, %v3558
    %v3674 = vsel %vm1020, %v3669, %v3570
    %v3675 = vsel %vm1020, %v3670, %v3572
    %v3676 = vsel %vm1020, %v3671, %v3574
    %v3677 = vsel %vm1020, %v3672, %v3576
    %v3678 = vsel %vm1020, %v3673, %v3578
    %v3679 = vsel %vm1026, %v3674, %v3590
    %v3680 = vsel %vm1026, %v3675, %v3592
    %v3681 = vsel %vm1026, %v3676, %v3594
    %v3682 = vsel %vm1026, %v3677, %v3596
    %v3683 = vsel %vm1026, %v3678, %v3598
    %v3684 = vsel %vm1032, %v3679, %v3610
    %v3685 = vsel %vm1032, %v3680, %v3612
    %v3686 = vsel %vm1032, %v3681, %v3614
    %v3687 = vsel %vm1032, %v3682, %v3616
    %v3688 = vsel %vm1032, %v3683, %v3618
    %v3689 = vsel %vm1038, %v3684, %v3630
    %v3690 = vsel %vm1038, %v3685, %v3632
    %v3691 = vsel %vm1038, %v3686, %v3634
    %v3692 = vsel %vm1038, %v3687, %v3636
    %v3693 = vsel %vm1038, %v3688, %v3638
    %v3694 = vsel %vm1044, %v3689, %v3650
    %v3695 = vsel %vm1044, %v3690, %v3652
    %v3696 = vsel %vm1044, %v3691, %v3654
    %v3697 = vsel %vm1044, %v3692, %v3656
    %v3698 = vsel %vm1044, %v3693, %v3658
    %v3699 = vld [vmem:[%s1] sm:$0xff]
    %vm3700 = vcmask 293888
    %v3702 = vsel %vm3700, %v3699, 0
    %vm3704 = vcmask 1043456
    %v3706 = vsel %vm3704, %v1049, 0
    %v3709 = vsel %vm3704, %v1932, 0
    %v3712 = vsel %vm3704, %v2815, 0
    %v3715 = vsel %vm3704, %v3698, 0
    %3717 = vmatprep.subr.mxu0 %v1928
    %3718 = vmatpush1.msra.mxu0 %v1045
    %3719 = vmatprep.subr.mxu0 %v1929
    %3720 = vmatpush1.msra.mxu0 %v1046
    %3721 = vmatprep.subr.mxu0 %v1930
    %3722 = vmatpush1.msra.mxu0 %v1047
    %3723 = vmatprep.subr.mxu0 %v1931
    %3724 = vmatpush1.msra.mxu0 %v1048
    %3725 = vmatprep.subr.mxu0 %v3709
    %3726 = vmatpush1.msra.mxu0 %v3706
    %3727 = vmatprep.subr.mxu0 0.0
    %3728 = vmatpush1.msra.mxu0 0.0
    %3729 = vmatprep.subr.mxu0 0.0
    %3730 = vmatpush1.msra.mxu0 0.0
    %3731 = vmatprep.subr.mxu0 0.0
    %3732 = vmatpush1.msra.mxu0 0.0
    %3733 = vmatprep.subr.mxu0 0.0
    %3734 = vmatpush1.msra.mxu0 0.0
    %3735 = vmatprep.subr.mxu0 0.0
    %3736 = vmatpush1.msra.mxu0 0.0
    %3737 = vmatprep.subr.mxu0 0.0
    %3738 = vmatpush1.msra.mxu0 0.0
    %3739 = vmatprep.subr.mxu0 0.0
    %3740 = vmatpush1.msra.mxu0 0.0
    %3741 = vmatprep.subr.mxu0 0.0
    %3742 = vmatpush1.msra.mxu0 0.0
    %3743 = vmatprep.subr.mxu0 0.0
    %3744 = vmatpush1.msra.mxu0 0.0
    %3745 = vmatprep.subr.mxu0 0.0
    %3746 = vmatpush1.msra.mxu0 0.0
    %3747 = vmatprep.subr.mxu0 0.0
    %3748 = vmatpush1.msra.mxu0 0.0
    %3749 = vmatprep.subr.mxu0 0.0
    %3750 = vmatpush1.msra.mxu0 0.0
    %3751 = vmatprep.subr.mxu0 0.0
    %3752 = vmatpush1.msra.mxu0 0.0
    %3753 = vmatprep.subr.mxu0 0.0
    %3754 = vmatpush1.msra.mxu0 0.0
    %3755 = vmatprep.subr.mxu0 0.0
    %3756 = vmatpush1.msra.mxu0 0.0
    %3757 = vmatprep.subr.mxu0 0.0
    %3758 = vmatpush1.msra.mxu0 0.0
    %3759 = vmatprep.subr.mxu0 0.0
    %3760 = vmatpush1.msra.mxu0 0.0
    %3761 = vmatprep.subr.mxu0 0.0
    %3762 = vmatpush1.msra.mxu0 0.0
    %3763 = vmatprep.subr.mxu0 0.0
    %3764 = vmatpush1.msra.mxu0 0.0
    %3765 = vmatprep.subr.mxu0 0.0
    %3766 = vmatpush1.msra.mxu0 0.0
    %3767 = vmatprep.subr.mxu0 0.0
    %3768 = vmatpush1.msra.mxu0 0.0
    %3769 = vmatprep.subr.mxu0 0.0
    %3770 = vmatpush1.msra.mxu0 0.0
    %3771 = vmatprep.subr.mxu0 0.0
    %3772 = vmatpush1.msra.mxu0 0.0
    %3773 = vmatprep.subr.mxu0 0.0
    %3774 = vmatpush1.msra.mxu0 0.0
    %3775 = vmatprep.subr.mxu0 0.0
    %3776 = vmatpush1.msra.mxu0 0.0
    %3777 = vmatprep.subr.mxu0 0.0
    %3778 = vmatpush1.msra.mxu0 0.0
    %3779 = vmatprep.subr.mxu0 0.0
    %3780 = vmatpush1.msra.mxu0 0.0
    %3781 = vmatprep.mubr.f32.mxu0 0.0
    %3782 = vmatmul.mubr.f32.gmra.mrb[0].mxu0 %v3702
    %v3783 = vpop.f32.mrb[0].mxu0
    %v3784 = vadd.f32 0.0, %v3783
    %v3785 = vpop.f32.mrb[0].mxu0
    %v3786 = vadd.f32 0.0, %v3785
    %3787 = vdwg.mxu0
    %3788 = vmatprep.subr.mxu0 %v3694
    %3789 = vmatpush1.msra.mxu0 %v2811
    %3790 = vmatprep.subr.mxu0 %v3695
    %3791 = vmatpush1.msra.mxu0 %v2812
    %3792 = vmatprep.subr.mxu0 %v3696
    %3793 = vmatpush1.msra.mxu0 %v2813
    %3794 = vmatprep.subr.mxu0 %v3697
    %3795 = vmatpush1.msra.mxu0 %v2814
    %3796 = vmatprep.subr.mxu0 %v3715
    %3797 = vmatpush1.msra.mxu0 %v3712
    %3798 = vmatprep.subr.mxu0 0.0
    %3799 = vmatpush1.msra.mxu0 0.0
    %3800 = vmatprep.subr.mxu0 0.0
    %3801 = vmatpush1.msra.mxu0 0.0
    %3802 = vmatprep.subr.mxu0 0.0
    %3803 = vmatpush1.msra.mxu0 0.0
    %3804 = vmatprep.subr.mxu0 0.0
    %3805 = vmatpush1.msra.mxu0 0.0
    %3806 = vmatprep.subr.mxu0 0.0
    %3807 = vmatpush1.msra.mxu0 0.0
    %3808 = vmatprep.subr.mxu0 0.0
    %3809 = vmatpush1.msra.mxu0 0.0
    %3810 = vmatprep.subr.mxu0 0.0
    %3811 = vmatpush1.msra.mxu0 0.0
    %3812 = vmatprep.subr.mxu0 0.0
    %3813 = vmatpush1.msra.mxu0 0.0
    %3814 = vmatprep.subr.mxu0 0.0
    %3815 = vmatpush1.msra.mxu0 0.0
    %3816 = vmatprep.subr.mxu0 0.0
    %3817 = vmatpush1.msra.mxu0 0.0
    %3818 = vmatprep.subr.mxu0 0.0
    %3819 = vmatpush1.msra.mxu0 0.0
    %3820 = vmatprep.subr.mxu0 0.0
    %3821 = vmatpush1.msra.mxu0 0.0
    %3822 = vmatprep.subr.mxu0 0.0
    %3823 = vmatpush1.msra.mxu0 0.0
    %3824 = vmatprep.subr.mxu0 0.0
    %3825 = vmatpush1.msra.mxu0 0.0
    %3826 = vmatprep.subr.mxu0 0.0
    %3827 = vmatpush1.msra.mxu0 0.0
    %3828 = vmatprep.subr.mxu0 0.0
    %3829 = vmatpush1.msra.mxu0 0.0
    %3830 = vmatprep.subr.mxu0 0.0
    %3831 = vmatpush1.msra.mxu0 0.0
    %3832 = vmatprep.subr.mxu0 0.0
    %3833 = vmatpush1.msra.mxu0 0.0
    %3834 = vmatprep.subr.mxu0 0.0
    %3835 = vmatpush1.msra.mxu0 0.0
    %3836 = vmatprep.subr.mxu0 0.0
    %3837 = vmatpush1.msra.mxu0 0.0
    %3838 = vmatprep.subr.mxu0 0.0
    %3839 = vmatpush1.msra.mxu0 0.0
    %3840 = vmatprep.subr.mxu0 0.0
    %3841 = vmatpush1.msra.mxu0 0.0
    %3842 = vmatprep.subr.mxu0 0.0
    %3843 = vmatpush1.msra.mxu0 0.0
    %3844 = vmatprep.subr.mxu0 0.0
    %3845 = vmatpush1.msra.mxu0 0.0
    %3846 = vmatprep.subr.mxu0 0.0
    %3847 = vmatpush1.msra.mxu0 0.0
    %3848 = vmatprep.subr.mxu0 0.0
    %3849 = vmatpush1.msra.mxu0 0.0
    %3850 = vmatprep.subr.mxu0 0.0
    %3851 = vmatpush1.msra.mxu0 0.0
    %3852 = vmatprep.mubr.f32.mxu0 0.0
    %3853 = vmatmul.mubr.f32.gmra.mrb[0].mxu0 %v3702
    %v3854 = vpop.f32.mrb[0].mxu0
    %v3855 = vadd.f32 0.0, %v3854
    %v3856 = vpop.f32.mrb[0].mxu0
    %v3857 = vadd.f32 0.0, %v3856
    %3858 = vdwg.mxu0
    %vm3859 = vcmp.ge.f32.partialorder %v3784, 0.0
    %vm3860 = vcmp.ge.f32.partialorder %v3786, 0.0
    %vm3861 = vcmp.ge.f32.partialorder %v3855, 0.0
    %vm3862 = vcmp.ge.f32.partialorder %v3857, 0.0
    %v3863 = vmul.f32 %v3784, 0.0001
    %v3864 = vmul.f32 %v3786, 0.0001
    %v3865 = vmul.f32 %v3855, 0.0001
    %v3866 = vmul.f32 %v3857, 0.0001
    %v3867 = vsel %vm3859, %v3784, %v3863
    %v3868 = vsel %vm3860, %v3786, %v3864
    %v3869 = vsel %vm3861, %v3855, %v3865
    %v3870 = vsel %vm3862, %v3857, %v3866
    %3871 = vst [vmem:[%s2] sm:$0xff] %v3867
    %3872 = vst [vmem:[%s2 + $0x8] sm:$0xff] %v3868
    %3873 = vst [vmem:[%s2 + $0x10] sm:$0xff] %v3869
    %3874 = vst [vmem:[%s2 + $0x18] sm:$0xff] %v3870
    // Predicated region
    $region14: #{fconv_forward.1} parent=1 // pred_check
      _
    $region15: #{fconv_forward.1} parent=1 // pred_check_branch
      %3876 = sbr.rel (0) target = $region17
    $region16: #{fconv_forward.1} parent=1 // pred_region
      _
    $region17: #{fconv_forward.1} parent=1 // pred_fallthru
      _
    // Predicated region
    $region18: #{fconv_forward.1} parent=1 // pred_check
      _
    $region19: #{fconv_forward.1} parent=1 // pred_check_branch
      %3878 = sbr.rel (0) target = $region21
    $region20: #{fconv_forward.1} parent=1 // pred_region
      _
    $region21: #{fconv_forward.1} parent=1 // pred_fallthru
      _
    %3879 = vsyncpa [#allocation4], 1

</llo_original>
